<compile_context>
chip_gen: v7x
topology: tpu7x:2x2x1
jax: 0.10.0
libtpu: 0.0.40
codegen_flags: <defaults>
</compile_context>

<pallas_src>
import functools

import jax
import jax.numpy as jnp
import numpy as np
from jax.experimental import pallas as pl
from jax.experimental.pallas import tpu as pltpu


# ----------------------------- fused Pallas kernel ---------------------------

def down_fused_kernel(x_ref, w1_ref, b1_ref, w2_ref, b2_ref, o_ref,
                      xp1_ref, xp2_ref):
    # x_ref : (Hp, 2, Wp, 2*Cin)  one batch element; H/W pooling pairs were
    #                             split out by a free wrapper-side reshape.
    # w?_ref: (9, C_in, C_out)    3x3 taps (tap = ky*3 + kx), BN scale folded.
    # b?_ref: (1, C_out)          folded BN bias (f32).
    # o_ref : (Hp*Wp, Cout)       flat output rows for this batch element.
    # xp?_ref: (Hp+2, Wp+2, C)    VMEM scratch in compute dtype (zero-padded
    #                             conv inputs -> operands cast exactly once).
    Hp, _, Wp, two_cin = x_ref.shape
    Cin = two_cin // 2
    Cmid = w1_ref.shape[2]
    Cout = w2_ref.shape[2]

    # ---- MaxPool2d(2): two elementwise maxes (VPU only, no relayout) ----
    x = x_ref[...]                                        # (Hp, 2, Wp, 2*Cin)
    a = jnp.maximum(x[:, 0], x[:, 1])                     # pool H pairs
    pooled = jnp.maximum(a[:, :, :Cin], a[:, :, Cin:])    # pool W pairs -> (Hp, Wp, Cin)

    def conv3x3_bn_relu(pad_ref, value, w_ref, b_ref, c_in, c_out):
        # Zero-pad `value` into VMEM scratch ('SAME' padding), casting to the
        # MXU operand dtype once here instead of per tap.
        pad_ref[...] = jnp.zeros_like(pad_ref)
        pad_ref[1:Hp + 1, 1:Wp + 1, :] = value.astype(pad_ref.dtype)
        # Bias folded into the f32 accumulator init; 9 MXU matmuls over taps.
        acc = jnp.broadcast_to(b_ref[...], (Hp * Wp, c_out)).astype(jnp.float32)
        for ky in range(3):
            for kx in range(3):
                patch = pad_ref[ky:ky + Hp, kx:kx + Wp, :]          # (Hp, Wp, c_in)
                acc += jnp.dot(
                    patch.reshape(Hp * Wp, c_in),
                    w_ref[ky * 3 + kx],
                    preferred_element_type=jnp.float32)
        return jnp.maximum(acc, 0.0)                                 # (Hp*Wp, c_out) f32

    y1 = conv3x3_bn_relu(xp1_ref, pooled, w1_ref, b1_ref, Cin, Cmid)
    y2 = conv3x3_bn_relu(xp2_ref, y1.reshape(Hp, Wp, Cmid),
                         w2_ref, b2_ref, Cmid, Cout)
    o_ref[...] = y2.astype(o_ref.dtype)


# --------------------------------- wrapper ------------------------------------

def down_fused(x_nhwc, w1_taps, b1, w2_taps, b2):
    N, H, W, Cin = x_nhwc.shape
    assert H % 2 == 0 and W % 2 == 0, "MaxPool2d(2) requires even H and W"
    Hp, Wp = H // 2, W // 2
    Cmid = w1_taps.shape[-1]
    Cout = w2_taps.shape[-1]
    compute_dtype = w1_taps.dtype

    # Free metadata reshape: split the 2x2 pooling pairs onto their own axes so
    # the in-kernel maxpool is pure elementwise maxes.
    x_r = x_nhwc.reshape(N * Hp, 2, Wp, 2 * Cin)

    out = pl.pallas_call(
        down_fused_kernel,
        out_shape=jax.ShapeDtypeStruct((N * Hp * Wp, Cout), x_nhwc.dtype),
        grid=(N,),
        in_specs=[
            pl.BlockSpec((Hp, 2, Wp, 2 * Cin), lambda n: (n, 0, 0, 0)),
            pl.BlockSpec((9, Cin, Cmid), lambda n: (0, 0, 0)),
            pl.BlockSpec((1, Cmid), lambda n: (0, 0)),
            pl.BlockSpec((9, Cmid, Cout), lambda n: (0, 0, 0)),
            pl.BlockSpec((1, Cout), lambda n: (0, 0)),
        ],
        out_specs=pl.BlockSpec((Hp * Wp, Cout), lambda n: (n, 0)),
        scratch_shapes=[
            pltpu.VMEM((Hp + 2, Wp + 2, Cin), compute_dtype),   # padded pooled input
            pltpu.VMEM((Hp + 2, Wp + 2, Cmid), compute_dtype),  # padded conv1 output
        ],
        compiler_params=pltpu.CompilerParams(
            dimension_semantics=("parallel",)),
    )(x_r, w1_taps, b1, w2_taps, b2)
    return out.reshape(N, Hp, Wp, Cout)


# --------------------------- parameters & forward ----------------------------

def init_down_params(key, in_channels, out_channels):
    mid = out_channels  # DoubleConv default: mid_channels = out_channels
    k = jax.random.split(key, 6)

    def conv_w(kk, cout, cin):
        # PyTorch Conv2d weight layout: (Cout, Cin, 3, 3), bias=False
        w = jax.random.normal(kk, (cout, cin, 3, 3), jnp.float32)
        return w * (2.0 / (cin * 9)) ** 0.5

    return {
        "w1": conv_w(k[0], mid, in_channels),
        "gamma1": 1.0 + 0.1 * jax.random.normal(k[1], (mid,), jnp.float32),
        "beta1": 0.1 * jax.random.normal(k[2], (mid,), jnp.float32),
        "mean1": jnp.zeros((mid,), jnp.float32),
        "var1": jnp.ones((mid,), jnp.float32),
        "w2": conv_w(k[3], out_channels, mid),
        "gamma2": 1.0 + 0.1 * jax.random.normal(k[4], (out_channels,), jnp.float32),
        "beta2": 0.1 * jax.random.normal(k[5], (out_channels,), jnp.float32),
        "mean2": jnp.zeros((out_channels,), jnp.float32),
        "var2": jnp.ones((out_channels,), jnp.float32),
    }


def _fold_bn_into_conv(w_torch, gamma, beta, mean, var, eps=1e-5):
    # (Cout, Cin, 3, 3) -> taps (9, Cin, Cout), inference BN scale folded into
    # the weights; returns (w_taps, bias) with bias shaped (1, Cout), f32.
    scale = gamma / jnp.sqrt(var + eps)
    bias = beta - mean * scale
    w = jnp.transpose(w_torch, (2, 3, 1, 0))          # (3, 3, Cin, Cout)
    w = w.reshape(9, w.shape[2], w.shape[3])          # (9, Cin, Cout)
    return w * scale[None, None, :], bias[None, :]


def down_forward(x_nchw, params, *, compute_dtype=jnp.bfloat16):
    # NCHW in/out to match the PyTorch module boundary.
    x = jnp.transpose(x_nchw, (0, 2, 3, 1))           # NCHW -> NHWC
    w1, b1 = _fold_bn_into_conv(params["w1"], params["gamma1"], params["beta1"],
                                params["mean1"], params["var1"])
    w2, b2 = _fold_bn_into_conv(params["w2"], params["gamma2"], params["beta2"],
                                params["mean2"], params["var2"])
    y = down_fused(x, w1.astype(compute_dtype), b1,
                   w2.astype(compute_dtype), b2)
    return jnp.transpose(y, (0, 3, 1, 2))             # NHWC -> NCHW


# --------------------------- pure-JAX reference -------------------------------

def down_reference(x_nchw, params):
    x = jnp.transpose(x_nchw, (0, 2, 3, 1))
    x = jax.lax.reduce_window(x, -jnp.inf, jax.lax.max,
                              (1, 2, 2, 1), (1, 2, 2, 1), "VALID")

    def conv_bn_relu(y, w_torch, gamma, beta, mean, var):
        w = jnp.transpose(w_torch, (2, 3, 1, 0))      # HWIO
        y = jax.lax.conv_general_dilated(
            y, w, (1, 1), "SAME",
            dimension_numbers=("NHWC", "HWIO", "NHWC"))
        scale = gamma / jnp.sqrt(var + 1e-5)
        return jnp.maximum(y * scale + (beta - mean * scale), 0.0)

    x = conv_bn_relu(x, params["w1"], params["gamma1"], params["beta1"],
                     params["mean1"], params["var1"])
    x = conv_bn_relu(x, params["w2"], params["gamma2"], params["beta2"],
                     params["mean2"], params["var2"])
    return jnp.transpose(x, (0, 3, 1, 2))


# ---------------------------------- main --------------------------------------

if __name__ == "__main__":
    key = jax.random.PRNGKey(0)
    kx, kp = jax.random.split(key)

    in_channels, out_channels = 4, 8
    x = jax.random.normal(kx, (2, in_channels, 16, 16), jnp.float32)  # NCHW
    params = init_down_params(kp, in_channels, out_channels)

    ref = np.asarray(down_reference(x, params))

    # Exact path: f32 MXU operands (v5e-friendly; also the correctness proof).
    fwd_f32 = jax.jit(functools.partial(down_forward, compute_dtype=jnp.float32))
    out_f32 = jax.block_until_ready(fwd_f32(x, params))
    assert out_f32.shape == (2, out_channels, 8, 8), out_f32.shape
    np.testing.assert_allclose(np.asarray(out_f32), ref, rtol=1e-4, atol=1e-5)

    # Default fast path: bf16 MXU operands, f32 accumulation (v6e/v7x).
    fwd_bf16 = jax.jit(down_forward)
    out_bf16 = jax.block_until_ready(fwd_bf16(x, params))
    assert out_bf16.shape == (2, out_channels, 8, 8), out_bf16.shape
    np.testing.assert_allclose(np.asarray(out_bf16), ref, rtol=5e-2, atol=5e-2)

    print("KERNEL_OK")
</pallas_src>

<mosaic_0001>
module attributes {stable_mosaic.version = 11 : i64} {
  func.func @down_fused_kernel(%arg0: i32, %arg1: memref<8x2x8x8xf32, #tpu.memory_space<vmem>>, %arg2: memref<9x4x8xf32, #tpu.memory_space<vmem>>, %arg3: memref<1x8xf32, #tpu.memory_space<vmem>>, %arg4: memref<9x8x8xf32, #tpu.memory_space<vmem>>, %arg5: memref<1x8xf32, #tpu.memory_space<vmem>>, %arg6: memref<64x8xf32, #tpu.memory_space<vmem>>, %arg7: memref<10x10x4xf32, #tpu.memory_space<vmem>>, %arg8: memref<10x10x8xf32, #tpu.memory_space<vmem>>) attributes {dimension_semantics = [#tpu.dimension_semantics<parallel>], iteration_bounds = array<i64: 2>, scalar_prefetch = 0 : i64, scratch_operands = 2 : i64, tpu.core_type = #tpu.core_type<tc>, window_params = [{transform_indices = @transform_0, window_bounds = array<i64: 8, 2, 8, 8>}, {pipeline_mode = #tpu.pipeline_mode<synchronous>, transform_indices = @transform_1, window_bounds = array<i64: 9, 4, 8>}, {pipeline_mode = #tpu.pipeline_mode<synchronous>, transform_indices = @transform_2, window_bounds = array<i64: 1, 8>}, {pipeline_mode = #tpu.pipeline_mode<synchronous>, transform_indices = @transform_3, window_bounds = array<i64: 9, 8, 8>}, {pipeline_mode = #tpu.pipeline_mode<synchronous>, transform_indices = @transform_4, window_bounds = array<i64: 1, 8>}, {transform_indices = @transform_5, window_bounds = array<i64: 64, 8>}]} {
    %c0 = arith.constant 0 : index
    %c0_0 = arith.constant 0 : index
    %c0_1 = arith.constant 0 : index
    %c0_2 = arith.constant 0 : index
    %0 = vector.load %arg1[%c0, %c0_0, %c0_1, %c0_2] : memref<8x2x8x8xf32, #tpu.memory_space<vmem>>, vector<8x2x8x8xf32>
    %1 = vector.extract_strided_slice %0 {offsets = [0, 0, 0, 0], sizes = [8, 1, 8, 8], strides = [1, 1, 1, 1]} : vector<8x2x8x8xf32> to vector<8x1x8x8xf32>
    %2 = vector.shape_cast %1 : vector<8x1x8x8xf32> to vector<8x8x8xf32>
    %3 = vector.extract_strided_slice %0 {offsets = [0, 1, 0, 0], sizes = [8, 1, 8, 8], strides = [1, 1, 1, 1]} : vector<8x2x8x8xf32> to vector<8x1x8x8xf32>
    %4 = vector.shape_cast %3 : vector<8x1x8x8xf32> to vector<8x8x8xf32>
    %5 = arith.maximumf %2, %4 : vector<8x8x8xf32>
    %6 = vector.extract_strided_slice %5 {offsets = [0, 0, 0], sizes = [8, 8, 4], strides = [1, 1, 1]} : vector<8x8x8xf32> to vector<8x8x4xf32>
    %7 = vector.extract_strided_slice %5 {offsets = [0, 0, 4], sizes = [8, 8, 4], strides = [1, 1, 1]} : vector<8x8x8xf32> to vector<8x8x4xf32>
    %8 = arith.maximumf %6, %7 : vector<8x8x4xf32>
    %cst = arith.constant 0.000000e+00 : f32
    %9 = vector.broadcast %cst : f32 to vector<10x10x4xf32>
    %c0_3 = arith.constant 0 : index
    %c0_4 = arith.constant 0 : index
    %c0_5 = arith.constant 0 : index
    %10 = vector.load %arg7[%c0_3, %c0_4, %c0_5] : memref<10x10x4xf32, #tpu.memory_space<vmem>>, vector<10x10x4xf32>
    tpu.vector_store %arg7[%c0_3, %c0_4, %c0_5], %9 {strides = array<i32>} : memref<10x10x4xf32, #tpu.memory_space<vmem>>, vector<10x10x4xf32>,
    %c1 = arith.constant 1 : index
    %c1_6 = arith.constant 1 : index
    %c0_7 = arith.constant 0 : index
    %11 = vector.load %arg7[%c1, %c1_6, %c0_7] : memref<10x10x4xf32, #tpu.memory_space<vmem>>, vector<8x8x4xf32>
    tpu.vector_store %arg7[%c1, %c1_6, %c0_7], %8 {strides = array<i32>} : memref<10x10x4xf32, #tpu.memory_space<vmem>>, vector<8x8x4xf32>,
    %c0_8 = arith.constant 0 : index
    %c0_9 = arith.constant 0 : index
    %12 = vector.load %arg3[%c0_8, %c0_9] : memref<1x8xf32, #tpu.memory_space<vmem>>, vector<1x8xf32>
    %13 = vector.shape_cast %12 : vector<1x8xf32> to vector<1x8xf32>
    %14 = vector.broadcast %13 : vector<1x8xf32> to vector<64x8xf32>
    %c0_10 = arith.constant 0 : index
    %c0_11 = arith.constant 0 : index
    %c0_12 = arith.constant 0 : index
    %15 = vector.load %arg7[%c0_10, %c0_11, %c0_12] : memref<10x10x4xf32, #tpu.memory_space<vmem>>, vector<8x8x4xf32>
    %16 = vector.shape_cast %15 : vector<8x8x4xf32> to vector<64x4xf32>
    %c0_13 = arith.constant 0 : index
    %c0_14 = arith.constant 0 : index
    %c0_15 = arith.constant 0 : index
    %17 = vector.load %arg2[%c0_13, %c0_14, %c0_15] : memref<9x4x8xf32, #tpu.memory_space<vmem>>, vector<1x4x8xf32>
    %18 = vector.shape_cast %17 : vector<1x4x8xf32> to vector<4x8xf32>
    %cst_16 = arith.constant dense<0.000000e+00> : vector<64x8xf32>
    %19 = tpu.matmul %16, %18, %cst_16 {dimension_numbers = #tpu.dot_dimension_numbers<[1], [0], [0], [1], [0, 0, 1, 1], [], []>} : vector<64x4xf32>, vector<4x8xf32>, vector<64x8xf32> -> vector<64x8xf32>
    %20 = arith.addf %14, %19 : vector<64x8xf32>
    %c0_17 = arith.constant 0 : index
    %c1_18 = arith.constant 1 : index
    %c0_19 = arith.constant 0 : index
    %21 = vector.load %arg7[%c0_17, %c1_18, %c0_19] : memref<10x10x4xf32, #tpu.memory_space<vmem>>, vector<8x8x4xf32>
    %22 = vector.shape_cast %21 : vector<8x8x4xf32> to vector<64x4xf32>
    %c1_20 = arith.constant 1 : index
    %c0_21 = arith.constant 0 : index
    %c0_22 = arith.constant 0 : index
    %23 = vector.load %arg2[%c1_20, %c0_21, %c0_22] : memref<9x4x8xf32, #tpu.memory_space<vmem>>, vector<1x4x8xf32>
    %24 = vector.shape_cast %23 : vector<1x4x8xf32> to vector<4x8xf32>
    %cst_23 = arith.constant dense<0.000000e+00> : vector<64x8xf32>
    %25 = tpu.matmul %22, %24, %cst_23 {dimension_numbers = #tpu.dot_dimension_numbers<[1], [0], [0], [1], [0, 0, 1, 1], [], []>} : vector<64x4xf32>, vector<4x8xf32>, vector<64x8xf32> -> vector<64x8xf32>
    %26 = arith.addf %20, %25 : vector<64x8xf32>
    %c0_24 = arith.constant 0 : index
    %c2 = arith.constant 2 : index
    %c0_25 = arith.constant 0 : index
    %27 = vector.load %arg7[%c0_24, %c2, %c0_25] : memref<10x10x4xf32, #tpu.memory_space<vmem>>, vector<8x8x4xf32>
    %28 = vector.shape_cast %27 : vector<8x8x4xf32> to vector<64x4xf32>
    %c2_26 = arith.constant 2 : index
    %c0_27 = arith.constant 0 : index
    %c0_28 = arith.constant 0 : index
    %29 = vector.load %arg2[%c2_26, %c0_27, %c0_28] : memref<9x4x8xf32, #tpu.memory_space<vmem>>, vector<1x4x8xf32>
    %30 = vector.shape_cast %29 : vector<1x4x8xf32> to vector<4x8xf32>
    %cst_29 = arith.constant dense<0.000000e+00> : vector<64x8xf32>
    %31 = tpu.matmul %28, %30, %cst_29 {dimension_numbers = #tpu.dot_dimension_numbers<[1], [0], [0], [1], [0, 0, 1, 1], [], []>} : vector<64x4xf32>, vector<4x8xf32>, vector<64x8xf32> -> vector<64x8xf32>
    %32 = arith.addf %26, %31 : vector<64x8xf32>
    %c1_30 = arith.constant 1 : index
    %c0_31 = arith.constant 0 : index
    %c0_32 = arith.constant 0 : index
    %33 = vector.load %arg7[%c1_30, %c0_31, %c0_32] : memref<10x10x4xf32, #tpu.memory_space<vmem>>, vector<8x8x4xf32>
    %34 = vector.shape_cast %33 : vector<8x8x4xf32> to vector<64x4xf32>
    %c3 = arith.constant 3 : index
    %c0_33 = arith.constant 0 : index
    %c0_34 = arith.constant 0 : index
    %35 = vector.load %arg2[%c3, %c0_33, %c0_34] : memref<9x4x8xf32, #tpu.memory_space<vmem>>, vector<1x4x8xf32>
    %36 = vector.shape_cast %35 : vector<1x4x8xf32> to vector<4x8xf32>
    %cst_35 = arith.constant dense<0.000000e+00> : vector<64x8xf32>
    %37 = tpu.matmul %34, %36, %cst_35 {dimension_numbers = #tpu.dot_dimension_numbers<[1], [0], [0], [1], [0, 0, 1, 1], [], []>} : vector<64x4xf32>, vector<4x8xf32>, vector<64x8xf32> -> vector<64x8xf32>
    %38 = arith.addf %32, %37 : vector<64x8xf32>
    %c1_36 = arith.constant 1 : index
    %c1_37 = arith.constant 1 : index
    %c0_38 = arith.constant 0 : index
    %39 = vector.load %arg7[%c1_36, %c1_37, %c0_38] : memref<10x10x4xf32, #tpu.memory_space<vmem>>, vector<8x8x4xf32>
    %40 = vector.shape_cast %39 : vector<8x8x4xf32> to vector<64x4xf32>
    %c4 = arith.constant 4 : index
    %c0_39 = arith.constant 0 : index
    %c0_40 = arith.constant 0 : index
    %41 = vector.load %arg2[%c4, %c0_39, %c0_40] : memref<9x4x8xf32, #tpu.memory_space<vmem>>, vector<1x4x8xf32>
    %42 = vector.shape_cast %41 : vector<1x4x8xf32> to vector<4x8xf32>
    %cst_41 = arith.constant dense<0.000000e+00> : vector<64x8xf32>
    %43 = tpu.matmul %40, %42, %cst_41 {dimension_numbers = #tpu.dot_dimension_numbers<[1], [0], [0], [1], [0, 0, 1, 1], [], []>} : vector<64x4xf32>, vector<4x8xf32>, vector<64x8xf32> -> vector<64x8xf32>
    %44 = arith.addf %38, %43 : vector<64x8xf32>
    %c1_42 = arith.constant 1 : index
    %c2_43 = arith.constant 2 : index
    %c0_44 = arith.constant 0 : index
    %45 = vector.load %arg7[%c1_42, %c2_43, %c0_44] : memref<10x10x4xf32, #tpu.memory_space<vmem>>, vector<8x8x4xf32>
    %46 = vector.shape_cast %45 : vector<8x8x4xf32> to vector<64x4xf32>
    %c5 = arith.constant 5 : index
    %c0_45 = arith.constant 0 : index
    %c0_46 = arith.constant 0 : index
    %47 = vector.load %arg2[%c5, %c0_45, %c0_46] : memref<9x4x8xf32, #tpu.memory_space<vmem>>, vector<1x4x8xf32>
    %48 = vector.shape_cast %47 : vector<1x4x8xf32> to vector<4x8xf32>
    %cst_47 = arith.constant dense<0.000000e+00> : vector<64x8xf32>
    %49 = tpu.matmul %46, %48, %cst_47 {dimension_numbers = #tpu.dot_dimension_numbers<[1], [0], [0], [1], [0, 0, 1, 1], [], []>} : vector<64x4xf32>, vector<4x8xf32>, vector<64x8xf32> -> vector<64x8xf32>
    %50 = arith.addf %44, %49 : vector<64x8xf32>
    %c2_48 = arith.constant 2 : index
    %c0_49 = arith.constant 0 : index
    %c0_50 = arith.constant 0 : index
    %51 = vector.load %arg7[%c2_48, %c0_49, %c0_50] : memref<10x10x4xf32, #tpu.memory_space<vmem>>, vector<8x8x4xf32>
    %52 = vector.shape_cast %51 : vector<8x8x4xf32> to vector<64x4xf32>
    %c6 = arith.constant 6 : index
    %c0_51 = arith.constant 0 : index
    %c0_52 = arith.constant 0 : index
    %53 = vector.load %arg2[%c6, %c0_51, %c0_52] : memref<9x4x8xf32, #tpu.memory_space<vmem>>, vector<1x4x8xf32>
    %54 = vector.shape_cast %53 : vector<1x4x8xf32> to vector<4x8xf32>
    %cst_53 = arith.constant dense<0.000000e+00> : vector<64x8xf32>
    %55 = tpu.matmul %52, %54, %cst_53 {dimension_numbers = #tpu.dot_dimension_numbers<[1], [0], [0], [1], [0, 0, 1, 1], [], []>} : vector<64x4xf32>, vector<4x8xf32>, vector<64x8xf32> -> vector<64x8xf32>
    %56 = arith.addf %50, %55 : vector<64x8xf32>
    %c2_54 = arith.constant 2 : index
    %c1_55 = arith.constant 1 : index
    %c0_56 = arith.constant 0 : index
    %57 = vector.load %arg7[%c2_54, %c1_55, %c0_56] : memref<10x10x4xf32, #tpu.memory_space<vmem>>, vector<8x8x4xf32>
    %58 = vector.shape_cast %57 : vector<8x8x4xf32> to vector<64x4xf32>
    %c7 = arith.constant 7 : index
    %c0_57 = arith.constant 0 : index
    %c0_58 = arith.constant 0 : index
    %59 = vector.load %arg2[%c7, %c0_57, %c0_58] : memref<9x4x8xf32, #tpu.memory_space<vmem>>, vector<1x4x8xf32>
    %60 = vector.shape_cast %59 : vector<1x4x8xf32> to vector<4x8xf32>
    %cst_59 = arith.constant dense<0.000000e+00> : vector<64x8xf32>
    %61 = tpu.matmul %58, %60, %cst_59 {dimension_numbers = #tpu.dot_dimension_numbers<[1], [0], [0], [1], [0, 0, 1, 1], [], []>} : vector<64x4xf32>, vector<4x8xf32>, vector<64x8xf32> -> vector<64x8xf32>
    %62 = arith.addf %56, %61 : vector<64x8xf32>
    %c2_60 = arith.constant 2 : index
    %c2_61 = arith.constant 2 : index
    %c0_62 = arith.constant 0 : index
    %63 = vector.load %arg7[%c2_60, %c2_61, %c0_62] : memref<10x10x4xf32, #tpu.memory_space<vmem>>, vector<8x8x4xf32>
    %64 = vector.shape_cast %63 : vector<8x8x4xf32> to vector<64x4xf32>
    %c8 = arith.constant 8 : index
    %c0_63 = arith.constant 0 : index
    %c0_64 = arith.constant 0 : index
    %65 = vector.load %arg2[%c8, %c0_63, %c0_64] : memref<9x4x8xf32, #tpu.memory_space<vmem>>, vector<1x4x8xf32>
    %66 = vector.shape_cast %65 : vector<1x4x8xf32> to vector<4x8xf32>
    %cst_65 = arith.constant dense<0.000000e+00> : vector<64x8xf32>
    %67 = tpu.matmul %64, %66, %cst_65 {dimension_numbers = #tpu.dot_dimension_numbers<[1], [0], [0], [1], [0, 0, 1, 1], [], []>} : vector<64x4xf32>, vector<4x8xf32>, vector<64x8xf32> -> vector<64x8xf32>
    %68 = arith.addf %62, %67 : vector<64x8xf32>
    %cst_66 = arith.constant 0.000000e+00 : f32
    %69 = vector.broadcast %cst_66 : f32 to vector<64x8xf32>
    %70 = arith.maximumf %68, %69 : vector<64x8xf32>
    %71 = vector.shape_cast %70 : vector<64x8xf32> to vector<8x8x8xf32>
    %cst_67 = arith.constant 0.000000e+00 : f32
    %72 = vector.broadcast %cst_67 : f32 to vector<10x10x8xf32>
    %c0_68 = arith.constant 0 : index
    %c0_69 = arith.constant 0 : index
    %c0_70 = arith.constant 0 : index
    %73 = vector.load %arg8[%c0_68, %c0_69, %c0_70] : memref<10x10x8xf32, #tpu.memory_space<vmem>>, vector<10x10x8xf32>
    tpu.vector_store %arg8[%c0_68, %c0_69, %c0_70], %72 {strides = array<i32>} : memref<10x10x8xf32, #tpu.memory_space<vmem>>, vector<10x10x8xf32>,
    %c1_71 = arith.constant 1 : index
    %c1_72 = arith.constant 1 : index
    %c0_73 = arith.constant 0 : index
    %74 = vector.load %arg8[%c1_71, %c1_72, %c0_73] : memref<10x10x8xf32, #tpu.memory_space<vmem>>, vector<8x8x8xf32>
    tpu.vector_store %arg8[%c1_71, %c1_72, %c0_73], %71 {strides = array<i32>} : memref<10x10x8xf32, #tpu.memory_space<vmem>>, vector<8x8x8xf32>,
    %c0_74 = arith.constant 0 : index
    %c0_75 = arith.constant 0 : index
    %75 = vector.load %arg5[%c0_74, %c0_75] : memref<1x8xf32, #tpu.memory_space<vmem>>, vector<1x8xf32>
    %76 = vector.shape_cast %75 : vector<1x8xf32> to vector<1x8xf32>
    %77 = vector.broadcast %76 : vector<1x8xf32> to vector<64x8xf32>
    %c0_76 = arith.constant 0 : index
    %c0_77 = arith.constant 0 : index
    %c0_78 = arith.constant 0 : index
    %78 = vector.load %arg8[%c0_76, %c0_77, %c0_78] : memref<10x10x8xf32, #tpu.memory_space<vmem>>, vector<8x8x8xf32>
    %79 = vector.shape_cast %78 : vector<8x8x8xf32> to vector<64x8xf32>
    %c0_79 = arith.constant 0 : index
    %c0_80 = arith.constant 0 : index
    %c0_81 = arith.constant 0 : index
    %80 = vector.load %arg4[%c0_79, %c0_80, %c0_81] : memref<9x8x8xf32, #tpu.memory_space<vmem>>, vector<1x8x8xf32>
    %81 = vector.shape_cast %80 : vector<1x8x8xf32> to vector<8x8xf32>
    %cst_82 = arith.constant dense<0.000000e+00> : vector<64x8xf32>
    %82 = tpu.matmul %79, %81, %cst_82 {dimension_numbers = #tpu.dot_dimension_numbers<[1], [0], [0], [1], [0, 0, 1, 1], [], []>} : vector<64x8xf32>, vector<8x8xf32>, vector<64x8xf32> -> vector<64x8xf32>
    %83 = arith.addf %77, %82 : vector<64x8xf32>
    %c0_83 = arith.constant 0 : index
    %c1_84 = arith.constant 1 : index
    %c0_85 = arith.constant 0 : index
    %84 = vector.load %arg8[%c0_83, %c1_84, %c0_85] : memref<10x10x8xf32, #tpu.memory_space<vmem>>, vector<8x8x8xf32>
    %85 = vector.shape_cast %84 : vector<8x8x8xf32> to vector<64x8xf32>
    %c1_86 = arith.constant 1 : index
    %c0_87 = arith.constant 0 : index
    %c0_88 = arith.constant 0 : index
    %86 = vector.load %arg4[%c1_86, %c0_87, %c0_88] : memref<9x8x8xf32, #tpu.memory_space<vmem>>, vector<1x8x8xf32>
    %87 = vector.shape_cast %86 : vector<1x8x8xf32> to vector<8x8xf32>
    %cst_89 = arith.constant dense<0.000000e+00> : vector<64x8xf32>
    %88 = tpu.matmul %85, %87, %cst_89 {dimension_numbers = #tpu.dot_dimension_numbers<[1], [0], [0], [1], [0, 0, 1, 1], [], []>} : vector<64x8xf32>, vector<8x8xf32>, vector<64x8xf32> -> vector<64x8xf32>
    %89 = arith.addf %83, %88 : vector<64x8xf32>
    %c0_90 = arith.constant 0 : index
    %c2_91 = arith.constant 2 : index
    %c0_92 = arith.constant 0 : index
    %90 = vector.load %arg8[%c0_90, %c2_91, %c0_92] : memref<10x10x8xf32, #tpu.memory_space<vmem>>, vector<8x8x8xf32>
    %91 = vector.shape_cast %90 : vector<8x8x8xf32> to vector<64x8xf32>
    %c2_93 = arith.constant 2 : index
    %c0_94 = arith.constant 0 : index
    %c0_95 = arith.constant 0 : index
    %92 = vector.load %arg4[%c2_93, %c0_94, %c0_95] : memref<9x8x8xf32, #tpu.memory_space<vmem>>, vector<1x8x8xf32>
    %93 = vector.shape_cast %92 : vector<1x8x8xf32> to vector<8x8xf32>
    %cst_96 = arith.constant dense<0.000000e+00> : vector<64x8xf32>
    %94 = tpu.matmul %91, %93, %cst_96 {dimension_numbers = #tpu.dot_dimension_numbers<[1], [0], [0], [1], [0, 0, 1, 1], [], []>} : vector<64x8xf32>, vector<8x8xf32>, vector<64x8xf32> -> vector<64x8xf32>
    %95 = arith.addf %89, %94 : vector<64x8xf32>
    %c1_97 = arith.constant 1 : index
    %c0_98 = arith.constant 0 : index
    %c0_99 = arith.constant 0 : index
    %96 = vector.load %arg8[%c1_97, %c0_98, %c0_99] : memref<10x10x8xf32, #tpu.memory_space<vmem>>, vector<8x8x8xf32>
    %97 = vector.shape_cast %96 : vector<8x8x8xf32> to vector<64x8xf32>
    %c3_100 = arith.constant 3 : index
    %c0_101 = arith.constant 0 : index
    %c0_102 = arith.constant 0 : index
    %98 = vector.load %arg4[%c3_100, %c0_101, %c0_102] : memref<9x8x8xf32, #tpu.memory_space<vmem>>, vector<1x8x8xf32>
    %99 = vector.shape_cast %98 : vector<1x8x8xf32> to vector<8x8xf32>
    %cst_103 = arith.constant dense<0.000000e+00> : vector<64x8xf32>
    %100 = tpu.matmul %97, %99, %cst_103 {dimension_numbers = #tpu.dot_dimension_numbers<[1], [0], [0], [1], [0, 0, 1, 1], [], []>} : vector<64x8xf32>, vector<8x8xf32>, vector<64x8xf32> -> vector<64x8xf32>
    %101 = arith.addf %95, %100 : vector<64x8xf32>
    %c1_104 = arith.constant 1 : index
    %c1_105 = arith.constant 1 : index
    %c0_106 = arith.constant 0 : index
    %102 = vector.load %arg8[%c1_104, %c1_105, %c0_106] : memref<10x10x8xf32, #tpu.memory_space<vmem>>, vector<8x8x8xf32>
    %103 = vector.shape_cast %102 : vector<8x8x8xf32> to vector<64x8xf32>
    %c4_107 = arith.constant 4 : index
    %c0_108 = arith.constant 0 : index
    %c0_109 = arith.constant 0 : index
    %104 = vector.load %arg4[%c4_107, %c0_108, %c0_109] : memref<9x8x8xf32, #tpu.memory_space<vmem>>, vector<1x8x8xf32>
    %105 = vector.shape_cast %104 : vector<1x8x8xf32> to vector<8x8xf32>
    %cst_110 = arith.constant dense<0.000000e+00> : vector<64x8xf32>
    %106 = tpu.matmul %103, %105, %cst_110 {dimension_numbers = #tpu.dot_dimension_numbers<[1], [0], [0], [1], [0, 0, 1, 1], [], []>} : vector<64x8xf32>, vector<8x8xf32>, vector<64x8xf32> -> vector<64x8xf32>
    %107 = arith.addf %101, %106 : vector<64x8xf32>
    %c1_111 = arith.constant 1 : index
    %c2_112 = arith.constant 2 : index
    %c0_113 = arith.constant 0 : index
    %108 = vector.load %arg8[%c1_111, %c2_112, %c0_113] : memref<10x10x8xf32, #tpu.memory_space<vmem>>, vector<8x8x8xf32>
    %109 = vector.shape_cast %108 : vector<8x8x8xf32> to vector<64x8xf32>
    %c5_114 = arith.constant 5 : index
    %c0_115 = arith.constant 0 : index
    %c0_116 = arith.constant 0 : index
    %110 = vector.load %arg4[%c5_114, %c0_115, %c0_116] : memref<9x8x8xf32, #tpu.memory_space<vmem>>, vector<1x8x8xf32>
    %111 = vector.shape_cast %110 : vector<1x8x8xf32> to vector<8x8xf32>
    %cst_117 = arith.constant dense<0.000000e+00> : vector<64x8xf32>
    %112 = tpu.matmul %109, %111, %cst_117 {dimension_numbers = #tpu.dot_dimension_numbers<[1], [0], [0], [1], [0, 0, 1, 1], [], []>} : vector<64x8xf32>, vector<8x8xf32>, vector<64x8xf32> -> vector<64x8xf32>
    %113 = arith.addf %107, %112 : vector<64x8xf32>
    %c2_118 = arith.constant 2 : index
    %c0_119 = arith.constant 0 : index
    %c0_120 = arith.constant 0 : index
    %114 = vector.load %arg8[%c2_118, %c0_119, %c0_120] : memref<10x10x8xf32, #tpu.memory_space<vmem>>, vector<8x8x8xf32>
    %115 = vector.shape_cast %114 : vector<8x8x8xf32> to vector<64x8xf32>
    %c6_121 = arith.constant 6 : index
    %c0_122 = arith.constant 0 : index
    %c0_123 = arith.constant 0 : index
    %116 = vector.load %arg4[%c6_121, %c0_122, %c0_123] : memref<9x8x8xf32, #tpu.memory_space<vmem>>, vector<1x8x8xf32>
    %117 = vector.shape_cast %116 : vector<1x8x8xf32> to vector<8x8xf32>
    %cst_124 = arith.constant dense<0.000000e+00> : vector<64x8xf32>
    %118 = tpu.matmul %115, %117, %cst_124 {dimension_numbers = #tpu.dot_dimension_numbers<[1], [0], [0], [1], [0, 0, 1, 1], [], []>} : vector<64x8xf32>, vector<8x8xf32>, vector<64x8xf32> -> vector<64x8xf32>
    %119 = arith.addf %113, %118 : vector<64x8xf32>
    %c2_125 = arith.constant 2 : index
    %c1_126 = arith.constant 1 : index
    %c0_127 = arith.constant 0 : index
    %120 = vector.load %arg8[%c2_125, %c1_126, %c0_127] : memref<10x10x8xf32, #tpu.memory_space<vmem>>, vector<8x8x8xf32>
    %121 = vector.shape_cast %120 : vector<8x8x8xf32> to vector<64x8xf32>
    %c7_128 = arith.constant 7 : index
    %c0_129 = arith.constant 0 : index
    %c0_130 = arith.constant 0 : index
    %122 = vector.load %arg4[%c7_128, %c0_129, %c0_130] : memref<9x8x8xf32, #tpu.memory_space<vmem>>, vector<1x8x8xf32>
    %123 = vector.shape_cast %122 : vector<1x8x8xf32> to vector<8x8xf32>
    %cst_131 = arith.constant dense<0.000000e+00> : vector<64x8xf32>
    %124 = tpu.matmul %121, %123, %cst_131 {dimension_numbers = #tpu.dot_dimension_numbers<[1], [0], [0], [1], [0, 0, 1, 1], [], []>} : vector<64x8xf32>, vector<8x8xf32>, vector<64x8xf32> -> vector<64x8xf32>
    %125 = arith.addf %119, %124 : vector<64x8xf32>
    %c2_132 = arith.constant 2 : index
    %c2_133 = arith.constant 2 : index
    %c0_134 = arith.constant 0 : index
    %126 = vector.load %arg8[%c2_132, %c2_133, %c0_134] : memref<10x10x8xf32, #tpu.memory_space<vmem>>, vector<8x8x8xf32>
    %127 = vector.shape_cast %126 : vector<8x8x8xf32> to vector<64x8xf32>
    %c8_135 = arith.constant 8 : index
    %c0_136 = arith.constant 0 : index
    %c0_137 = arith.constant 0 : index
    %128 = vector.load %arg4[%c8_135, %c0_136, %c0_137] : memref<9x8x8xf32, #tpu.memory_space<vmem>>, vector<1x8x8xf32>
    %129 = vector.shape_cast %128 : vector<1x8x8xf32> to vector<8x8xf32>
    %cst_138 = arith.constant dense<0.000000e+00> : vector<64x8xf32>
    %130 = tpu.matmul %127, %129, %cst_138 {dimension_numbers = #tpu.dot_dimension_numbers<[1], [0], [0], [1], [0, 0, 1, 1], [], []>} : vector<64x8xf32>, vector<8x8xf32>, vector<64x8xf32> -> vector<64x8xf32>
    %131 = arith.addf %125, %130 : vector<64x8xf32>
    %cst_139 = arith.constant 0.000000e+00 : f32
    %132 = vector.broadcast %cst_139 : f32 to vector<64x8xf32>
    %133 = arith.maximumf %131, %132 : vector<64x8xf32>
    %c0_140 = arith.constant 0 : index
    %c0_141 = arith.constant 0 : index
    %134 = vector.load %arg6[%c0_140, %c0_141] : memref<64x8xf32, #tpu.memory_space<vmem>>, vector<64x8xf32>
    tpu.vector_store %arg6[%c0_140, %c0_141], %133 {strides = array<i32>} : memref<64x8xf32, #tpu.memory_space<vmem>>, vector<64x8xf32>,
    return
  }
  func.func @transform_0(%arg0: i32) -> (i32, i32, i32, i32) {
    %c0_i32 = arith.constant 0 : i32
    %c0_i32_0 = arith.constant 0 : i32
    %c0_i32_1 = arith.constant 0 : i32
    %c0_i32_2 = arith.constant 0 : i32
    return %arg0, %c0_i32, %c0_i32_0, %c0_i32_1 : i32, i32, i32, i32
  }
  func.func @transform_1(%arg0: i32) -> (i32, i32, i32) {
    %c0_i32 = arith.constant 0 : i32
    %c0_i32_0 = arith.constant 0 : i32
    %c0_i32_1 = arith.constant 0 : i32
    %c0_i32_2 = arith.constant 0 : i32
    return %c0_i32, %c0_i32_0, %c0_i32_1 : i32, i32, i32
  }
  func.func @transform_2(%arg0: i32) -> (i32, i32) {
    %c0_i32 = arith.constant 0 : i32
    %c0_i32_0 = arith.constant 0 : i32
    %c0_i32_1 = arith.constant 0 : i32
    return %c0_i32, %c0_i32_0 : i32, i32
  }
  func.func @transform_3(%arg0: i32) -> (i32, i32, i32) {
    %c0_i32 = arith.constant 0 : i32
    %c0_i32_0 = arith.constant 0 : i32
    %c0_i32_1 = arith.constant 0 : i32
    %c0_i32_2 = arith.constant 0 : i32
    return %c0_i32, %c0_i32_0, %c0_i32_1 : i32, i32, i32
  }
  func.func @transform_4(%arg0: i32) -> (i32, i32) {
    %c0_i32 = arith.constant 0 : i32
    %c0_i32_0 = arith.constant 0 : i32
    %c0_i32_1 = arith.constant 0 : i32
    return %c0_i32, %c0_i32_0 : i32, i32
  }
  func.func @transform_5(%arg0: i32) -> (i32, i32) {
    %c0_i32 = arith.constant 0 : i32
    %c0_i32_0 = arith.constant 0 : i32
    return %arg0, %c0_i32 : i32, i32
  }
}

</mosaic_0001>

<llo_original>
// kernel: down_forward.1
$region0: #{down_forward.1}
  #allocation0 [shape = 'u32[]', space=smem, size = 0x4, offset = 0x4, fixed_abs, tag = 'smem constant byte address 0x4 - core index']
  #allocation1 [shape = 'u32[144,128]{1,0:T(1,128)}', space=vmem, size = 0x12000, scoped, tag = 'internal scratch']
  #allocation2 [shape = 'f32[10,10,4]{2,1,0:T(8,128)}', space=vmem, size = 0x14000, scoped, tag = 'scratch operand']
  #allocation3 [shape = 'f32[10,10,8]{2,1,0:T(8,128)}', space=vmem, size = 0x14000, scoped, tag = 'scratch operand']
  %s0 = inlined_call_operand.vmem [shape: f32[16,2,8,8], index: 0, kind: input, shape index: {}]
  %s1 = inlined_call_operand.vmem [shape: f32[9,4,8], index: 1, kind: input, shape index: {}]
  %s2 = inlined_call_operand.vmem [shape: f32[1,8], index: 2, kind: input, shape index: {}]
  %s3 = inlined_call_operand.vmem [shape: f32[9,8,8], index: 3, kind: input, shape index: {}]
  %s4 = inlined_call_operand.vmem [shape: f32[1,8], index: 4, kind: input, shape index: {}]
  %s5 = inlined_call_operand.vmem [shape: f32[128,8], index: 5, kind: output, shape index: {}]
  %s6 = sld [smem:[#allocation0]]
  $region53: #{down_forward.1} parent=0
    _
  %s8 = ssub.s32 1, %s6
  %s9 = scalar_select 0, %s8, %s6
  loop: start=0, step=1, limit=4
  $region2: #{down_forward.1} parent=0 // loop_pre_header
    _
  $region3: #{down_forward.1} parent=0 // loop_header
    %s11 = sphi 0, %s15
    %p12 = scmp.ge.s32.totalorder %s11, 4
    %s21 = sphi 0, %s23
    %s24 = sphi 0, %s21
    %s25 = sphi 0, %s24
    %s41 = sphi 0, %s25
    %s45 = sphi 0, %s45
    %s47 = sphi 0, %s45
    %s48 = sphi 0, %s47
    %s62 = sphi 0, %s48
    %s66 = sphi 0, %s66
    %s68 = sphi 0, %s66
    %s69 = sphi 0, %s68
    %s83 = sphi 0, %s69
    %s87 = sphi 0, %s87
    %s89 = sphi 0, %s87
    %s90 = sphi 0, %s89
    %s104 = sphi 0, %s90
    %s108 = sphi 0, %s108
    %s110 = sphi 0, %s108
    %s111 = sphi 0, %s110
    %s125 = sphi 0, %s111
    %s131 = sphi 0, %s133
    %s134 = sphi 0, %s131
    %s135 = sphi 0, %s134
    %s151 = sphi 0, %s135
  $region4: #{down_forward.1} parent=0 // loop_header_branch
    %14 = sbr.rel (%p12) target = $region8
  $region5: #{down_forward.1} parent=0 // loop_body
    %s16 = ssub.s32 %s11, 1
    %s17 = ssub.s32 %s11, 2
    %s18 = sadd.s32 %s11, 1
    %s19 = ssub.s32 %s11, %s18
    %p20 = scmp.eq.s32.totalorder %s19, 0
    %s22 = sadd.s32 %s21, 1
    %s23 = scalar_select %p20, %s21, %s22
    %p26 = pneg %p20
    %p27 = scmp.eq.s32.totalorder %s11, 1
    %p28 = por %p26, %p27
    %p29 = scmp.ne.s32.totalorder %s21, %s24
    %p30 = scmp.eq.s32.totalorder %s11, 0
    %p31 = por %p29, %p30
    %p32 = scmp.ne.s32.totalorder %s21, %s24
    %p33 = scmp.eq.s32.totalorder %s16, 1
    %p34 = por %p32, %p33
    %p35 = scmp.ne.s32.totalorder %s24, %s25
    %p36 = scmp.eq.s32.totalorder %s16, 0
    %p37 = por %p35, %p36
    %p38 = scmp.ne.s32.totalorder %s24, %s25
    %p39 = scmp.eq.s32.totalorder %s17, 1
    %p40 = por %p38, %p39
    %p42 = scmp.ne.s32.totalorder %s25, %s41
    %p43 = scmp.eq.s32.totalorder %s17, 0
    %p44 = por %p42, %p43
    %s46 = sadd.s32 %s45, 1
    %p49 = scmp.eq.s32.totalorder %s11, 1
    %p50 = scmp.ne.s32.totalorder %s45, %s47
    %p51 = scmp.eq.s32.totalorder %s11, 0
    %p52 = por %p50, %p51
    %p53 = scmp.ne.s32.totalorder %s45, %s47
    %p54 = scmp.eq.s32.totalorder %s16, 1
    %p55 = por %p53, %p54
    %p56 = scmp.ne.s32.totalorder %s47, %s48
    %p57 = scmp.eq.s32.totalorder %s16, 0
    %p58 = por %p56, %p57
    %p59 = scmp.ne.s32.totalorder %s47, %s48
    %p60 = scmp.eq.s32.totalorder %s17, 1
    %p61 = por %p59, %p60
    %p63 = scmp.ne.s32.totalorder %s48, %s62
    %p64 = scmp.eq.s32.totalorder %s17, 0
    %p65 = por %p63, %p64
    %s67 = sadd.s32 %s66, 1
    %p70 = scmp.eq.s32.totalorder %s11, 1
    %p71 = scmp.ne.s32.totalorder %s66, %s68
    %p72 = scmp.eq.s32.totalorder %s11, 0
    %p73 = por %p71, %p72
    %p74 = scmp.ne.s32.totalorder %s66, %s68
    %p75 = scmp.eq.s32.totalorder %s16, 1
    %p76 = por %p74, %p75
    %p77 = scmp.ne.s32.totalorder %s68, %s69
    %p78 = scmp.eq.s32.totalorder %s16, 0
    %p79 = por %p77, %p78
    %p80 = scmp.ne.s32.totalorder %s68, %s69
    %p81 = scmp.eq.s32.totalorder %s17, 1
    %p82 = por %p80, %p81
    %p84 = scmp.ne.s32.totalorder %s69, %s83
    %p85 = scmp.eq.s32.totalorder %s17, 0
    %p86 = por %p84, %p85
    %s88 = sadd.s32 %s87, 1
    %p91 = scmp.eq.s32.totalorder %s11, 1
    %p92 = scmp.ne.s32.totalorder %s87, %s89
    %p93 = scmp.eq.s32.totalorder %s11, 0
    %p94 = por %p92, %p93
    %p95 = scmp.ne.s32.totalorder %s87, %s89
    %p96 = scmp.eq.s32.totalorder %s16, 1
    %p97 = por %p95, %p96
    %p98 = scmp.ne.s32.totalorder %s89, %s90
    %p99 = scmp.eq.s32.totalorder %s16, 0
    %p100 = por %p98, %p99
    %p101 = scmp.ne.s32.totalorder %s89, %s90
    %p102 = scmp.eq.s32.totalorder %s17, 1
    %p103 = por %p101, %p102
    %p105 = scmp.ne.s32.totalorder %s90, %s104
    %p106 = scmp.eq.s32.totalorder %s17, 0
    %p107 = por %p105, %p106
    %s109 = sadd.s32 %s108, 1
    %p112 = scmp.eq.s32.totalorder %s11, 1
    %p113 = scmp.ne.s32.totalorder %s108, %s110
    %p114 = scmp.eq.s32.totalorder %s11, 0
    %p115 = por %p113, %p114
    %p116 = scmp.ne.s32.totalorder %s108, %s110
    %p117 = scmp.eq.s32.totalorder %s16, 1
    %p118 = por %p116, %p117
    %p119 = scmp.ne.s32.totalorder %s110, %s111
    %p120 = scmp.eq.s32.totalorder %s16, 0
    %p121 = por %p119, %p120
    %p122 = scmp.ne.s32.totalorder %s110, %s111
    %p123 = scmp.eq.s32.totalorder %s17, 1
    %p124 = por %p122, %p123
    %p126 = scmp.ne.s32.totalorder %s111, %s125
    %p127 = scmp.eq.s32.totalorder %s17, 0
    %p128 = por %p126, %p127
    %s129 = ssub.s32 %s11, %s18
    %p130 = scmp.eq.s32.totalorder %s129, 0
    %s132 = sadd.s32 %s131, 1
    %s133 = scalar_select %p130, %s131, %s132
    %p136 = pneg %p130
    %p137 = scmp.eq.s32.totalorder %s11, 1
    %p138 = por %p136, %p137
    %p139 = scmp.ne.s32.totalorder %s131, %s134
    %p140 = scmp.eq.s32.totalorder %s11, 0
    %p141 = por %p139, %p140
    %p142 = scmp.ne.s32.totalorder %s131, %s134
    %p143 = scmp.eq.s32.totalorder %s16, 1
    %p144 = por %p142, %p143
    %p145 = scmp.ne.s32.totalorder %s134, %s135
    %p146 = scmp.eq.s32.totalorder %s16, 0
    %p147 = por %p145, %p146
    %p148 = scmp.ne.s32.totalorder %s134, %s135
    %p149 = scmp.eq.s32.totalorder %s17, 1
    %p150 = por %p148, %p149
    %p152 = scmp.ne.s32.totalorder %s135, %s151
    %p153 = scmp.eq.s32.totalorder %s17, 0
    %p154 = por %p152, %p153
    %p155 = scmp.le.s32.totalorder 1, %s11
    %p156 = scmp.lt.s32.totalorder %s11, 3
    %p157 = pnand %p155, %p156
    %p158 = pneg %p157
    // Predicated region
    $region9: #{down_forward.1} parent=5 // pred_check
      _
    $region10: #{down_forward.1} parent=5 // pred_check_branch
      %160 = sbr.rel (%p157) target = $region12
    $region11: #{down_forward.1} parent=5 // pred_region
      %s161 = ssub.s32 %s11, 1
      // Predicated region
      $region13: #{down_forward.1} parent=11 // pred_check
        %p162 = pneg %p58
      $region14: #{down_forward.1} parent=11 // pred_check_branch
        %164 = sbr.rel (%p162) target = $region16
      $region15: #{down_forward.1} parent=11 // pred_region
        _
      $region16: #{down_forward.1} parent=11 // pred_fallthru
        _
      // Predicated region
      $region17: #{down_forward.1} parent=11 // pred_check
        %p165 = pneg %p79
      $region18: #{down_forward.1} parent=11 // pred_check_branch
        %167 = sbr.rel (%p165) target = $region20
      $region19: #{down_forward.1} parent=11 // pred_region
        _
      $region20: #{down_forward.1} parent=11 // pred_fallthru
        _
      // Predicated region
      $region21: #{down_forward.1} parent=11 // pred_check
        %p168 = pneg %p100
      $region22: #{down_forward.1} parent=11 // pred_check_branch
        %170 = sbr.rel (%p168) target = $region24
      $region23: #{down_forward.1} parent=11 // pred_region
        _
      $region24: #{down_forward.1} parent=11 // pred_fallthru
        _
      // Predicated region
      $region25: #{down_forward.1} parent=11 // pred_check
        %p171 = pneg %p121
      $region26: #{down_forward.1} parent=11 // pred_check_branch
        %173 = sbr.rel (%p171) target = $region28
      $region27: #{down_forward.1} parent=11 // pred_region
        _
      $region28: #{down_forward.1} parent=11 // pred_fallthru
        _
    $region12: #{down_forward.1} parent=5 // pred_fallthru
      _
    %p174 = scmp.lt.s32.totalorder %s11, 2
    // Predicated region
    $region29: #{down_forward.1} parent=5 // pred_check
      %p175 = pneg %p174
    $region30: #{down_forward.1} parent=5 // pred_check_branch
      %177 = sbr.rel (%p175) target = $region32
    $region31: #{down_forward.1} parent=5 // pred_region
      // Predicated region
      $region33: #{down_forward.1} parent=31 // pred_check
        %p178 = pneg %p31
      $region34: #{down_forward.1} parent=31 // pred_check_branch
        %180 = sbr.rel (%p178) target = $region36
      $region35: #{down_forward.1} parent=31 // pred_region
        %s181 = smul.u32 8, %s11
        %p182 = scmp.lt.s32.totalorder %s181, 15
        %s183 = scalar_select %p182, %s181, 15
        %s184 = smul.addr %s183, 2
        %s185 = smul.addr %s184, 8
        %s186 = scalar_lea.vmem %s0, %s185
        %s187 = smul.u32 8, %s11
      $region36: #{down_forward.1} parent=31 // pred_fallthru
        _
    $region32: #{down_forward.1} parent=5 // pred_fallthru
      _
    %p188 = scmp.le.s32.totalorder 1, %s11
    %p189 = scmp.lt.s32.totalorder %s11, 3
    %p190 = pnand %p188, %p189
    %p191 = pneg %p190
    // Predicated region
    $region37: #{down_forward.1} parent=5 // pred_check
      _
    $region38: #{down_forward.1} parent=5 // pred_check_branch
      %193 = sbr.rel (%p190) target = $region40
    $region39: #{down_forward.1} parent=5 // pred_region
      %s194 = ssub.s32 %s11, 1
      %s195 = smul.u32 8, %s16
      %p196 = scmp.lt.s32.totalorder %s195, 15
      %s197 = scalar_select %p196, %s195, 15
      %s198 = smul.addr %s197, 2
      %s199 = smul.addr %s198, 8
      %s200 = scalar_lea.vmem %s0, %s199
      %p201 = pneg %p37
      %p202 = pneg %p34
      %p203 = pneg %p58
      %p204 = pneg %p55
      %p205 = pneg %p79
      %p206 = pneg %p76
      %p207 = pneg %p100
      %p208 = pneg %p97
      %p209 = pneg %p121
      %p210 = pneg %p118
      %p211 = pneg %p147
      %p212 = pneg %p144
      %s213 = smul.u32 8, %s16
      %p214 = scmp.lt.s32.totalorder %s213, 15
      %s215 = scalar_select %p214, %s213, 15
      %s216 = smul.addr %s215, 8
      %s217 = scalar_lea.vmem %s5, %s216
      %s218 = smul.u32 8, %s16
      %p219 = scmp.lt.s32.totalorder %s218, 15
      %s220 = scalar_select %p219, %s218, 15
      %s221 = smul.addr %s220, 2
      %s222 = smul.addr %s221, 8
      %s223 = scalar_lea.vmem %s0, %s222
      %s224 = smul.u32 8, %s16
      %s225 = smul.u32 8, %s16
      %p226 = scmp.lt.s32.totalorder %s225, 15
      %s227 = scalar_select %p226, %s225, 15
      %s228 = smul.addr %s227, 8
      %s229 = scalar_lea.vmem %s5, %s228
      %s230 = smul.u32 8, %s16
      %v231 = vld [vmem:[%s223] sm:$0xff]
      %v232 = vld [vmem:[%s223 + $0x8] sm:$0xff]
      %v233 = vld [vmem:[%s223 + $0x10] sm:$0xff]
      %v234 = vld [vmem:[%s223 + $0x18] sm:$0xff]
      %v235 = vld [vmem:[%s223 + $0x20] sm:$0xff]
      %v236 = vld [vmem:[%s223 + $0x28] sm:$0xff]
      %v237 = vld [vmem:[%s223 + $0x30] sm:$0xff]
      %v238 = vld [vmem:[%s223 + $0x38] sm:$0xff]
      %v239 = vld [vmem:[%s223 + $0x40] sm:$0xff]
      %v240 = vld [vmem:[%s223 + $0x48] sm:$0xff]
      %v241 = vld [vmem:[%s223 + $0x50] sm:$0xff]
      %v242 = vld [vmem:[%s223 + $0x58] sm:$0xff]
      %v243 = vld [vmem:[%s223 + $0x60] sm:$0xff]
      %v244 = vld [vmem:[%s223 + $0x68] sm:$0xff]
      %v245 = vld [vmem:[%s223 + $0x70] sm:$0xff]
      %v246 = vld [vmem:[%s223 + $0x78] sm:$0xff]
      %v247 = vmax.f32 %v231, %v232
      %v248 = vmax.f32 %v233, %v234
      %v249 = vmax.f32 %v235, %v236
      %v250 = vmax.f32 %v237, %v238
      %v251 = vmax.f32 %v239, %v240
      %v252 = vmax.f32 %v241, %v242
      %v253 = vmax.f32 %v243, %v244
      %v254 = vmax.f32 %v245, %v246
      %263 = vrot.lane.b32.xlu0 %v247, 124
      %v264 = vpop.permute.xlu0 %263
      %265 = vrot.lane.b32.xlu0 %v248, 124
      %v266 = vpop.permute.xlu0 %265
      %267 = vrot.lane.b32.xlu0 %v249, 124
      %v268 = vpop.permute.xlu0 %267
      %269 = vrot.lane.b32.xlu0 %v250, 124
      %v270 = vpop.permute.xlu0 %269
      %271 = vrot.lane.b32.xlu0 %v251, 124
      %v272 = vpop.permute.xlu0 %271
      %273 = vrot.lane.b32.xlu0 %v252, 124
      %v274 = vpop.permute.xlu0 %273
      %275 = vrot.lane.b32.xlu0 %v253, 124
      %v276 = vpop.permute.xlu0 %275
      %277 = vrot.lane.b32.xlu0 %v254, 124
      %v278 = vpop.permute.xlu0 %277
      %v287 = vmax.f32 %v247, %v264
      %v288 = vmax.f32 %v248, %v266
      %v289 = vmax.f32 %v249, %v268
      %v290 = vmax.f32 %v250, %v270
      %v291 = vmax.f32 %v251, %v272
      %v292 = vmax.f32 %v252, %v274
      %v293 = vmax.f32 %v253, %v276
      %v294 = vmax.f32 %v254, %v278
      %vm295 = vcmask 31744
      %296 = vst.msk [vmem:[#allocation2] sm:$0xff] %vm295, 0.0
      %vm297 = vcmask 25600
      %298 = vst.msk [vmem:[#allocation2 + $0x8] sm:$0x3] %vm297, 0.0
      %299 = vst.msk [vmem:[#allocation2 + $0x10] sm:$0xff] %vm295, 0.0
      %300 = vst.msk [vmem:[#allocation2 + $0x18] sm:$0x3] %vm297, 0.0
      %301 = vst.msk [vmem:[#allocation2 + $0x20] sm:$0xff] %vm295, 0.0
      %302 = vst.msk [vmem:[#allocation2 + $0x28] sm:$0x3] %vm297, 0.0
      %303 = vst.msk [vmem:[#allocation2 + $0x30] sm:$0xff] %vm295, 0.0
      %304 = vst.msk [vmem:[#allocation2 + $0x38] sm:$0x3] %vm297, 0.0
      %305 = vst.msk [vmem:[#allocation2 + $0x40] sm:$0xff] %vm295, 0.0
      %306 = vst.msk [vmem:[#allocation2 + $0x48] sm:$0x3] %vm297, 0.0
      %307 = vst.msk [vmem:[#allocation2 + $0x50] sm:$0xff] %vm295, 0.0
      %308 = vst.msk [vmem:[#allocation2 + $0x58] sm:$0x3] %vm297, 0.0
      %309 = vst.msk [vmem:[#allocation2 + $0x60] sm:$0xff] %vm295, 0.0
      %310 = vst.msk [vmem:[#allocation2 + $0x68] sm:$0x3] %vm297, 0.0
      %311 = vst.msk [vmem:[#allocation2 + $0x70] sm:$0xff] %vm295, 0.0
      %312 = vst.msk [vmem:[#allocation2 + $0x78] sm:$0x3] %vm297, 0.0
      %313 = vst.msk [vmem:[#allocation2 + $0x80] sm:$0xff] %vm295, 0.0
      %314 = vst.msk [vmem:[#allocation2 + $0x88] sm:$0x3] %vm297, 0.0
      %315 = vst.msk [vmem:[#allocation2 + $0x90] sm:$0xff] %vm295, 0.0
      %316 = vst.msk [vmem:[#allocation2 + $0x98] sm:$0x3] %vm297, 0.0
      %s317 = scalar_lea.vmem [#allocation2], 16
      %318 = vst.msk [vmem:[%s317 + $0x1] sm:$0xff] %vm295, %v287
      %319 = vst.msk [vmem:[%s317 + $0x11] sm:$0xff] %vm295, %v288
      %320 = vst.msk [vmem:[%s317 + $0x21] sm:$0xff] %vm295, %v289
      %321 = vst.msk [vmem:[%s317 + $0x31] sm:$0xff] %vm295, %v290
      %322 = vst.msk [vmem:[%s317 + $0x41] sm:$0xff] %vm295, %v291
      %323 = vst.msk [vmem:[%s317 + $0x51] sm:$0xff] %vm295, %v292
      %324 = vst.msk [vmem:[%s317 + $0x61] sm:$0xff] %vm295, %v293
      %325 = vst.msk [vmem:[%s317 + $0x71] sm:$0xff] %vm295, %v294
      %v326 = vld [vmem:[%s2] sm:$0x1]
      %v328 = vlaneseq
      %v329 = vshrl.u32 %v328, 7
      %v330 = vsub.s32 0, %v329
      %v331 = vrot.slane %v326, %v330
      %v333 = vld [vmem:[#allocation2] sm:$0xff]
      %v334 = vld [vmem:[#allocation2 + $0x10] sm:$0xff]
      %v335 = vld [vmem:[#allocation2 + $0x20] sm:$0xff]
      %v336 = vld [vmem:[#allocation2 + $0x30] sm:$0xff]
      %v337 = vld [vmem:[#allocation2 + $0x40] sm:$0xff]
      %v338 = vld [vmem:[#allocation2 + $0x50] sm:$0xff]
      %v339 = vld [vmem:[#allocation2 + $0x60] sm:$0xff]
      %v340 = vld [vmem:[#allocation2 + $0x70] sm:$0xff]
      %v341 = vld [vmem:[%s1] sm:$0xf]
      %v343 = vsel %vm295, %v333, 0
      %v346 = vsel %vm295, %v334, 0
      %v349 = vsel %vm295, %v335, 0
      %v352 = vsel %vm295, %v336, 0
      %v355 = vsel %vm295, %v337, 0
      %v358 = vsel %vm295, %v338, 0
      %v361 = vsel %vm295, %v339, 0
      %v364 = vsel %vm295, %v340, 0
      %vm366 = vcmask 1043456
      %v368 = vsel %vm366, %v341, 0
      %370 = vmatprep.subr.mxu0 0.0
      %371 = vmatpush1.msra.mxu0 %v368
      %372 = vmatprep.subr.mxu0 0.0
      %373 = vmatpush1.msra.mxu0 0.0
      %374 = vmatprep.subr.mxu0 0.0
      %375 = vmatpush1.msra.mxu0 0.0
      %376 = vmatprep.subr.mxu0 0.0
      %377 = vmatpush1.msra.mxu0 0.0
      %378 = vmatprep.subr.mxu0 0.0
      %379 = vmatpush1.msra.mxu0 0.0
      %380 = vmatprep.subr.mxu0 0.0
      %381 = vmatpush1.msra.mxu0 0.0
      %382 = vmatprep.subr.mxu0 0.0
      %383 = vmatpush1.msra.mxu0 0.0
      %384 = vmatprep.subr.mxu0 0.0
      %385 = vmatpush1.msra.mxu0 0.0
      %386 = vmatprep.subr.mxu0 0.0
      %387 = vmatpush1.msra.mxu0 0.0
      %388 = vmatprep.subr.mxu0 0.0
      %389 = vmatpush1.msra.mxu0 0.0
      %390 = vmatprep.subr.mxu0 0.0
      %391 = vmatpush1.msra.mxu0 0.0
      %392 = vmatprep.subr.mxu0 0.0
      %393 = vmatpush1.msra.mxu0 0.0
      %394 = vmatprep.subr.mxu0 0.0
      %395 = vmatpush1.msra.mxu0 0.0
      %396 = vmatprep.subr.mxu0 0.0
      %397 = vmatpush1.msra.mxu0 0.0
      %398 = vmatprep.subr.mxu0 0.0
      %399 = vmatpush1.msra.mxu0 0.0
      %400 = vmatprep.subr.mxu0 0.0
      %401 = vmatpush1.msra.mxu0 0.0
      %402 = vmatprep.subr.mxu0 0.0
      %403 = vmatpush1.msra.mxu0 0.0
      %404 = vmatprep.subr.mxu0 0.0
      %405 = vmatpush1.msra.mxu0 0.0
      %406 = vmatprep.subr.mxu0 0.0
      %407 = vmatpush1.msra.mxu0 0.0
      %408 = vmatprep.subr.mxu0 0.0
      %409 = vmatpush1.msra.mxu0 0.0
      %410 = vmatprep.subr.mxu0 0.0
      %411 = vmatpush1.msra.mxu0 0.0
      %412 = vmatprep.subr.mxu0 0.0
      %413 = vmatpush1.msra.mxu0 0.0
      %414 = vmatprep.subr.mxu0 0.0
      %415 = vmatpush1.msra.mxu0 0.0
      %416 = vmatprep.subr.mxu0 0.0
      %417 = vmatpush1.msra.mxu0 0.0
      %418 = vmatprep.subr.mxu0 0.0
      %419 = vmatpush1.msra.mxu0 0.0
      %420 = vmatprep.subr.mxu0 0.0
      %421 = vmatpush1.msra.mxu0 0.0
      %422 = vmatprep.subr.mxu0 0.0
      %423 = vmatpush1.msra.mxu0 0.0
      %424 = vmatprep.subr.mxu0 0.0
      %425 = vmatpush1.msra.mxu0 0.0
      %426 = vmatprep.subr.mxu0 0.0
      %427 = vmatpush1.msra.mxu0 0.0
      %428 = vmatprep.subr.mxu0 0.0
      %429 = vmatpush1.msra.mxu0 0.0
      %430 = vmatprep.subr.mxu0 0.0
      %431 = vmatpush1.msra.mxu0 0.0
      %432 = vmatprep.subr.mxu0 0.0
      %433 = vmatpush1.msra.mxu0 0.0
      %434 = vmatprep.mubr.f32.mxu0 0.0
      %435 = vmatmul.mubr.f32.gmra.mrb[0].mxu0 %v343
      %v436 = vpop.f32.mrb[0].mxu0
      %v437 = vadd.f32 0.0, %v436
      %v438 = vpop.f32.mrb[0].mxu0
      %439 = vmatprep.mubr.f32.mxu0 0.0
      %440 = vmatmul.mubr.f32.gmra.mrb[0].mxu0 %v346
      %v441 = vpop.f32.mrb[0].mxu0
      %v442 = vadd.f32 0.0, %v441
      %v443 = vpop.f32.mrb[0].mxu0
      %444 = vmatprep.mubr.f32.mxu0 0.0
      %445 = vmatmul.mubr.f32.gmra.mrb[0].mxu0 %v349
      %v446 = vpop.f32.mrb[0].mxu0
      %v447 = vadd.f32 0.0, %v446
      %v448 = vpop.f32.mrb[0].mxu0
      %449 = vmatprep.mubr.f32.mxu0 0.0
      %450 = vmatmul.mubr.f32.gmra.mrb[0].mxu0 %v352
      %v451 = vpop.f32.mrb[0].mxu0
      %v452 = vadd.f32 0.0, %v451
      %v453 = vpop.f32.mrb[0].mxu0
      %454 = vmatprep.mubr.f32.mxu0 0.0
      %455 = vmatmul.mubr.f32.gmra.mrb[0].mxu0 %v355
      %v456 = vpop.f32.mrb[0].mxu0
      %v457 = vadd.f32 0.0, %v456
      %v458 = vpop.f32.mrb[0].mxu0
      %459 = vmatprep.mubr.f32.mxu0 0.0
      %460 = vmatmul.mubr.f32.gmra.mrb[0].mxu0 %v358
      %v461 = vpop.f32.mrb[0].mxu0
      %v462 = vadd.f32 0.0, %v461
      %v463 = vpop.f32.mrb[0].mxu0
      %464 = vmatprep.mubr.f32.mxu0 0.0
      %465 = vmatmul.mubr.f32.gmra.mrb[0].mxu0 %v361
      %v466 = vpop.f32.mrb[0].mxu0
      %v467 = vadd.f32 0.0, %v466
      %v468 = vpop.f32.mrb[0].mxu0
      %469 = vmatprep.mubr.f32.mxu0 0.0
      %470 = vmatmul.mubr.f32.gmra.mrb[0].mxu0 %v364
      %v471 = vpop.f32.mrb[0].mxu0
      %v472 = vadd.f32 0.0, %v471
      %v473 = vpop.f32.mrb[0].mxu0
      %474 = vdwg.mxu0
      %v475 = vadd.f32 %v331, %v437
      %v476 = vadd.f32 %v331, %v442
      %v477 = vadd.f32 %v331, %v447
      %v478 = vadd.f32 %v331, %v452
      %v479 = vadd.f32 %v331, %v457
      %v480 = vadd.f32 %v331, %v462
      %v481 = vadd.f32 %v331, %v467
      %v482 = vadd.f32 %v331, %v472
      %v483 = vld [vmem:[#allocation2 + $0x1] sm:$0xff]
      %v484 = vld [vmem:[#allocation2 + $0x11] sm:$0xff]
      %v485 = vld [vmem:[#allocation2 + $0x21] sm:$0xff]
      %v486 = vld [vmem:[#allocation2 + $0x31] sm:$0xff]
      %v487 = vld [vmem:[#allocation2 + $0x41] sm:$0xff]
      %v488 = vld [vmem:[#allocation2 + $0x51] sm:$0xff]
      %v489 = vld [vmem:[#allocation2 + $0x61] sm:$0xff]
      %v490 = vld [vmem:[#allocation2 + $0x71] sm:$0xff]
      %s491 = scalar_lea.vmem %s1, 4
      %v492 = vld [vmem:[%s491] sm:$0xf]
      %v494 = vsel %vm295, %v483, 0
      %v497 = vsel %vm295, %v484, 0
      %v500 = vsel %vm295, %v485, 0
      %v503 = vsel %vm295, %v486, 0
      %v506 = vsel %vm295, %v487, 0
      %v509 = vsel %vm295, %v488, 0
      %v512 = vsel %vm295, %v489, 0
      %v515 = vsel %vm295, %v490, 0
      %v518 = vsel %vm366, %v492, 0
      %520 = vmatprep.subr.mxu0 0.0
      %521 = vmatpush1.msra.mxu0 %v518
      %522 = vmatprep.subr.mxu0 0.0
      %523 = vmatpush1.msra.mxu0 0.0
      %524 = vmatprep.subr.mxu0 0.0
      %525 = vmatpush1.msra.mxu0 0.0
      %526 = vmatprep.subr.mxu0 0.0
      %527 = vmatpush1.msra.mxu0 0.0
      %528 = vmatprep.subr.mxu0 0.0
      %529 = vmatpush1.msra.mxu0 0.0
      %530 = vmatprep.subr.mxu0 0.0
      %531 = vmatpush1.msra.mxu0 0.0
      %532 = vmatprep.subr.mxu0 0.0
      %533 = vmatpush1.msra.mxu0 0.0
      %534 = vmatprep.subr.mxu0 0.0
      %535 = vmatpush1.msra.mxu0 0.0
      %536 = vmatprep.subr.mxu0 0.0
      %537 = vmatpush1.msra.mxu0 0.0
      %538 = vmatprep.subr.mxu0 0.0
      %539 = vmatpush1.msra.mxu0 0.0
      %540 = vmatprep.subr.mxu0 0.0
      %541 = vmatpush1.msra.mxu0 0.0
      %542 = vmatprep.subr.mxu0 0.0
      %543 = vmatpush1.msra.mxu0 0.0
      %544 = vmatprep.subr.mxu0 0.0
      %545 = vmatpush1.msra.mxu0 0.0
      %546 = vmatprep.subr.mxu0 0.0
      %547 = vmatpush1.msra.mxu0 0.0
      %548 = vmatprep.subr.mxu0 0.0
      %549 = vmatpush1.msra.mxu0 0.0
      %550 = vmatprep.subr.mxu0 0.0
      %551 = vmatpush1.msra.mxu0 0.0
      %552 = vmatprep.subr.mxu0 0.0
      %553 = vmatpush1.msra.mxu0 0.0
      %554 = vmatprep.subr.mxu0 0.0
      %555 = vmatpush1.msra.mxu0 0.0
      %556 = vmatprep.subr.mxu0 0.0
      %557 = vmatpush1.msra.mxu0 0.0
      %558 = vmatprep.subr.mxu0 0.0
      %559 = vmatpush1.msra.mxu0 0.0
      %560 = vmatprep.subr.mxu0 0.0
      %561 = vmatpush1.msra.mxu0 0.0
      %562 = vmatprep.subr.mxu0 0.0
      %563 = vmatpush1.msra.mxu0 0.0
      %564 = vmatprep.subr.mxu0 0.0
      %565 = vmatpush1.msra.mxu0 0.0
      %566 = vmatprep.subr.mxu0 0.0
      %567 = vmatpush1.msra.mxu0 0.0
      %568 = vmatprep.subr.mxu0 0.0
      %569 = vmatpush1.msra.mxu0 0.0
      %570 = vmatprep.subr.mxu0 0.0
      %571 = vmatpush1.msra.mxu0 0.0
      %572 = vmatprep.subr.mxu0 0.0
      %573 = vmatpush1.msra.mxu0 0.0
      %574 = vmatprep.subr.mxu0 0.0
      %575 = vmatpush1.msra.mxu0 0.0
      %576 = vmatprep.subr.mxu0 0.0
      %577 = vmatpush1.msra.mxu0 0.0
      %578 = vmatprep.subr.mxu0 0.0
      %579 = vmatpush1.msra.mxu0 0.0
      %580 = vmatprep.subr.mxu0 0.0
      %581 = vmatpush1.msra.mxu0 0.0
      %582 = vmatprep.subr.mxu0 0.0
      %583 = vmatpush1.msra.mxu0 0.0
      %584 = vmatprep.mubr.f32.mxu0 0.0
      %585 = vmatmul.mubr.f32.gmra.mrb[0].mxu0 %v494
      %v586 = vpop.f32.mrb[0].mxu0
      %v587 = vadd.f32 0.0, %v586
      %v588 = vpop.f32.mrb[0].mxu0
      %589 = vmatprep.mubr.f32.mxu0 0.0
      %590 = vmatmul.mubr.f32.gmra.mrb[0].mxu0 %v497
      %v591 = vpop.f32.mrb[0].mxu0
      %v592 = vadd.f32 0.0, %v591
      %v593 = vpop.f32.mrb[0].mxu0
      %594 = vmatprep.mubr.f32.mxu0 0.0
      %595 = vmatmul.mubr.f32.gmra.mrb[0].mxu0 %v500
      %v596 = vpop.f32.mrb[0].mxu0
      %v597 = vadd.f32 0.0, %v596
      %v598 = vpop.f32.mrb[0].mxu0
      %599 = vmatprep.mubr.f32.mxu0 0.0
      %600 = vmatmul.mubr.f32.gmra.mrb[0].mxu0 %v503
      %v601 = vpop.f32.mrb[0].mxu0
      %v602 = vadd.f32 0.0, %v601
      %v603 = vpop.f32.mrb[0].mxu0
      %604 = vmatprep.mubr.f32.mxu0 0.0
      %605 = vmatmul.mubr.f32.gmra.mrb[0].mxu0 %v506
      %v606 = vpop.f32.mrb[0].mxu0
      %v607 = vadd.f32 0.0, %v606
      %v608 = vpop.f32.mrb[0].mxu0
      %609 = vmatprep.mubr.f32.mxu0 0.0
      %610 = vmatmul.mubr.f32.gmra.mrb[0].mxu0 %v509
      %v611 = vpop.f32.mrb[0].mxu0
      %v612 = vadd.f32 0.0, %v611
      %v613 = vpop.f32.mrb[0].mxu0
      %614 = vmatprep.mubr.f32.mxu0 0.0
      %615 = vmatmul.mubr.f32.gmra.mrb[0].mxu0 %v512
      %v616 = vpop.f32.mrb[0].mxu0
      %v617 = vadd.f32 0.0, %v616
      %v618 = vpop.f32.mrb[0].mxu0
      %619 = vmatprep.mubr.f32.mxu0 0.0
      %620 = vmatmul.mubr.f32.gmra.mrb[0].mxu0 %v515
      %v621 = vpop.f32.mrb[0].mxu0
      %v622 = vadd.f32 0.0, %v621
      %v623 = vpop.f32.mrb[0].mxu0
      %624 = vdwg.mxu0
      %v625 = vadd.f32 %v475, %v587
      %v626 = vadd.f32 %v476, %v592
      %v627 = vadd.f32 %v477, %v597
      %v628 = vadd.f32 %v478, %v602
      %v629 = vadd.f32 %v479, %v607
      %v630 = vadd.f32 %v480, %v612
      %v631 = vadd.f32 %v481, %v617
      %v632 = vadd.f32 %v482, %v622
      %v633 = vld [vmem:[#allocation2 + $0x2] sm:$0xff]
      %v634 = vld [vmem:[#allocation2 + $0x12] sm:$0xff]
      %v635 = vld [vmem:[#allocation2 + $0x22] sm:$0xff]
      %v636 = vld [vmem:[#allocation2 + $0x32] sm:$0xff]
      %v637 = vld [vmem:[#allocation2 + $0x42] sm:$0xff]
      %v638 = vld [vmem:[#allocation2 + $0x52] sm:$0xff]
      %v639 = vld [vmem:[#allocation2 + $0x62] sm:$0xff]
      %v640 = vld [vmem:[#allocation2 + $0x72] sm:$0xff]
      %s641 = scalar_lea.vmem %s1, 8
      %v642 = vld [vmem:[%s641] sm:$0xf]
      %v644 = vsel %vm295, %v633, 0
      %v647 = vsel %vm295, %v634, 0
      %v650 = vsel %vm295, %v635, 0
      %v653 = vsel %vm295, %v636, 0
      %v656 = vsel %vm295, %v637, 0
      %v659 = vsel %vm295, %v638, 0
      %v662 = vsel %vm295, %v639, 0
      %v665 = vsel %vm295, %v640, 0
      %v668 = vsel %vm366, %v642, 0
      %670 = vmatprep.subr.mxu0 0.0
      %671 = vmatpush1.msra.mxu0 %v668
      %672 = vmatprep.subr.mxu0 0.0
      %673 = vmatpush1.msra.mxu0 0.0
      %674 = vmatprep.subr.mxu0 0.0
      %675 = vmatpush1.msra.mxu0 0.0
      %676 = vmatprep.subr.mxu0 0.0
      %677 = vmatpush1.msra.mxu0 0.0
      %678 = vmatprep.subr.mxu0 0.0
      %679 = vmatpush1.msra.mxu0 0.0
      %680 = vmatprep.subr.mxu0 0.0
      %681 = vmatpush1.msra.mxu0 0.0
      %682 = vmatprep.subr.mxu0 0.0
      %683 = vmatpush1.msra.mxu0 0.0
      %684 = vmatprep.subr.mxu0 0.0
      %685 = vmatpush1.msra.mxu0 0.0
      %686 = vmatprep.subr.mxu0 0.0
      %687 = vmatpush1.msra.mxu0 0.0
      %688 = vmatprep.subr.mxu0 0.0
      %689 = vmatpush1.msra.mxu0 0.0
      %690 = vmatprep.subr.mxu0 0.0
      %691 = vmatpush1.msra.mxu0 0.0
      %692 = vmatprep.subr.mxu0 0.0
      %693 = vmatpush1.msra.mxu0 0.0
      %694 = vmatprep.subr.mxu0 0.0
      %695 = vmatpush1.msra.mxu0 0.0
      %696 = vmatprep.subr.mxu0 0.0
      %697 = vmatpush1.msra.mxu0 0.0
      %698 = vmatprep.subr.mxu0 0.0
      %699 = vmatpush1.msra.mxu0 0.0
      %700 = vmatprep.subr.mxu0 0.0
      %701 = vmatpush1.msra.mxu0 0.0
      %702 = vmatprep.subr.mxu0 0.0
      %703 = vmatpush1.msra.mxu0 0.0
      %704 = vmatprep.subr.mxu0 0.0
      %705 = vmatpush1.msra.mxu0 0.0
      %706 = vmatprep.subr.mxu0 0.0
      %707 = vmatpush1.msra.mxu0 0.0
      %708 = vmatprep.subr.mxu0 0.0
      %709 = vmatpush1.msra.mxu0 0.0
      %710 = vmatprep.subr.mxu0 0.0
      %711 = vmatpush1.msra.mxu0 0.0
      %712 = vmatprep.subr.mxu0 0.0
      %713 = vmatpush1.msra.mxu0 0.0
      %714 = vmatprep.subr.mxu0 0.0
      %715 = vmatpush1.msra.mxu0 0.0
      %716 = vmatprep.subr.mxu0 0.0
      %717 = vmatpush1.msra.mxu0 0.0
      %718 = vmatprep.subr.mxu0 0.0
      %719 = vmatpush1.msra.mxu0 0.0
      %720 = vmatprep.subr.mxu0 0.0
      %721 = vmatpush1.msra.mxu0 0.0
      %722 = vmatprep.subr.mxu0 0.0
      %723 = vmatpush1.msra.mxu0 0.0
      %724 = vmatprep.subr.mxu0 0.0
      %725 = vmatpush1.msra.mxu0 0.0
      %726 = vmatprep.subr.mxu0 0.0
      %727 = vmatpush1.msra.mxu0 0.0
      %728 = vmatprep.subr.mxu0 0.0
      %729 = vmatpush1.msra.mxu0 0.0
      %730 = vmatprep.subr.mxu0 0.0
      %731 = vmatpush1.msra.mxu0 0.0
      %732 = vmatprep.subr.mxu0 0.0
      %733 = vmatpush1.msra.mxu0 0.0
      %734 = vmatprep.mubr.f32.mxu0 0.0
      %735 = vmatmul.mubr.f32.gmra.mrb[0].mxu0 %v644
      %v736 = vpop.f32.mrb[0].mxu0
      %v737 = vadd.f32 0.0, %v736
      %v738 = vpop.f32.mrb[0].mxu0
      %739 = vmatprep.mubr.f32.mxu0 0.0
      %740 = vmatmul.mubr.f32.gmra.mrb[0].mxu0 %v647
      %v741 = vpop.f32.mrb[0].mxu0
      %v742 = vadd.f32 0.0, %v741
      %v743 = vpop.f32.mrb[0].mxu0
      %744 = vmatprep.mubr.f32.mxu0 0.0
      %745 = vmatmul.mubr.f32.gmra.mrb[0].mxu0 %v650
      %v746 = vpop.f32.mrb[0].mxu0
      %v747 = vadd.f32 0.0, %v746
      %v748 = vpop.f32.mrb[0].mxu0
      %749 = vmatprep.mubr.f32.mxu0 0.0
      %750 = vmatmul.mubr.f32.gmra.mrb[0].mxu0 %v653
      %v751 = vpop.f32.mrb[0].mxu0
      %v752 = vadd.f32 0.0, %v751
      %v753 = vpop.f32.mrb[0].mxu0
      %754 = vmatprep.mubr.f32.mxu0 0.0
      %755 = vmatmul.mubr.f32.gmra.mrb[0].mxu0 %v656
      %v756 = vpop.f32.mrb[0].mxu0
      %v757 = vadd.f32 0.0, %v756
      %v758 = vpop.f32.mrb[0].mxu0
      %759 = vmatprep.mubr.f32.mxu0 0.0
      %760 = vmatmul.mubr.f32.gmra.mrb[0].mxu0 %v659
      %v761 = vpop.f32.mrb[0].mxu0
      %v762 = vadd.f32 0.0, %v761
      %v763 = vpop.f32.mrb[0].mxu0
      %764 = vmatprep.mubr.f32.mxu0 0.0
      %765 = vmatmul.mubr.f32.gmra.mrb[0].mxu0 %v662
      %v766 = vpop.f32.mrb[0].mxu0
      %v767 = vadd.f32 0.0, %v766
      %v768 = vpop.f32.mrb[0].mxu0
      %769 = vmatprep.mubr.f32.mxu0 0.0
      %770 = vmatmul.mubr.f32.gmra.mrb[0].mxu0 %v665
      %v771 = vpop.f32.mrb[0].mxu0
      %v772 = vadd.f32 0.0, %v771
      %v773 = vpop.f32.mrb[0].mxu0
      %774 = vdwg.mxu0
      %v775 = vadd.f32 %v625, %v737
      %v776 = vadd.f32 %v626, %v742
      %v777 = vadd.f32 %v627, %v747
      %v778 = vadd.f32 %v628, %v752
      %v779 = vadd.f32 %v629, %v757
      %v780 = vadd.f32 %v630, %v762
      %v781 = vadd.f32 %v631, %v767
      %v782 = vadd.f32 %v632, %v772
      %v783 = vld [vmem:[%s317] sm:$0xff]
      %v784 = vld [vmem:[%s317 + $0x10] sm:$0xff]
      %v785 = vld [vmem:[%s317 + $0x20] sm:$0xff]
      %v786 = vld [vmem:[%s317 + $0x30] sm:$0xff]
      %v787 = vld [vmem:[%s317 + $0x40] sm:$0xff]
      %v788 = vld [vmem:[%s317 + $0x50] sm:$0xff]
      %v789 = vld [vmem:[%s317 + $0x60] sm:$0xff]
      %v790 = vld [vmem:[%s317 + $0x70] sm:$0xff]
      %s791 = scalar_lea.vmem %s1, 12
      %v792 = vld [vmem:[%s791] sm:$0xf]
      %v794 = vsel %vm295, %v783, 0
      %v797 = vsel %vm295, %v784, 0
      %v800 = vsel %vm295, %v785, 0
      %v803 = vsel %vm295, %v786, 0
      %v806 = vsel %vm295, %v787, 0
      %v809 = vsel %vm295, %v788, 0
      %v812 = vsel %vm295, %v789, 0
      %v815 = vsel %vm295, %v790, 0
      %v818 = vsel %vm366, %v792, 0
      %820 = vmatprep.subr.mxu0 0.0
      %821 = vmatpush1.msra.mxu0 %v818
      %822 = vmatprep.subr.mxu0 0.0
      %823 = vmatpush1.msra.mxu0 0.0
      %824 = vmatprep.subr.mxu0 0.0
      %825 = vmatpush1.msra.mxu0 0.0
      %826 = vmatprep.subr.mxu0 0.0
      %827 = vmatpush1.msra.mxu0 0.0
      %828 = vmatprep.subr.mxu0 0.0
      %829 = vmatpush1.msra.mxu0 0.0
      %830 = vmatprep.subr.mxu0 0.0
      %831 = vmatpush1.msra.mxu0 0.0
      %832 = vmatprep.subr.mxu0 0.0
      %833 = vmatpush1.msra.mxu0 0.0
      %834 = vmatprep.subr.mxu0 0.0
      %835 = vmatpush1.msra.mxu0 0.0
      %836 = vmatprep.subr.mxu0 0.0
      %837 = vmatpush1.msra.mxu0 0.0
      %838 = vmatprep.subr.mxu0 0.0
      %839 = vmatpush1.msra.mxu0 0.0
      %840 = vmatprep.subr.mxu0 0.0
      %841 = vmatpush1.msra.mxu0 0.0
      %842 = vmatprep.subr.mxu0 0.0
      %843 = vmatpush1.msra.mxu0 0.0
      %844 = vmatprep.subr.mxu0 0.0
      %845 = vmatpush1.msra.mxu0 0.0
      %846 = vmatprep.subr.mxu0 0.0
      %847 = vmatpush1.msra.mxu0 0.0
      %848 = vmatprep.subr.mxu0 0.0
      %849 = vmatpush1.msra.mxu0 0.0
      %850 = vmatprep.subr.mxu0 0.0
      %851 = vmatpush1.msra.mxu0 0.0
      %852 = vmatprep.subr.mxu0 0.0
      %853 = vmatpush1.msra.mxu0 0.0
      %854 = vmatprep.subr.mxu0 0.0
      %855 = vmatpush1.msra.mxu0 0.0
      %856 = vmatprep.subr.mxu0 0.0
      %857 = vmatpush1.msra.mxu0 0.0
      %858 = vmatprep.subr.mxu0 0.0
      %859 = vmatpush1.msra.mxu0 0.0
      %860 = vmatprep.subr.mxu0 0.0
      %861 = vmatpush1.msra.mxu0 0.0
      %862 = vmatprep.subr.mxu0 0.0
      %863 = vmatpush1.msra.mxu0 0.0
      %864 = vmatprep.subr.mxu0 0.0
      %865 = vmatpush1.msra.mxu0 0.0
      %866 = vmatprep.subr.mxu0 0.0
      %867 = vmatpush1.msra.mxu0 0.0
      %868 = vmatprep.subr.mxu0 0.0
      %869 = vmatpush1.msra.mxu0 0.0
      %870 = vmatprep.subr.mxu0 0.0
      %871 = vmatpush1.msra.mxu0 0.0
      %872 = vmatprep.subr.mxu0 0.0
      %873 = vmatpush1.msra.mxu0 0.0
      %874 = vmatprep.subr.mxu0 0.0
      %875 = vmatpush1.msra.mxu0 0.0
      %876 = vmatprep.subr.mxu0 0.0
      %877 = vmatpush1.msra.mxu0 0.0
      %878 = vmatprep.subr.mxu0 0.0
      %879 = vmatpush1.msra.mxu0 0.0
      %880 = vmatprep.subr.mxu0 0.0
      %881 = vmatpush1.msra.mxu0 0.0
      %882 = vmatprep.subr.mxu0 0.0
      %883 = vmatpush1.msra.mxu0 0.0
      %884 = vmatprep.mubr.f32.mxu0 0.0
      %885 = vmatmul.mubr.f32.gmra.mrb[0].mxu0 %v794
      %v886 = vpop.f32.mrb[0].mxu0
      %v887 = vadd.f32 0.0, %v886
      %v888 = vpop.f32.mrb[0].mxu0
      %889 = vmatprep.mubr.f32.mxu0 0.0
      %890 = vmatmul.mubr.f32.gmra.mrb[0].mxu0 %v797
      %v891 = vpop.f32.mrb[0].mxu0
      %v892 = vadd.f32 0.0, %v891
      %v893 = vpop.f32.mrb[0].mxu0
      %894 = vmatprep.mubr.f32.mxu0 0.0
      %895 = vmatmul.mubr.f32.gmra.mrb[0].mxu0 %v800
      %v896 = vpop.f32.mrb[0].mxu0
      %v897 = vadd.f32 0.0, %v896
      %v898 = vpop.f32.mrb[0].mxu0
      %899 = vmatprep.mubr.f32.mxu0 0.0
      %900 = vmatmul.mubr.f32.gmra.mrb[0].mxu0 %v803
      %v901 = vpop.f32.mrb[0].mxu0
      %v902 = vadd.f32 0.0, %v901
      %v903 = vpop.f32.mrb[0].mxu0
      %904 = vmatprep.mubr.f32.mxu0 0.0
      %905 = vmatmul.mubr.f32.gmra.mrb[0].mxu0 %v806
      %v906 = vpop.f32.mrb[0].mxu0
      %v907 = vadd.f32 0.0, %v906
      %v908 = vpop.f32.mrb[0].mxu0
      %909 = vmatprep.mubr.f32.mxu0 0.0
      %910 = vmatmul.mubr.f32.gmra.mrb[0].mxu0 %v809
      %v911 = vpop.f32.mrb[0].mxu0
      %v912 = vadd.f32 0.0, %v911
      %v913 = vpop.f32.mrb[0].mxu0
      %914 = vmatprep.mubr.f32.mxu0 0.0
      %915 = vmatmul.mubr.f32.gmra.mrb[0].mxu0 %v812
      %v916 = vpop.f32.mrb[0].mxu0
      %v917 = vadd.f32 0.0, %v916
      %v918 = vpop.f32.mrb[0].mxu0
      %919 = vmatprep.mubr.f32.mxu0 0.0
      %920 = vmatmul.mubr.f32.gmra.mrb[0].mxu0 %v815
      %v921 = vpop.f32.mrb[0].mxu0
      %v922 = vadd.f32 0.0, %v921
      %v923 = vpop.f32.mrb[0].mxu0
      %924 = vdwg.mxu0
      %v925 = vadd.f32 %v775, %v887
      %v926 = vadd.f32 %v776, %v892
      %v927 = vadd.f32 %v777, %v897
      %v928 = vadd.f32 %v778, %v902
      %v929 = vadd.f32 %v779, %v907
      %v930 = vadd.f32 %v780, %v912
      %v931 = vadd.f32 %v781, %v917
      %v932 = vadd.f32 %v782, %v922
      %v933 = vld [vmem:[%s317 + $0x1] sm:$0xff]
      %v934 = vld [vmem:[%s317 + $0x11] sm:$0xff]
      %v935 = vld [vmem:[%s317 + $0x21] sm:$0xff]
      %v936 = vld [vmem:[%s317 + $0x31] sm:$0xff]
      %v937 = vld [vmem:[%s317 + $0x41] sm:$0xff]
      %v938 = vld [vmem:[%s317 + $0x51] sm:$0xff]
      %v939 = vld [vmem:[%s317 + $0x61] sm:$0xff]
      %v940 = vld [vmem:[%s317 + $0x71] sm:$0xff]
      %s941 = scalar_lea.vmem %s1, 16
      %v942 = vld [vmem:[%s941] sm:$0xf]
      %v944 = vsel %vm295, %v933, 0
      %v947 = vsel %vm295, %v934, 0
      %v950 = vsel %vm295, %v935, 0
      %v953 = vsel %vm295, %v936, 0
      %v956 = vsel %vm295, %v937, 0
      %v959 = vsel %vm295, %v938, 0
      %v962 = vsel %vm295, %v939, 0
      %v965 = vsel %vm295, %v940, 0
      %v968 = vsel %vm366, %v942, 0
      %970 = vmatprep.subr.mxu0 0.0
      %971 = vmatpush1.msra.mxu0 %v968
      %972 = vmatprep.subr.mxu0 0.0
      %973 = vmatpush1.msra.mxu0 0.0
      %974 = vmatprep.subr.mxu0 0.0
      %975 = vmatpush1.msra.mxu0 0.0
      %976 = vmatprep.subr.mxu0 0.0
      %977 = vmatpush1.msra.mxu0 0.0
      %978 = vmatprep.subr.mxu0 0.0
      %979 = vmatpush1.msra.mxu0 0.0
      %980 = vmatprep.subr.mxu0 0.0
      %981 = vmatpush1.msra.mxu0 0.0
      %982 = vmatprep.subr.mxu0 0.0
      %983 = vmatpush1.msra.mxu0 0.0
      %984 = vmatprep.subr.mxu0 0.0
      %985 = vmatpush1.msra.mxu0 0.0
      %986 = vmatprep.subr.mxu0 0.0
      %987 = vmatpush1.msra.mxu0 0.0
      %988 = vmatprep.subr.mxu0 0.0
      %989 = vmatpush1.msra.mxu0 0.0
      %990 = vmatprep.subr.mxu0 0.0
      %991 = vmatpush1.msra.mxu0 0.0
      %992 = vmatprep.subr.mxu0 0.0
      %993 = vmatpush1.msra.mxu0 0.0
      %994 = vmatprep.subr.mxu0 0.0
      %995 = vmatpush1.msra.mxu0 0.0
      %996 = vmatprep.subr.mxu0 0.0
      %997 = vmatpush1.msra.mxu0 0.0
      %998 = vmatprep.subr.mxu0 0.0
      %999 = vmatpush1.msra.mxu0 0.0
      %1000 = vmatprep.subr.mxu0 0.0
      %1001 = vmatpush1.msra.mxu0 0.0
      %1002 = vmatprep.subr.mxu0 0.0
      %1003 = vmatpush1.msra.mxu0 0.0
      %1004 = vmatprep.subr.mxu0 0.0
      %1005 = vmatpush1.msra.mxu0 0.0
      %1006 = vmatprep.subr.mxu0 0.0
      %1007 = vmatpush1.msra.mxu0 0.0
      %1008 = vmatprep.subr.mxu0 0.0
      %1009 = vmatpush1.msra.mxu0 0.0
      %1010 = vmatprep.subr.mxu0 0.0
      %1011 = vmatpush1.msra.mxu0 0.0
      %1012 = vmatprep.subr.mxu0 0.0
      %1013 = vmatpush1.msra.mxu0 0.0
      %1014 = vmatprep.subr.mxu0 0.0
      %1015 = vmatpush1.msra.mxu0 0.0
      %1016 = vmatprep.subr.mxu0 0.0
      %1017 = vmatpush1.msra.mxu0 0.0
      %1018 = vmatprep.subr.mxu0 0.0
      %1019 = vmatpush1.msra.mxu0 0.0
      %1020 = vmatprep.subr.mxu0 0.0
      %1021 = vmatpush1.msra.mxu0 0.0
      %1022 = vmatprep.subr.mxu0 0.0
      %1023 = vmatpush1.msra.mxu0 0.0
      %1024 = vmatprep.subr.mxu0 0.0
      %1025 = vmatpush1.msra.mxu0 0.0
      %1026 = vmatprep.subr.mxu0 0.0
      %1027 = vmatpush1.msra.mxu0 0.0
      %1028 = vmatprep.subr.mxu0 0.0
      %1029 = vmatpush1.msra.mxu0 0.0
      %1030 = vmatprep.subr.mxu0 0.0
      %1031 = vmatpush1.msra.mxu0 0.0
      %1032 = vmatprep.subr.mxu0 0.0
      %1033 = vmatpush1.msra.mxu0 0.0
      %1034 = vmatprep.mubr.f32.mxu0 0.0
      %1035 = vmatmul.mubr.f32.gmra.mrb[0].mxu0 %v944
      %v1036 = vpop.f32.mrb[0].mxu0
      %v1037 = vadd.f32 0.0, %v1036
      %v1038 = vpop.f32.mrb[0].mxu0
      %1039 = vmatprep.mubr.f32.mxu0 0.0
      %1040 = vmatmul.mubr.f32.gmra.mrb[0].mxu0 %v947
      %v1041 = vpop.f32.mrb[0].mxu0
      %v1042 = vadd.f32 0.0, %v1041
      %v1043 = vpop.f32.mrb[0].mxu0
      %1044 = vmatprep.mubr.f32.mxu0 0.0
      %1045 = vmatmul.mubr.f32.gmra.mrb[0].mxu0 %v950
      %v1046 = vpop.f32.mrb[0].mxu0
      %v1047 = vadd.f32 0.0, %v1046
      %v1048 = vpop.f32.mrb[0].mxu0
      %1049 = vmatprep.mubr.f32.mxu0 0.0
      %1050 = vmatmul.mubr.f32.gmra.mrb[0].mxu0 %v953
      %v1051 = vpop.f32.mrb[0].mxu0
      %v1052 = vadd.f32 0.0, %v1051
      %v1053 = vpop.f32.mrb[0].mxu0
      %1054 = vmatprep.mubr.f32.mxu0 0.0
      %1055 = vmatmul.mubr.f32.gmra.mrb[0].mxu0 %v956
      %v1056 = vpop.f32.mrb[0].mxu0
      %v1057 = vadd.f32 0.0, %v1056
      %v1058 = vpop.f32.mrb[0].mxu0
      %1059 = vmatprep.mubr.f32.mxu0 0.0
      %1060 = vmatmul.mubr.f32.gmra.mrb[0].mxu0 %v959
      %v1061 = vpop.f32.mrb[0].mxu0
      %v1062 = vadd.f32 0.0, %v1061
      %v1063 = vpop.f32.mrb[0].mxu0
      %1064 = vmatprep.mubr.f32.mxu0 0.0
      %1065 = vmatmul.mubr.f32.gmra.mrb[0].mxu0 %v962
      %v1066 = vpop.f32.mrb[0].mxu0
      %v1067 = vadd.f32 0.0, %v1066
      %v1068 = vpop.f32.mrb[0].mxu0
      %1069 = vmatprep.mubr.f32.mxu0 0.0
      %1070 = vmatmul.mubr.f32.gmra.mrb[0].mxu0 %v965
      %v1071 = vpop.f32.mrb[0].mxu0
      %v1072 = vadd.f32 0.0, %v1071
      %v1073 = vpop.f32.mrb[0].mxu0
      %1074 = vdwg.mxu0
      %v1075 = vadd.f32 %v925, %v1037
      %v1076 = vadd.f32 %v926, %v1042
      %v1077 = vadd.f32 %v927, %v1047
      %v1078 = vadd.f32 %v928, %v1052
      %v1079 = vadd.f32 %v929, %v1057
      %v1080 = vadd.f32 %v930, %v1062
      %v1081 = vadd.f32 %v931, %v1067
      %v1082 = vadd.f32 %v932, %v1072
      %v1083 = vld [vmem:[%s317 + $0x2] sm:$0xff]
      %v1084 = vld [vmem:[%s317 + $0x12] sm:$0xff]
      %v1085 = vld [vmem:[%s317 + $0x22] sm:$0xff]
      %v1086 = vld [vmem:[%s317 + $0x32] sm:$0xff]
      %v1087 = vld [vmem:[%s317 + $0x42] sm:$0xff]
      %v1088 = vld [vmem:[%s317 + $0x52] sm:$0xff]
      %v1089 = vld [vmem:[%s317 + $0x62] sm:$0xff]
      %v1090 = vld [vmem:[%s317 + $0x72] sm:$0xff]
      %s1091 = scalar_lea.vmem %s1, 20
      %v1092 = vld [vmem:[%s1091] sm:$0xf]
      %v1094 = vsel %vm295, %v1083, 0
      %v1097 = vsel %vm295, %v1084, 0
      %v1100 = vsel %vm295, %v1085, 0
      %v1103 = vsel %vm295, %v1086, 0
      %v1106 = vsel %vm295, %v1087, 0
      %v1109 = vsel %vm295, %v1088, 0
      %v1112 = vsel %vm295, %v1089, 0
      %v1115 = vsel %vm295, %v1090, 0
      %v1118 = vsel %vm366, %v1092, 0
      %1120 = vmatprep.subr.mxu0 0.0
      %1121 = vmatpush1.msra.mxu0 %v1118
      %1122 = vmatprep.subr.mxu0 0.0
      %1123 = vmatpush1.msra.mxu0 0.0
      %1124 = vmatprep.subr.mxu0 0.0
      %1125 = vmatpush1.msra.mxu0 0.0
      %1126 = vmatprep.subr.mxu0 0.0
      %1127 = vmatpush1.msra.mxu0 0.0
      %1128 = vmatprep.subr.mxu0 0.0
      %1129 = vmatpush1.msra.mxu0 0.0
      %1130 = vmatprep.subr.mxu0 0.0
      %1131 = vmatpush1.msra.mxu0 0.0
      %1132 = vmatprep.subr.mxu0 0.0
      %1133 = vmatpush1.msra.mxu0 0.0
      %1134 = vmatprep.subr.mxu0 0.0
      %1135 = vmatpush1.msra.mxu0 0.0
      %1136 = vmatprep.subr.mxu0 0.0
      %1137 = vmatpush1.msra.mxu0 0.0
      %1138 = vmatprep.subr.mxu0 0.0
      %1139 = vmatpush1.msra.mxu0 0.0
      %1140 = vmatprep.subr.mxu0 0.0
      %1141 = vmatpush1.msra.mxu0 0.0
      %1142 = vmatprep.subr.mxu0 0.0
      %1143 = vmatpush1.msra.mxu0 0.0
      %1144 = vmatprep.subr.mxu0 0.0
      %1145 = vmatpush1.msra.mxu0 0.0
      %1146 = vmatprep.subr.mxu0 0.0
      %1147 = vmatpush1.msra.mxu0 0.0
      %1148 = vmatprep.subr.mxu0 0.0
      %1149 = vmatpush1.msra.mxu0 0.0
      %1150 = vmatprep.subr.mxu0 0.0
      %1151 = vmatpush1.msra.mxu0 0.0
      %1152 = vmatprep.subr.mxu0 0.0
      %1153 = vmatpush1.msra.mxu0 0.0
      %1154 = vmatprep.subr.mxu0 0.0
      %1155 = vmatpush1.msra.mxu0 0.0
      %1156 = vmatprep.subr.mxu0 0.0
      %1157 = vmatpush1.msra.mxu0 0.0
      %1158 = vmatprep.subr.mxu0 0.0
      %1159 = vmatpush1.msra.mxu0 0.0
      %1160 = vmatprep.subr.mxu0 0.0
      %1161 = vmatpush1.msra.mxu0 0.0
      %1162 = vmatprep.subr.mxu0 0.0
      %1163 = vmatpush1.msra.mxu0 0.0
      %1164 = vmatprep.subr.mxu0 0.0
      %1165 = vmatpush1.msra.mxu0 0.0
      %1166 = vmatprep.subr.mxu0 0.0
      %1167 = vmatpush1.msra.mxu0 0.0
      %1168 = vmatprep.subr.mxu0 0.0
      %1169 = vmatpush1.msra.mxu0 0.0
      %1170 = vmatprep.subr.mxu0 0.0
      %1171 = vmatpush1.msra.mxu0 0.0
      %1172 = vmatprep.subr.mxu0 0.0
      %1173 = vmatpush1.msra.mxu0 0.0
      %1174 = vmatprep.subr.mxu0 0.0
      %1175 = vmatpush1.msra.mxu0 0.0
      %1176 = vmatprep.subr.mxu0 0.0
      %1177 = vmatpush1.msra.mxu0 0.0
      %1178 = vmatprep.subr.mxu0 0.0
      %1179 = vmatpush1.msra.mxu0 0.0
      %1180 = vmatprep.subr.mxu0 0.0
      %1181 = vmatpush1.msra.mxu0 0.0
      %1182 = vmatprep.subr.mxu0 0.0
      %1183 = vmatpush1.msra.mxu0 0.0
      %1184 = vmatprep.mubr.f32.mxu0 0.0
      %1185 = vmatmul.mubr.f32.gmra.mrb[0].mxu0 %v1094
      %v1186 = vpop.f32.mrb[0].mxu0
      %v1187 = vadd.f32 0.0, %v1186
      %v1188 = vpop.f32.mrb[0].mxu0
      %1189 = vmatprep.mubr.f32.mxu0 0.0
      %1190 = vmatmul.mubr.f32.gmra.mrb[0].mxu0 %v1097
      %v1191 = vpop.f32.mrb[0].mxu0
      %v1192 = vadd.f32 0.0, %v1191
      %v1193 = vpop.f32.mrb[0].mxu0
      %1194 = vmatprep.mubr.f32.mxu0 0.0
      %1195 = vmatmul.mubr.f32.gmra.mrb[0].mxu0 %v1100
      %v1196 = vpop.f32.mrb[0].mxu0
      %v1197 = vadd.f32 0.0, %v1196
      %v1198 = vpop.f32.mrb[0].mxu0
      %1199 = vmatprep.mubr.f32.mxu0 0.0
      %1200 = vmatmul.mubr.f32.gmra.mrb[0].mxu0 %v1103
      %v1201 = vpop.f32.mrb[0].mxu0
      %v1202 = vadd.f32 0.0, %v1201
      %v1203 = vpop.f32.mrb[0].mxu0
      %1204 = vmatprep.mubr.f32.mxu0 0.0
      %1205 = vmatmul.mubr.f32.gmra.mrb[0].mxu0 %v1106
      %v1206 = vpop.f32.mrb[0].mxu0
      %v1207 = vadd.f32 0.0, %v1206
      %v1208 = vpop.f32.mrb[0].mxu0
      %1209 = vmatprep.mubr.f32.mxu0 0.0
      %1210 = vmatmul.mubr.f32.gmra.mrb[0].mxu0 %v1109
      %v1211 = vpop.f32.mrb[0].mxu0
      %v1212 = vadd.f32 0.0, %v1211
      %v1213 = vpop.f32.mrb[0].mxu0
      %1214 = vmatprep.mubr.f32.mxu0 0.0
      %1215 = vmatmul.mubr.f32.gmra.mrb[0].mxu0 %v1112
      %v1216 = vpop.f32.mrb[0].mxu0
      %v1217 = vadd.f32 0.0, %v1216
      %v1218 = vpop.f32.mrb[0].mxu0
      %1219 = vmatprep.mubr.f32.mxu0 0.0
      %1220 = vmatmul.mubr.f32.gmra.mrb[0].mxu0 %v1115
      %v1221 = vpop.f32.mrb[0].mxu0
      %v1222 = vadd.f32 0.0, %v1221
      %v1223 = vpop.f32.mrb[0].mxu0
      %1224 = vdwg.mxu0
      %v1225 = vadd.f32 %v1075, %v1187
      %v1226 = vadd.f32 %v1076, %v1192
      %v1227 = vadd.f32 %v1077, %v1197
      %v1228 = vadd.f32 %v1078, %v1202
      %v1229 = vadd.f32 %v1079, %v1207
      %v1230 = vadd.f32 %v1080, %v1212
      %v1231 = vadd.f32 %v1081, %v1217
      %v1232 = vadd.f32 %v1082, %v1222
      %s1233 = scalar_lea.vmem [#allocation2], 32
      %v1234 = vld [vmem:[%s1233] sm:$0xff]
      %v1235 = vld [vmem:[%s1233 + $0x10] sm:$0xff]
      %v1236 = vld [vmem:[%s1233 + $0x20] sm:$0xff]
      %v1237 = vld [vmem:[%s1233 + $0x30] sm:$0xff]
      %v1238 = vld [vmem:[%s1233 + $0x40] sm:$0xff]
      %v1239 = vld [vmem:[%s1233 + $0x50] sm:$0xff]
      %v1240 = vld [vmem:[%s1233 + $0x60] sm:$0xff]
      %v1241 = vld [vmem:[%s1233 + $0x70] sm:$0xff]
      %s1242 = scalar_lea.vmem %s1, 24
      %v1243 = vld [vmem:[%s1242] sm:$0xf]
      %v1245 = vsel %vm295, %v1234, 0
      %v1248 = vsel %vm295, %v1235, 0
      %v1251 = vsel %vm295, %v1236, 0
      %v1254 = vsel %vm295, %v1237, 0
      %v1257 = vsel %vm295, %v1238, 0
      %v1260 = vsel %vm295, %v1239, 0
      %v1263 = vsel %vm295, %v1240, 0
      %v1266 = vsel %vm295, %v1241, 0
      %v1269 = vsel %vm366, %v1243, 0
      %1271 = vmatprep.subr.mxu0 0.0
      %1272 = vmatpush1.msra.mxu0 %v1269
      %1273 = vmatprep.subr.mxu0 0.0
      %1274 = vmatpush1.msra.mxu0 0.0
      %1275 = vmatprep.subr.mxu0 0.0
      %1276 = vmatpush1.msra.mxu0 0.0
      %1277 = vmatprep.subr.mxu0 0.0
      %1278 = vmatpush1.msra.mxu0 0.0
      %1279 = vmatprep.subr.mxu0 0.0
      %1280 = vmatpush1.msra.mxu0 0.0
      %1281 = vmatprep.subr.mxu0 0.0
      %1282 = vmatpush1.msra.mxu0 0.0
      %1283 = vmatprep.subr.mxu0 0.0
      %1284 = vmatpush1.msra.mxu0 0.0
      %1285 = vmatprep.subr.mxu0 0.0
      %1286 = vmatpush1.msra.mxu0 0.0
      %1287 = vmatprep.subr.mxu0 0.0
      %1288 = vmatpush1.msra.mxu0 0.0
      %1289 = vmatprep.subr.mxu0 0.0
      %1290 = vmatpush1.msra.mxu0 0.0
      %1291 = vmatprep.subr.mxu0 0.0
      %1292 = vmatpush1.msra.mxu0 0.0
      %1293 = vmatprep.subr.mxu0 0.0
      %1294 = vmatpush1.msra.mxu0 0.0
      %1295 = vmatprep.subr.mxu0 0.0
      %1296 = vmatpush1.msra.mxu0 0.0
      %1297 = vmatprep.subr.mxu0 0.0
      %1298 = vmatpush1.msra.mxu0 0.0
      %1299 = vmatprep.subr.mxu0 0.0
      %1300 = vmatpush1.msra.mxu0 0.0
      %1301 = vmatprep.subr.mxu0 0.0
      %1302 = vmatpush1.msra.mxu0 0.0
      %1303 = vmatprep.subr.mxu0 0.0
      %1304 = vmatpush1.msra.mxu0 0.0
      %1305 = vmatprep.subr.mxu0 0.0
      %1306 = vmatpush1.msra.mxu0 0.0
      %1307 = vmatprep.subr.mxu0 0.0
      %1308 = vmatpush1.msra.mxu0 0.0
      %1309 = vmatprep.subr.mxu0 0.0
      %1310 = vmatpush1.msra.mxu0 0.0
      %1311 = vmatprep.subr.mxu0 0.0
      %1312 = vmatpush1.msra.mxu0 0.0
      %1313 = vmatprep.subr.mxu0 0.0
      %1314 = vmatpush1.msra.mxu0 0.0
      %1315 = vmatprep.subr.mxu0 0.0
      %1316 = vmatpush1.msra.mxu0 0.0
      %1317 = vmatprep.subr.mxu0 0.0
      %1318 = vmatpush1.msra.mxu0 0.0
      %1319 = vmatprep.subr.mxu0 0.0
      %1320 = vmatpush1.msra.mxu0 0.0
      %1321 = vmatprep.subr.mxu0 0.0
      %1322 = vmatpush1.msra.mxu0 0.0
      %1323 = vmatprep.subr.mxu0 0.0
      %1324 = vmatpush1.msra.mxu0 0.0
      %1325 = vmatprep.subr.mxu0 0.0
      %1326 = vmatpush1.msra.mxu0 0.0
      %1327 = vmatprep.subr.mxu0 0.0
      %1328 = vmatpush1.msra.mxu0 0.0
      %1329 = vmatprep.subr.mxu0 0.0
      %1330 = vmatpush1.msra.mxu0 0.0
      %1331 = vmatprep.subr.mxu0 0.0
      %1332 = vmatpush1.msra.mxu0 0.0
      %1333 = vmatprep.subr.mxu0 0.0
      %1334 = vmatpush1.msra.mxu0 0.0
      %1335 = vmatprep.mubr.f32.mxu0 0.0
      %1336 = vmatmul.mubr.f32.gmra.mrb[0].mxu0 %v1245
      %v1337 = vpop.f32.mrb[0].mxu0
      %v1338 = vadd.f32 0.0, %v1337
      %v1339 = vpop.f32.mrb[0].mxu0
      %1340 = vmatprep.mubr.f32.mxu0 0.0
      %1341 = vmatmul.mubr.f32.gmra.mrb[0].mxu0 %v1248
      %v1342 = vpop.f32.mrb[0].mxu0
      %v1343 = vadd.f32 0.0, %v1342
      %v1344 = vpop.f32.mrb[0].mxu0
      %1345 = vmatprep.mubr.f32.mxu0 0.0
      %1346 = vmatmul.mubr.f32.gmra.mrb[0].mxu0 %v1251
      %v1347 = vpop.f32.mrb[0].mxu0
      %v1348 = vadd.f32 0.0, %v1347
      %v1349 = vpop.f32.mrb[0].mxu0
      %1350 = vmatprep.mubr.f32.mxu0 0.0
      %1351 = vmatmul.mubr.f32.gmra.mrb[0].mxu0 %v1254
      %v1352 = vpop.f32.mrb[0].mxu0
      %v1353 = vadd.f32 0.0, %v1352
      %v1354 = vpop.f32.mrb[0].mxu0
      %1355 = vmatprep.mubr.f32.mxu0 0.0
      %1356 = vmatmul.mubr.f32.gmra.mrb[0].mxu0 %v1257
      %v1357 = vpop.f32.mrb[0].mxu0
      %v1358 = vadd.f32 0.0, %v1357
      %v1359 = vpop.f32.mrb[0].mxu0
      %1360 = vmatprep.mubr.f32.mxu0 0.0
      %1361 = vmatmul.mubr.f32.gmra.mrb[0].mxu0 %v1260
      %v1362 = vpop.f32.mrb[0].mxu0
      %v1363 = vadd.f32 0.0, %v1362
      %v1364 = vpop.f32.mrb[0].mxu0
      %1365 = vmatprep.mubr.f32.mxu0 0.0
      %1366 = vmatmul.mubr.f32.gmra.mrb[0].mxu0 %v1263
      %v1367 = vpop.f32.mrb[0].mxu0
      %v1368 = vadd.f32 0.0, %v1367
      %v1369 = vpop.f32.mrb[0].mxu0
      %1370 = vmatprep.mubr.f32.mxu0 0.0
      %1371 = vmatmul.mubr.f32.gmra.mrb[0].mxu0 %v1266
      %v1372 = vpop.f32.mrb[0].mxu0
      %v1373 = vadd.f32 0.0, %v1372
      %v1374 = vpop.f32.mrb[0].mxu0
      %1375 = vdwg.mxu0
      %v1376 = vadd.f32 %v1225, %v1338
      %v1377 = vadd.f32 %v1226, %v1343
      %v1378 = vadd.f32 %v1227, %v1348
      %v1379 = vadd.f32 %v1228, %v1353
      %v1380 = vadd.f32 %v1229, %v1358
      %v1381 = vadd.f32 %v1230, %v1363
      %v1382 = vadd.f32 %v1231, %v1368
      %v1383 = vadd.f32 %v1232, %v1373
      %v1384 = vld [vmem:[%s1233 + $0x1] sm:$0xff]
      %v1385 = vld [vmem:[%s1233 + $0x11] sm:$0xff]
      %v1386 = vld [vmem:[%s1233 + $0x21] sm:$0xff]
      %v1387 = vld [vmem:[%s1233 + $0x31] sm:$0xff]
      %v1388 = vld [vmem:[%s1233 + $0x41] sm:$0xff]
      %v1389 = vld [vmem:[%s1233 + $0x51] sm:$0xff]
      %v1390 = vld [vmem:[%s1233 + $0x61] sm:$0xff]
      %v1391 = vld [vmem:[%s1233 + $0x71] sm:$0xff]
      %s1392 = scalar_lea.vmem %s1, 28
      %v1393 = vld [vmem:[%s1392] sm:$0xf]
      %v1395 = vsel %vm295, %v1384, 0
      %v1398 = vsel %vm295, %v1385, 0
      %v1401 = vsel %vm295, %v1386, 0
      %v1404 = vsel %vm295, %v1387, 0
      %v1407 = vsel %vm295, %v1388, 0
      %v1410 = vsel %vm295, %v1389, 0
      %v1413 = vsel %vm295, %v1390, 0
      %v1416 = vsel %vm295, %v1391, 0
      %v1419 = vsel %vm366, %v1393, 0
      %1421 = vmatprep.subr.mxu0 0.0
      %1422 = vmatpush1.msra.mxu0 %v1419
      %1423 = vmatprep.subr.mxu0 0.0
      %1424 = vmatpush1.msra.mxu0 0.0
      %1425 = vmatprep.subr.mxu0 0.0
      %1426 = vmatpush1.msra.mxu0 0.0
      %1427 = vmatprep.subr.mxu0 0.0
      %1428 = vmatpush1.msra.mxu0 0.0
      %1429 = vmatprep.subr.mxu0 0.0
      %1430 = vmatpush1.msra.mxu0 0.0
      %1431 = vmatprep.subr.mxu0 0.0
      %1432 = vmatpush1.msra.mxu0 0.0
      %1433 = vmatprep.subr.mxu0 0.0
      %1434 = vmatpush1.msra.mxu0 0.0
      %1435 = vmatprep.subr.mxu0 0.0
      %1436 = vmatpush1.msra.mxu0 0.0
      %1437 = vmatprep.subr.mxu0 0.0
      %1438 = vmatpush1.msra.mxu0 0.0
      %1439 = vmatprep.subr.mxu0 0.0
      %1440 = vmatpush1.msra.mxu0 0.0
      %1441 = vmatprep.subr.mxu0 0.0
      %1442 = vmatpush1.msra.mxu0 0.0
      %1443 = vmatprep.subr.mxu0 0.0
      %1444 = vmatpush1.msra.mxu0 0.0
      %1445 = vmatprep.subr.mxu0 0.0
      %1446 = vmatpush1.msra.mxu0 0.0
      %1447 = vmatprep.subr.mxu0 0.0
      %1448 = vmatpush1.msra.mxu0 0.0
      %1449 = vmatprep.subr.mxu0 0.0
      %1450 = vmatpush1.msra.mxu0 0.0
      %1451 = vmatprep.subr.mxu0 0.0
      %1452 = vmatpush1.msra.mxu0 0.0
      %1453 = vmatprep.subr.mxu0 0.0
      %1454 = vmatpush1.msra.mxu0 0.0
      %1455 = vmatprep.subr.mxu0 0.0
      %1456 = vmatpush1.msra.mxu0 0.0
      %1457 = vmatprep.subr.mxu0 0.0
      %1458 = vmatpush1.msra.mxu0 0.0
      %1459 = vmatprep.subr.mxu0 0.0
      %1460 = vmatpush1.msra.mxu0 0.0
      %1461 = vmatprep.subr.mxu0 0.0
      %1462 = vmatpush1.msra.mxu0 0.0
      %1463 = vmatprep.subr.mxu0 0.0
      %1464 = vmatpush1.msra.mxu0 0.0
      %1465 = vmatprep.subr.mxu0 0.0
      %1466 = vmatpush1.msra.mxu0 0.0
      %1467 = vmatprep.subr.mxu0 0.0
      %1468 = vmatpush1.msra.mxu0 0.0
      %1469 = vmatprep.subr.mxu0 0.0
      %1470 = vmatpush1.msra.mxu0 0.0
      %1471 = vmatprep.subr.mxu0 0.0
      %1472 = vmatpush1.msra.mxu0 0.0
      %1473 = vmatprep.subr.mxu0 0.0
      %1474 = vmatpush1.msra.mxu0 0.0
      %1475 = vmatprep.subr.mxu0 0.0
      %1476 = vmatpush1.msra.mxu0 0.0
      %1477 = vmatprep.subr.mxu0 0.0
      %1478 = vmatpush1.msra.mxu0 0.0
      %1479 = vmatprep.subr.mxu0 0.0
      %1480 = vmatpush1.msra.mxu0 0.0
      %1481 = vmatprep.subr.mxu0 0.0
      %1482 = vmatpush1.msra.mxu0 0.0
      %1483 = vmatprep.subr.mxu0 0.0
      %1484 = vmatpush1.msra.mxu0 0.0
      %1485 = vmatprep.mubr.f32.mxu0 0.0
      %1486 = vmatmul.mubr.f32.gmra.mrb[0].mxu0 %v1395
      %v1487 = vpop.f32.mrb[0].mxu0
      %v1488 = vadd.f32 0.0, %v1487
      %v1489 = vpop.f32.mrb[0].mxu0
      %1490 = vmatprep.mubr.f32.mxu0 0.0
      %1491 = vmatmul.mubr.f32.gmra.mrb[0].mxu0 %v1398
      %v1492 = vpop.f32.mrb[0].mxu0
      %v1493 = vadd.f32 0.0, %v1492
      %v1494 = vpop.f32.mrb[0].mxu0
      %1495 = vmatprep.mubr.f32.mxu0 0.0
      %1496 = vmatmul.mubr.f32.gmra.mrb[0].mxu0 %v1401
      %v1497 = vpop.f32.mrb[0].mxu0
      %v1498 = vadd.f32 0.0, %v1497
      %v1499 = vpop.f32.mrb[0].mxu0
      %1500 = vmatprep.mubr.f32.mxu0 0.0
      %1501 = vmatmul.mubr.f32.gmra.mrb[0].mxu0 %v1404
      %v1502 = vpop.f32.mrb[0].mxu0
      %v1503 = vadd.f32 0.0, %v1502
      %v1504 = vpop.f32.mrb[0].mxu0
      %1505 = vmatprep.mubr.f32.mxu0 0.0
      %1506 = vmatmul.mubr.f32.gmra.mrb[0].mxu0 %v1407
      %v1507 = vpop.f32.mrb[0].mxu0
      %v1508 = vadd.f32 0.0, %v1507
      %v1509 = vpop.f32.mrb[0].mxu0
      %1510 = vmatprep.mubr.f32.mxu0 0.0
      %1511 = vmatmul.mubr.f32.gmra.mrb[0].mxu0 %v1410
      %v1512 = vpop.f32.mrb[0].mxu0
      %v1513 = vadd.f32 0.0, %v1512
      %v1514 = vpop.f32.mrb[0].mxu0
      %1515 = vmatprep.mubr.f32.mxu0 0.0
      %1516 = vmatmul.mubr.f32.gmra.mrb[0].mxu0 %v1413
      %v1517 = vpop.f32.mrb[0].mxu0
      %v1518 = vadd.f32 0.0, %v1517
      %v1519 = vpop.f32.mrb[0].mxu0
      %1520 = vmatprep.mubr.f32.mxu0 0.0
      %1521 = vmatmul.mubr.f32.gmra.mrb[0].mxu0 %v1416
      %v1522 = vpop.f32.mrb[0].mxu0
      %v1523 = vadd.f32 0.0, %v1522
      %v1524 = vpop.f32.mrb[0].mxu0
      %1525 = vdwg.mxu0
      %v1526 = vadd.f32 %v1376, %v1488
      %v1527 = vadd.f32 %v1377, %v1493
      %v1528 = vadd.f32 %v1378, %v1498
      %v1529 = vadd.f32 %v1379, %v1503
      %v1530 = vadd.f32 %v1380, %v1508
      %v1531 = vadd.f32 %v1381, %v1513
      %v1532 = vadd.f32 %v1382, %v1518
      %v1533 = vadd.f32 %v1383, %v1523
      %v1534 = vld [vmem:[%s1233 + $0x2] sm:$0xff]
      %v1535 = vld [vmem:[%s1233 + $0x12] sm:$0xff]
      %v1536 = vld [vmem:[%s1233 + $0x22] sm:$0xff]
      %v1537 = vld [vmem:[%s1233 + $0x32] sm:$0xff]
      %v1538 = vld [vmem:[%s1233 + $0x42] sm:$0xff]
      %v1539 = vld [vmem:[%s1233 + $0x52] sm:$0xff]
      %v1540 = vld [vmem:[%s1233 + $0x62] sm:$0xff]
      %v1541 = vld [vmem:[%s1233 + $0x72] sm:$0xff]
      %s1542 = scalar_lea.vmem %s1, 32
      %v1543 = vld [vmem:[%s1542] sm:$0xf]
      %v1545 = vsel %vm295, %v1534, 0
      %v1548 = vsel %vm295, %v1535, 0
      %v1551 = vsel %vm295, %v1536, 0
      %v1554 = vsel %vm295, %v1537, 0
      %v1557 = vsel %vm295, %v1538, 0
      %v1560 = vsel %vm295, %v1539, 0
      %v1563 = vsel %vm295, %v1540, 0
      %v1566 = vsel %vm295, %v1541, 0
      %v1569 = vsel %vm366, %v1543, 0
      %1571 = vmatprep.subr.mxu0 0.0
      %1572 = vmatpush1.msra.mxu0 %v1569
      %1573 = vmatprep.subr.mxu0 0.0
      %1574 = vmatpush1.msra.mxu0 0.0
      %1575 = vmatprep.subr.mxu0 0.0
      %1576 = vmatpush1.msra.mxu0 0.0
      %1577 = vmatprep.subr.mxu0 0.0
      %1578 = vmatpush1.msra.mxu0 0.0
      %1579 = vmatprep.subr.mxu0 0.0
      %1580 = vmatpush1.msra.mxu0 0.0
      %1581 = vmatprep.subr.mxu0 0.0
      %1582 = vmatpush1.msra.mxu0 0.0
      %1583 = vmatprep.subr.mxu0 0.0
      %1584 = vmatpush1.msra.mxu0 0.0
      %1585 = vmatprep.subr.mxu0 0.0
      %1586 = vmatpush1.msra.mxu0 0.0
      %1587 = vmatprep.subr.mxu0 0.0
      %1588 = vmatpush1.msra.mxu0 0.0
      %1589 = vmatprep.subr.mxu0 0.0
      %1590 = vmatpush1.msra.mxu0 0.0
      %1591 = vmatprep.subr.mxu0 0.0
      %1592 = vmatpush1.msra.mxu0 0.0
      %1593 = vmatprep.subr.mxu0 0.0
      %1594 = vmatpush1.msra.mxu0 0.0
      %1595 = vmatprep.subr.mxu0 0.0
      %1596 = vmatpush1.msra.mxu0 0.0
      %1597 = vmatprep.subr.mxu0 0.0
      %1598 = vmatpush1.msra.mxu0 0.0
      %1599 = vmatprep.subr.mxu0 0.0
      %1600 = vmatpush1.msra.mxu0 0.0
      %1601 = vmatprep.subr.mxu0 0.0
      %1602 = vmatpush1.msra.mxu0 0.0
      %1603 = vmatprep.subr.mxu0 0.0
      %1604 = vmatpush1.msra.mxu0 0.0
      %1605 = vmatprep.subr.mxu0 0.0
      %1606 = vmatpush1.msra.mxu0 0.0
      %1607 = vmatprep.subr.mxu0 0.0
      %1608 = vmatpush1.msra.mxu0 0.0
      %1609 = vmatprep.subr.mxu0 0.0
      %1610 = vmatpush1.msra.mxu0 0.0
      %1611 = vmatprep.subr.mxu0 0.0
      %1612 = vmatpush1.msra.mxu0 0.0
      %1613 = vmatprep.subr.mxu0 0.0
      %1614 = vmatpush1.msra.mxu0 0.0
      %1615 = vmatprep.subr.mxu0 0.0
      %1616 = vmatpush1.msra.mxu0 0.0
      %1617 = vmatprep.subr.mxu0 0.0
      %1618 = vmatpush1.msra.mxu0 0.0
      %1619 = vmatprep.subr.mxu0 0.0
      %1620 = vmatpush1.msra.mxu0 0.0
      %1621 = vmatprep.subr.mxu0 0.0
      %1622 = vmatpush1.msra.mxu0 0.0
      %1623 = vmatprep.subr.mxu0 0.0
      %1624 = vmatpush1.msra.mxu0 0.0
      %1625 = vmatprep.subr.mxu0 0.0
      %1626 = vmatpush1.msra.mxu0 0.0
      %1627 = vmatprep.subr.mxu0 0.0
      %1628 = vmatpush1.msra.mxu0 0.0
      %1629 = vmatprep.subr.mxu0 0.0
      %1630 = vmatpush1.msra.mxu0 0.0
      %1631 = vmatprep.subr.mxu0 0.0
      %1632 = vmatpush1.msra.mxu0 0.0
      %1633 = vmatprep.subr.mxu0 0.0
      %1634 = vmatpush1.msra.mxu0 0.0
      %1635 = vmatprep.mubr.f32.mxu0 0.0
      %1636 = vmatmul.mubr.f32.gmra.mrb[0].mxu0 %v1545
      %v1637 = vpop.f32.mrb[0].mxu0
      %v1638 = vadd.f32 0.0, %v1637
      %v1639 = vpop.f32.mrb[0].mxu0
      %1640 = vmatprep.mubr.f32.mxu0 0.0
      %1641 = vmatmul.mubr.f32.gmra.mrb[0].mxu0 %v1548
      %v1642 = vpop.f32.mrb[0].mxu0
      %v1643 = vadd.f32 0.0, %v1642
      %v1644 = vpop.f32.mrb[0].mxu0
      %1645 = vmatprep.mubr.f32.mxu0 0.0
      %1646 = vmatmul.mubr.f32.gmra.mrb[0].mxu0 %v1551
      %v1647 = vpop.f32.mrb[0].mxu0
      %v1648 = vadd.f32 0.0, %v1647
      %v1649 = vpop.f32.mrb[0].mxu0
      %1650 = vmatprep.mubr.f32.mxu0 0.0
      %1651 = vmatmul.mubr.f32.gmra.mrb[0].mxu0 %v1554
      %v1652 = vpop.f32.mrb[0].mxu0
      %v1653 = vadd.f32 0.0, %v1652
      %v1654 = vpop.f32.mrb[0].mxu0
      %1655 = vmatprep.mubr.f32.mxu0 0.0
      %1656 = vmatmul.mubr.f32.gmra.mrb[0].mxu0 %v1557
      %v1657 = vpop.f32.mrb[0].mxu0
      %v1658 = vadd.f32 0.0, %v1657
      %v1659 = vpop.f32.mrb[0].mxu0
      %1660 = vmatprep.mubr.f32.mxu0 0.0
      %1661 = vmatmul.mubr.f32.gmra.mrb[0].mxu0 %v1560
      %v1662 = vpop.f32.mrb[0].mxu0
      %v1663 = vadd.f32 0.0, %v1662
      %v1664 = vpop.f32.mrb[0].mxu0
      %1665 = vmatprep.mubr.f32.mxu0 0.0
      %1666 = vmatmul.mubr.f32.gmra.mrb[0].mxu0 %v1563
      %v1667 = vpop.f32.mrb[0].mxu0
      %v1668 = vadd.f32 0.0, %v1667
      %v1669 = vpop.f32.mrb[0].mxu0
      %1670 = vmatprep.mubr.f32.mxu0 0.0
      %1671 = vmatmul.mubr.f32.gmra.mrb[0].mxu0 %v1566
      %v1672 = vpop.f32.mrb[0].mxu0
      %v1673 = vadd.f32 0.0, %v1672
      %v1674 = vpop.f32.mrb[0].mxu0
      %1675 = vdwg.mxu0
      %v1676 = vadd.f32 %v1526, %v1638
      %v1677 = vadd.f32 %v1527, %v1643
      %v1678 = vadd.f32 %v1528, %v1648
      %v1679 = vadd.f32 %v1529, %v1653
      %v1680 = vadd.f32 %v1530, %v1658
      %v1681 = vadd.f32 %v1531, %v1663
      %v1682 = vadd.f32 %v1532, %v1668
      %v1683 = vadd.f32 %v1533, %v1673
      %v1684 = vmax.f32 %v1676, 0.0
      %v1685 = vmax.f32 %v1677, 0.0
      %v1686 = vmax.f32 %v1678, 0.0
      %v1687 = vmax.f32 %v1679, 0.0
      %v1688 = vmax.f32 %v1680, 0.0
      %v1689 = vmax.f32 %v1681, 0.0
      %v1690 = vmax.f32 %v1682, 0.0
      %v1691 = vmax.f32 %v1683, 0.0
      %vm1692 = vcmask 64512
      %1693 = vst.msk [vmem:[#allocation3] sm:$0xff] %vm1692, 0.0
      %vm1694 = vcmask 58368
      %1695 = vst.msk [vmem:[#allocation3 + $0x8] sm:$0x3] %vm1694, 0.0
      %1696 = vst.msk [vmem:[#allocation3 + $0x10] sm:$0xff] %vm1692, 0.0
      %1697 = vst.msk [vmem:[#allocation3 + $0x18] sm:$0x3] %vm1694, 0.0
      %1698 = vst.msk [vmem:[#allocation3 + $0x20] sm:$0xff] %vm1692, 0.0
      %1699 = vst.msk [vmem:[#allocation3 + $0x28] sm:$0x3] %vm1694, 0.0
      %1700 = vst.msk [vmem:[#allocation3 + $0x30] sm:$0xff] %vm1692, 0.0
      %1701 = vst.msk [vmem:[#allocation3 + $0x38] sm:$0x3] %vm1694, 0.0
      %1702 = vst.msk [vmem:[#allocation3 + $0x40] sm:$0xff] %vm1692, 0.0
      %1703 = vst.msk [vmem:[#allocation3 + $0x48] sm:$0x3] %vm1694, 0.0
      %1704 = vst.msk [vmem:[#allocation3 + $0x50] sm:$0xff] %vm1692, 0.0
      %1705 = vst.msk [vmem:[#allocation3 + $0x58] sm:$0x3] %vm1694, 0.0
      %1706 = vst.msk [vmem:[#allocation3 + $0x60] sm:$0xff] %vm1692, 0.0
      %1707 = vst.msk [vmem:[#allocation3 + $0x68] sm:$0x3] %vm1694, 0.0
      %1708 = vst.msk [vmem:[#allocation3 + $0x70] sm:$0xff] %vm1692, 0.0
      %1709 = vst.msk [vmem:[#allocation3 + $0x78] sm:$0x3] %vm1694, 0.0
      %1710 = vst.msk [vmem:[#allocation3 + $0x80] sm:$0xff] %vm1692, 0.0
      %1711 = vst.msk [vmem:[#allocation3 + $0x88] sm:$0x3] %vm1694, 0.0
      %1712 = vst.msk [vmem:[#allocation3 + $0x90] sm:$0xff] %vm1692, 0.0
      %1713 = vst.msk [vmem:[#allocation3 + $0x98] sm:$0x3] %vm1694, 0.0
      %s1714 = scalar_lea.vmem [#allocation3], 16
      %1715 = vst.msk [vmem:[%s1714 + $0x1] sm:$0xff] %vm1692, %v1684
      %1716 = vst.msk [vmem:[%s1714 + $0x11] sm:$0xff] %vm1692, %v1685
      %1717 = vst.msk [vmem:[%s1714 + $0x21] sm:$0xff] %vm1692, %v1686
      %1718 = vst.msk [vmem:[%s1714 + $0x31] sm:$0xff] %vm1692, %v1687
      %1719 = vst.msk [vmem:[%s1714 + $0x41] sm:$0xff] %vm1692, %v1688
      %1720 = vst.msk [vmem:[%s1714 + $0x51] sm:$0xff] %vm1692, %v1689
      %1721 = vst.msk [vmem:[%s1714 + $0x61] sm:$0xff] %vm1692, %v1690
      %1722 = vst.msk [vmem:[%s1714 + $0x71] sm:$0xff] %vm1692, %v1691
      %v1723 = vld [vmem:[%s4] sm:$0x1]
      %v1725 = vlaneseq
      %v1726 = vshrl.u32 %v1725, 7
      %v1727 = vsub.s32 0, %v1726
      %v1728 = vrot.slane %v1723, %v1727
      %v1730 = vld [vmem:[#allocation3] sm:$0xff]
      %v1731 = vld [vmem:[#allocation3 + $0x10] sm:$0xff]
      %v1732 = vld [vmem:[#allocation3 + $0x20] sm:$0xff]
      %v1733 = vld [vmem:[#allocation3 + $0x30] sm:$0xff]
      %v1734 = vld [vmem:[#allocation3 + $0x40] sm:$0xff]
      %v1735 = vld [vmem:[#allocation3 + $0x50] sm:$0xff]
      %v1736 = vld [vmem:[#allocation3 + $0x60] sm:$0xff]
      %v1737 = vld [vmem:[#allocation3 + $0x70] sm:$0xff]
      %v1738 = vld [vmem:[%s3] sm:$0xff]
      %v1740 = vsel %vm1692, %v1730, 0
      %v1743 = vsel %vm1692, %v1731, 0
      %v1746 = vsel %vm1692, %v1732, 0
      %v1749 = vsel %vm1692, %v1733, 0
      %v1752 = vsel %vm1692, %v1734, 0
      %v1755 = vsel %vm1692, %v1735, 0
      %v1758 = vsel %vm1692, %v1736, 0
      %v1761 = vsel %vm1692, %v1737, 0
      %1763 = vmatprep.subr.mxu0 0.0
      %1764 = vmatpush1.msra.mxu0 %v1738
      %1765 = vmatprep.subr.mxu0 0.0
      %1766 = vmatpush1.msra.mxu0 0.0
      %1767 = vmatprep.subr.mxu0 0.0
      %1768 = vmatpush1.msra.mxu0 0.0
      %1769 = vmatprep.subr.mxu0 0.0
      %1770 = vmatpush1.msra.mxu0 0.0
      %1771 = vmatprep.subr.mxu0 0.0
      %1772 = vmatpush1.msra.mxu0 0.0
      %1773 = vmatprep.subr.mxu0 0.0
      %1774 = vmatpush1.msra.mxu0 0.0
      %1775 = vmatprep.subr.mxu0 0.0
      %1776 = vmatpush1.msra.mxu0 0.0
      %1777 = vmatprep.subr.mxu0 0.0
      %1778 = vmatpush1.msra.mxu0 0.0
      %1779 = vmatprep.subr.mxu0 0.0
      %1780 = vmatpush1.msra.mxu0 0.0
      %1781 = vmatprep.subr.mxu0 0.0
      %1782 = vmatpush1.msra.mxu0 0.0
      %1783 = vmatprep.subr.mxu0 0.0
      %1784 = vmatpush1.msra.mxu0 0.0
      %1785 = vmatprep.subr.mxu0 0.0
      %1786 = vmatpush1.msra.mxu0 0.0
      %1787 = vmatprep.subr.mxu0 0.0
      %1788 = vmatpush1.msra.mxu0 0.0
      %1789 = vmatprep.subr.mxu0 0.0
      %1790 = vmatpush1.msra.mxu0 0.0
      %1791 = vmatprep.subr.mxu0 0.0
      %1792 = vmatpush1.msra.mxu0 0.0
      %1793 = vmatprep.subr.mxu0 0.0
      %1794 = vmatpush1.msra.mxu0 0.0
      %1795 = vmatprep.subr.mxu0 0.0
      %1796 = vmatpush1.msra.mxu0 0.0
      %1797 = vmatprep.subr.mxu0 0.0
      %1798 = vmatpush1.msra.mxu0 0.0
      %1799 = vmatprep.subr.mxu0 0.0
      %1800 = vmatpush1.msra.mxu0 0.0
      %1801 = vmatprep.subr.mxu0 0.0
      %1802 = vmatpush1.msra.mxu0 0.0
      %1803 = vmatprep.subr.mxu0 0.0
      %1804 = vmatpush1.msra.mxu0 0.0
      %1805 = vmatprep.subr.mxu0 0.0
      %1806 = vmatpush1.msra.mxu0 0.0
      %1807 = vmatprep.subr.mxu0 0.0
      %1808 = vmatpush1.msra.mxu0 0.0
      %1809 = vmatprep.subr.mxu0 0.0
      %1810 = vmatpush1.msra.mxu0 0.0
      %1811 = vmatprep.subr.mxu0 0.0
      %1812 = vmatpush1.msra.mxu0 0.0
      %1813 = vmatprep.subr.mxu0 0.0
      %1814 = vmatpush1.msra.mxu0 0.0
      %1815 = vmatprep.subr.mxu0 0.0
      %1816 = vmatpush1.msra.mxu0 0.0
      %1817 = vmatprep.subr.mxu0 0.0
      %1818 = vmatpush1.msra.mxu0 0.0
      %1819 = vmatprep.subr.mxu0 0.0
      %1820 = vmatpush1.msra.mxu0 0.0
      %1821 = vmatprep.subr.mxu0 0.0
      %1822 = vmatpush1.msra.mxu0 0.0
      %1823 = vmatprep.subr.mxu0 0.0
      %1824 = vmatpush1.msra.mxu0 0.0
      %1825 = vmatprep.subr.mxu0 0.0
      %1826 = vmatpush1.msra.mxu0 0.0
      %1827 = vmatprep.mubr.f32.mxu0 0.0
      %1828 = vmatmul.mubr.f32.gmra.mrb[0].mxu0 %v1740
      %v1829 = vpop.f32.mrb[0].mxu0
      %v1830 = vadd.f32 0.0, %v1829
      %v1831 = vpop.f32.mrb[0].mxu0
      %1832 = vmatprep.mubr.f32.mxu0 0.0
      %1833 = vmatmul.mubr.f32.gmra.mrb[0].mxu0 %v1743
      %v1834 = vpop.f32.mrb[0].mxu0
      %v1835 = vadd.f32 0.0, %v1834
      %v1836 = vpop.f32.mrb[0].mxu0
      %1837 = vmatprep.mubr.f32.mxu0 0.0
      %1838 = vmatmul.mubr.f32.gmra.mrb[0].mxu0 %v1746
      %v1839 = vpop.f32.mrb[0].mxu0
      %v1840 = vadd.f32 0.0, %v1839
      %v1841 = vpop.f32.mrb[0].mxu0
      %1842 = vmatprep.mubr.f32.mxu0 0.0
      %1843 = vmatmul.mubr.f32.gmra.mrb[0].mxu0 %v1749
      %v1844 = vpop.f32.mrb[0].mxu0
      %v1845 = vadd.f32 0.0, %v1844
      %v1846 = vpop.f32.mrb[0].mxu0
      %1847 = vmatprep.mubr.f32.mxu0 0.0
      %1848 = vmatmul.mubr.f32.gmra.mrb[0].mxu0 %v1752
      %v1849 = vpop.f32.mrb[0].mxu0
      %v1850 = vadd.f32 0.0, %v1849
      %v1851 = vpop.f32.mrb[0].mxu0
      %1852 = vmatprep.mubr.f32.mxu0 0.0
      %1853 = vmatmul.mubr.f32.gmra.mrb[0].mxu0 %v1755
      %v1854 = vpop.f32.mrb[0].mxu0
      %v1855 = vadd.f32 0.0, %v1854
      %v1856 = vpop.f32.mrb[0].mxu0
      %1857 = vmatprep.mubr.f32.mxu0 0.0
      %1858 = vmatmul.mubr.f32.gmra.mrb[0].mxu0 %v1758
      %v1859 = vpop.f32.mrb[0].mxu0
      %v1860 = vadd.f32 0.0, %v1859
      %v1861 = vpop.f32.mrb[0].mxu0
      %1862 = vmatprep.mubr.f32.mxu0 0.0
      %1863 = vmatmul.mubr.f32.gmra.mrb[0].mxu0 %v1761
      %v1864 = vpop.f32.mrb[0].mxu0
      %v1865 = vadd.f32 0.0, %v1864
      %v1866 = vpop.f32.mrb[0].mxu0
      %1867 = vdwg.mxu0
      %v1868 = vadd.f32 %v1728, %v1830
      %v1869 = vadd.f32 %v1728, %v1835
      %v1870 = vadd.f32 %v1728, %v1840
      %v1871 = vadd.f32 %v1728, %v1845
      %v1872 = vadd.f32 %v1728, %v1850
      %v1873 = vadd.f32 %v1728, %v1855
      %v1874 = vadd.f32 %v1728, %v1860
      %v1875 = vadd.f32 %v1728, %v1865
      %v1876 = vld [vmem:[#allocation3 + $0x1] sm:$0xff]
      %v1877 = vld [vmem:[#allocation3 + $0x11] sm:$0xff]
      %v1878 = vld [vmem:[#allocation3 + $0x21] sm:$0xff]
      %v1879 = vld [vmem:[#allocation3 + $0x31] sm:$0xff]
      %v1880 = vld [vmem:[#allocation3 + $0x41] sm:$0xff]
      %v1881 = vld [vmem:[#allocation3 + $0x51] sm:$0xff]
      %v1882 = vld [vmem:[#allocation3 + $0x61] sm:$0xff]
      %v1883 = vld [vmem:[#allocation3 + $0x71] sm:$0xff]
      %s1884 = scalar_lea.vmem %s3, 8
      %v1885 = vld [vmem:[%s1884] sm:$0xff]
      %v1887 = vsel %vm1692, %v1876, 0
      %v1890 = vsel %vm1692, %v1877, 0
      %v1893 = vsel %vm1692, %v1878, 0
      %v1896 = vsel %vm1692, %v1879, 0
      %v1899 = vsel %vm1692, %v1880, 0
      %v1902 = vsel %vm1692, %v1881, 0
      %v1905 = vsel %vm1692, %v1882, 0
      %v1908 = vsel %vm1692, %v1883, 0
      %1910 = vmatprep.subr.mxu0 0.0
      %1911 = vmatpush1.msra.mxu0 %v1885
      %1912 = vmatprep.subr.mxu0 0.0
      %1913 = vmatpush1.msra.mxu0 0.0
      %1914 = vmatprep.subr.mxu0 0.0
      %1915 = vmatpush1.msra.mxu0 0.0
      %1916 = vmatprep.subr.mxu0 0.0
      %1917 = vmatpush1.msra.mxu0 0.0
      %1918 = vmatprep.subr.mxu0 0.0
      %1919 = vmatpush1.msra.mxu0 0.0
      %1920 = vmatprep.subr.mxu0 0.0
      %1921 = vmatpush1.msra.mxu0 0.0
      %1922 = vmatprep.subr.mxu0 0.0
      %1923 = vmatpush1.msra.mxu0 0.0
      %1924 = vmatprep.subr.mxu0 0.0
      %1925 = vmatpush1.msra.mxu0 0.0
      %1926 = vmatprep.subr.mxu0 0.0
      %1927 = vmatpush1.msra.mxu0 0.0
      %1928 = vmatprep.subr.mxu0 0.0
      %1929 = vmatpush1.msra.mxu0 0.0
      %1930 = vmatprep.subr.mxu0 0.0
      %1931 = vmatpush1.msra.mxu0 0.0
      %1932 = vmatprep.subr.mxu0 0.0
      %1933 = vmatpush1.msra.mxu0 0.0
      %1934 = vmatprep.subr.mxu0 0.0
      %1935 = vmatpush1.msra.mxu0 0.0
      %1936 = vmatprep.subr.mxu0 0.0
      %1937 = vmatpush1.msra.mxu0 0.0
      %1938 = vmatprep.subr.mxu0 0.0
      %1939 = vmatpush1.msra.mxu0 0.0
      %1940 = vmatprep.subr.mxu0 0.0
      %1941 = vmatpush1.msra.mxu0 0.0
      %1942 = vmatprep.subr.mxu0 0.0
      %1943 = vmatpush1.msra.mxu0 0.0
      %1944 = vmatprep.subr.mxu0 0.0
      %1945 = vmatpush1.msra.mxu0 0.0
      %1946 = vmatprep.subr.mxu0 0.0
      %1947 = vmatpush1.msra.mxu0 0.0
      %1948 = vmatprep.subr.mxu0 0.0
      %1949 = vmatpush1.msra.mxu0 0.0
      %1950 = vmatprep.subr.mxu0 0.0
      %1951 = vmatpush1.msra.mxu0 0.0
      %1952 = vmatprep.subr.mxu0 0.0
      %1953 = vmatpush1.msra.mxu0 0.0
      %1954 = vmatprep.subr.mxu0 0.0
      %1955 = vmatpush1.msra.mxu0 0.0
      %1956 = vmatprep.subr.mxu0 0.0
      %1957 = vmatpush1.msra.mxu0 0.0
      %1958 = vmatprep.subr.mxu0 0.0
      %1959 = vmatpush1.msra.mxu0 0.0
      %1960 = vmatprep.subr.mxu0 0.0
      %1961 = vmatpush1.msra.mxu0 0.0
      %1962 = vmatprep.subr.mxu0 0.0
      %1963 = vmatpush1.msra.mxu0 0.0
      %1964 = vmatprep.subr.mxu0 0.0
      %1965 = vmatpush1.msra.mxu0 0.0
      %1966 = vmatprep.subr.mxu0 0.0
      %1967 = vmatpush1.msra.mxu0 0.0
      %1968 = vmatprep.subr.mxu0 0.0
      %1969 = vmatpush1.msra.mxu0 0.0
      %1970 = vmatprep.subr.mxu0 0.0
      %1971 = vmatpush1.msra.mxu0 0.0
      %1972 = vmatprep.subr.mxu0 0.0
      %1973 = vmatpush1.msra.mxu0 0.0
      %1974 = vmatprep.mubr.f32.mxu0 0.0
      %1975 = vmatmul.mubr.f32.gmra.mrb[0].mxu0 %v1887
      %v1976 = vpop.f32.mrb[0].mxu0
      %v1977 = vadd.f32 0.0, %v1976
      %v1978 = vpop.f32.mrb[0].mxu0
      %1979 = vmatprep.mubr.f32.mxu0 0.0
      %1980 = vmatmul.mubr.f32.gmra.mrb[0].mxu0 %v1890
      %v1981 = vpop.f32.mrb[0].mxu0
      %v1982 = vadd.f32 0.0, %v1981
      %v1983 = vpop.f32.mrb[0].mxu0
      %1984 = vmatprep.mubr.f32.mxu0 0.0
      %1985 = vmatmul.mubr.f32.gmra.mrb[0].mxu0 %v1893
      %v1986 = vpop.f32.mrb[0].mxu0
      %v1987 = vadd.f32 0.0, %v1986
      %v1988 = vpop.f32.mrb[0].mxu0
      %1989 = vmatprep.mubr.f32.mxu0 0.0
      %1990 = vmatmul.mubr.f32.gmra.mrb[0].mxu0 %v1896
      %v1991 = vpop.f32.mrb[0].mxu0
      %v1992 = vadd.f32 0.0, %v1991
      %v1993 = vpop.f32.mrb[0].mxu0
      %1994 = vmatprep.mubr.f32.mxu0 0.0
      %1995 = vmatmul.mubr.f32.gmra.mrb[0].mxu0 %v1899
      %v1996 = vpop.f32.mrb[0].mxu0
      %v1997 = vadd.f32 0.0, %v1996
      %v1998 = vpop.f32.mrb[0].mxu0
      %1999 = vmatprep.mubr.f32.mxu0 0.0
      %2000 = vmatmul.mubr.f32.gmra.mrb[0].mxu0 %v1902
      %v2001 = vpop.f32.mrb[0].mxu0
      %v2002 = vadd.f32 0.0, %v2001
      %v2003 = vpop.f32.mrb[0].mxu0
      %2004 = vmatprep.mubr.f32.mxu0 0.0
      %2005 = vmatmul.mubr.f32.gmra.mrb[0].mxu0 %v1905
      %v2006 = vpop.f32.mrb[0].mxu0
      %v2007 = vadd.f32 0.0, %v2006
      %v2008 = vpop.f32.mrb[0].mxu0
      %2009 = vmatprep.mubr.f32.mxu0 0.0
      %2010 = vmatmul.mubr.f32.gmra.mrb[0].mxu0 %v1908
      %v2011 = vpop.f32.mrb[0].mxu0
      %v2012 = vadd.f32 0.0, %v2011
      %v2013 = vpop.f32.mrb[0].mxu0
      %2014 = vdwg.mxu0
      %v2015 = vadd.f32 %v1868, %v1977
      %v2016 = vadd.f32 %v1869, %v1982
      %v2017 = vadd.f32 %v1870, %v1987
      %v2018 = vadd.f32 %v1871, %v1992
      %v2019 = vadd.f32 %v1872, %v1997
      %v2020 = vadd.f32 %v1873, %v2002
      %v2021 = vadd.f32 %v1874, %v2007
      %v2022 = vadd.f32 %v1875, %v2012
      %v2023 = vld [vmem:[#allocation3 + $0x2] sm:$0xff]
      %v2024 = vld [vmem:[#allocation3 + $0x12] sm:$0xff]
      %v2025 = vld [vmem:[#allocation3 + $0x22] sm:$0xff]
      %v2026 = vld [vmem:[#allocation3 + $0x32] sm:$0xff]
      %v2027 = vld [vmem:[#allocation3 + $0x42] sm:$0xff]
      %v2028 = vld [vmem:[#allocation3 + $0x52] sm:$0xff]
      %v2029 = vld [vmem:[#allocation3 + $0x62] sm:$0xff]
      %v2030 = vld [vmem:[#allocation3 + $0x72] sm:$0xff]
      %s2031 = scalar_lea.vmem %s3, 16
      %v2032 = vld [vmem:[%s2031] sm:$0xff]
      %v2034 = vsel %vm1692, %v2023, 0
      %v2037 = vsel %vm1692, %v2024, 0
      %v2040 = vsel %vm1692, %v2025, 0
      %v2043 = vsel %vm1692, %v2026, 0
      %v2046 = vsel %vm1692, %v2027, 0
      %v2049 = vsel %vm1692, %v2028, 0
      %v2052 = vsel %vm1692, %v2029, 0
      %v2055 = vsel %vm1692, %v2030, 0
      %2057 = vmatprep.subr.mxu0 0.0
      %2058 = vmatpush1.msra.mxu0 %v2032
      %2059 = vmatprep.subr.mxu0 0.0
      %2060 = vmatpush1.msra.mxu0 0.0
      %2061 = vmatprep.subr.mxu0 0.0
      %2062 = vmatpush1.msra.mxu0 0.0
      %2063 = vmatprep.subr.mxu0 0.0
      %2064 = vmatpush1.msra.mxu0 0.0
      %2065 = vmatprep.subr.mxu0 0.0
      %2066 = vmatpush1.msra.mxu0 0.0
      %2067 = vmatprep.subr.mxu0 0.0
      %2068 = vmatpush1.msra.mxu0 0.0
      %2069 = vmatprep.subr.mxu0 0.0
      %2070 = vmatpush1.msra.mxu0 0.0
      %2071 = vmatprep.subr.mxu0 0.0
      %2072 = vmatpush1.msra.mxu0 0.0
      %2073 = vmatprep.subr.mxu0 0.0
      %2074 = vmatpush1.msra.mxu0 0.0
      %2075 = vmatprep.subr.mxu0 0.0
      %2076 = vmatpush1.msra.mxu0 0.0
      %2077 = vmatprep.subr.mxu0 0.0
      %2078 = vmatpush1.msra.mxu0 0.0
      %2079 = vmatprep.subr.mxu0 0.0
      %2080 = vmatpush1.msra.mxu0 0.0
      %2081 = vmatprep.subr.mxu0 0.0
      %2082 = vmatpush1.msra.mxu0 0.0
      %2083 = vmatprep.subr.mxu0 0.0
      %2084 = vmatpush1.msra.mxu0 0.0
      %2085 = vmatprep.subr.mxu0 0.0
      %2086 = vmatpush1.msra.mxu0 0.0
      %2087 = vmatprep.subr.mxu0 0.0
      %2088 = vmatpush1.msra.mxu0 0.0
      %2089 = vmatprep.subr.mxu0 0.0
      %2090 = vmatpush1.msra.mxu0 0.0
      %2091 = vmatprep.subr.mxu0 0.0
      %2092 = vmatpush1.msra.mxu0 0.0
      %2093 = vmatprep.subr.mxu0 0.0
      %2094 = vmatpush1.msra.mxu0 0.0
      %2095 = vmatprep.subr.mxu0 0.0
      %2096 = vmatpush1.msra.mxu0 0.0
      %2097 = vmatprep.subr.mxu0 0.0
      %2098 = vmatpush1.msra.mxu0 0.0
      %2099 = vmatprep.subr.mxu0 0.0
      %2100 = vmatpush1.msra.mxu0 0.0
      %2101 = vmatprep.subr.mxu0 0.0
      %2102 = vmatpush1.msra.mxu0 0.0
      %2103 = vmatprep.subr.mxu0 0.0
      %2104 = vmatpush1.msra.mxu0 0.0
      %2105 = vmatprep.subr.mxu0 0.0
      %2106 = vmatpush1.msra.mxu0 0.0
      %2107 = vmatprep.subr.mxu0 0.0
      %2108 = vmatpush1.msra.mxu0 0.0
      %2109 = vmatprep.subr.mxu0 0.0
      %2110 = vmatpush1.msra.mxu0 0.0
      %2111 = vmatprep.subr.mxu0 0.0
      %2112 = vmatpush1.msra.mxu0 0.0
      %2113 = vmatprep.subr.mxu0 0.0
      %2114 = vmatpush1.msra.mxu0 0.0
      %2115 = vmatprep.subr.mxu0 0.0
      %2116 = vmatpush1.msra.mxu0 0.0
      %2117 = vmatprep.subr.mxu0 0.0
      %2118 = vmatpush1.msra.mxu0 0.0
      %2119 = vmatprep.subr.mxu0 0.0
      %2120 = vmatpush1.msra.mxu0 0.0
      %2121 = vmatprep.mubr.f32.mxu0 0.0
      %2122 = vmatmul.mubr.f32.gmra.mrb[0].mxu0 %v2034
      %v2123 = vpop.f32.mrb[0].mxu0
      %v2124 = vadd.f32 0.0, %v2123
      %v2125 = vpop.f32.mrb[0].mxu0
      %2126 = vmatprep.mubr.f32.mxu0 0.0
      %2127 = vmatmul.mubr.f32.gmra.mrb[0].mxu0 %v2037
      %v2128 = vpop.f32.mrb[0].mxu0
      %v2129 = vadd.f32 0.0, %v2128
      %v2130 = vpop.f32.mrb[0].mxu0
      %2131 = vmatprep.mubr.f32.mxu0 0.0
      %2132 = vmatmul.mubr.f32.gmra.mrb[0].mxu0 %v2040
      %v2133 = vpop.f32.mrb[0].mxu0
      %v2134 = vadd.f32 0.0, %v2133
      %v2135 = vpop.f32.mrb[0].mxu0
      %2136 = vmatprep.mubr.f32.mxu0 0.0
      %2137 = vmatmul.mubr.f32.gmra.mrb[0].mxu0 %v2043
      %v2138 = vpop.f32.mrb[0].mxu0
      %v2139 = vadd.f32 0.0, %v2138
      %v2140 = vpop.f32.mrb[0].mxu0
      %2141 = vmatprep.mubr.f32.mxu0 0.0
      %2142 = vmatmul.mubr.f32.gmra.mrb[0].mxu0 %v2046
      %v2143 = vpop.f32.mrb[0].mxu0
      %v2144 = vadd.f32 0.0, %v2143
      %v2145 = vpop.f32.mrb[0].mxu0
      %2146 = vmatprep.mubr.f32.mxu0 0.0
      %2147 = vmatmul.mubr.f32.gmra.mrb[0].mxu0 %v2049
      %v2148 = vpop.f32.mrb[0].mxu0
      %v2149 = vadd.f32 0.0, %v2148
      %v2150 = vpop.f32.mrb[0].mxu0
      %2151 = vmatprep.mubr.f32.mxu0 0.0
      %2152 = vmatmul.mubr.f32.gmra.mrb[0].mxu0 %v2052
      %v2153 = vpop.f32.mrb[0].mxu0
      %v2154 = vadd.f32 0.0, %v2153
      %v2155 = vpop.f32.mrb[0].mxu0
      %2156 = vmatprep.mubr.f32.mxu0 0.0
      %2157 = vmatmul.mubr.f32.gmra.mrb[0].mxu0 %v2055
      %v2158 = vpop.f32.mrb[0].mxu0
      %v2159 = vadd.f32 0.0, %v2158
      %v2160 = vpop.f32.mrb[0].mxu0
      %2161 = vdwg.mxu0
      %v2162 = vadd.f32 %v2015, %v2124
      %v2163 = vadd.f32 %v2016, %v2129
      %v2164 = vadd.f32 %v2017, %v2134
      %v2165 = vadd.f32 %v2018, %v2139
      %v2166 = vadd.f32 %v2019, %v2144
      %v2167 = vadd.f32 %v2020, %v2149
      %v2168 = vadd.f32 %v2021, %v2154
      %v2169 = vadd.f32 %v2022, %v2159
      %v2170 = vld [vmem:[%s1714] sm:$0xff]
      %v2171 = vld [vmem:[%s1714 + $0x10] sm:$0xff]
      %v2172 = vld [vmem:[%s1714 + $0x20] sm:$0xff]
      %v2173 = vld [vmem:[%s1714 + $0x30] sm:$0xff]
      %v2174 = vld [vmem:[%s1714 + $0x40] sm:$0xff]
      %v2175 = vld [vmem:[%s1714 + $0x50] sm:$0xff]
      %v2176 = vld [vmem:[%s1714 + $0x60] sm:$0xff]
      %v2177 = vld [vmem:[%s1714 + $0x70] sm:$0xff]
      %s2178 = scalar_lea.vmem %s3, 24
      %v2179 = vld [vmem:[%s2178] sm:$0xff]
      %v2181 = vsel %vm1692, %v2170, 0
      %v2184 = vsel %vm1692, %v2171, 0
      %v2187 = vsel %vm1692, %v2172, 0
      %v2190 = vsel %vm1692, %v2173, 0
      %v2193 = vsel %vm1692, %v2174, 0
      %v2196 = vsel %vm1692, %v2175, 0
      %v2199 = vsel %vm1692, %v2176, 0
      %v2202 = vsel %vm1692, %v2177, 0
      %2204 = vmatprep.subr.mxu0 0.0
      %2205 = vmatpush1.msra.mxu0 %v2179
      %2206 = vmatprep.subr.mxu0 0.0
      %2207 = vmatpush1.msra.mxu0 0.0
      %2208 = vmatprep.subr.mxu0 0.0
      %2209 = vmatpush1.msra.mxu0 0.0
      %2210 = vmatprep.subr.mxu0 0.0
      %2211 = vmatpush1.msra.mxu0 0.0
      %2212 = vmatprep.subr.mxu0 0.0
      %2213 = vmatpush1.msra.mxu0 0.0
      %2214 = vmatprep.subr.mxu0 0.0
      %2215 = vmatpush1.msra.mxu0 0.0
      %2216 = vmatprep.subr.mxu0 0.0
      %2217 = vmatpush1.msra.mxu0 0.0
      %2218 = vmatprep.subr.mxu0 0.0
      %2219 = vmatpush1.msra.mxu0 0.0
      %2220 = vmatprep.subr.mxu0 0.0
      %2221 = vmatpush1.msra.mxu0 0.0
      %2222 = vmatprep.subr.mxu0 0.0
      %2223 = vmatpush1.msra.mxu0 0.0
      %2224 = vmatprep.subr.mxu0 0.0
      %2225 = vmatpush1.msra.mxu0 0.0
      %2226 = vmatprep.subr.mxu0 0.0
      %2227 = vmatpush1.msra.mxu0 0.0
      %2228 = vmatprep.subr.mxu0 0.0
      %2229 = vmatpush1.msra.mxu0 0.0
      %2230 = vmatprep.subr.mxu0 0.0
      %2231 = vmatpush1.msra.mxu0 0.0
      %2232 = vmatprep.subr.mxu0 0.0
      %2233 = vmatpush1.msra.mxu0 0.0
      %2234 = vmatprep.subr.mxu0 0.0
      %2235 = vmatpush1.msra.mxu0 0.0
      %2236 = vmatprep.subr.mxu0 0.0
      %2237 = vmatpush1.msra.mxu0 0.0
      %2238 = vmatprep.subr.mxu0 0.0
      %2239 = vmatpush1.msra.mxu0 0.0
      %2240 = vmatprep.subr.mxu0 0.0
      %2241 = vmatpush1.msra.mxu0 0.0
      %2242 = vmatprep.subr.mxu0 0.0
      %2243 = vmatpush1.msra.mxu0 0.0
      %2244 = vmatprep.subr.mxu0 0.0
      %2245 = vmatpush1.msra.mxu0 0.0
      %2246 = vmatprep.subr.mxu0 0.0
      %2247 = vmatpush1.msra.mxu0 0.0
      %2248 = vmatprep.subr.mxu0 0.0
      %2249 = vmatpush1.msra.mxu0 0.0
      %2250 = vmatprep.subr.mxu0 0.0
      %2251 = vmatpush1.msra.mxu0 0.0
      %2252 = vmatprep.subr.mxu0 0.0
      %2253 = vmatpush1.msra.mxu0 0.0
      %2254 = vmatprep.subr.mxu0 0.0
      %2255 = vmatpush1.msra.mxu0 0.0
      %2256 = vmatprep.subr.mxu0 0.0
      %2257 = vmatpush1.msra.mxu0 0.0
      %2258 = vmatprep.subr.mxu0 0.0
      %2259 = vmatpush1.msra.mxu0 0.0
      %2260 = vmatprep.subr.mxu0 0.0
      %2261 = vmatpush1.msra.mxu0 0.0
      %2262 = vmatprep.subr.mxu0 0.0
      %2263 = vmatpush1.msra.mxu0 0.0
      %2264 = vmatprep.subr.mxu0 0.0
      %2265 = vmatpush1.msra.mxu0 0.0
      %2266 = vmatprep.subr.mxu0 0.0
      %2267 = vmatpush1.msra.mxu0 0.0
      %2268 = vmatprep.mubr.f32.mxu0 0.0
      %2269 = vmatmul.mubr.f32.gmra.mrb[0].mxu0 %v2181
      %v2270 = vpop.f32.mrb[0].mxu0
      %v2271 = vadd.f32 0.0, %v2270
      %v2272 = vpop.f32.mrb[0].mxu0
      %2273 = vmatprep.mubr.f32.mxu0 0.0
      %2274 = vmatmul.mubr.f32.gmra.mrb[0].mxu0 %v2184
      %v2275 = vpop.f32.mrb[0].mxu0
      %v2276 = vadd.f32 0.0, %v2275
      %v2277 = vpop.f32.mrb[0].mxu0
      %2278 = vmatprep.mubr.f32.mxu0 0.0
      %2279 = vmatmul.mubr.f32.gmra.mrb[0].mxu0 %v2187
      %v2280 = vpop.f32.mrb[0].mxu0
      %v2281 = vadd.f32 0.0, %v2280
      %v2282 = vpop.f32.mrb[0].mxu0
      %2283 = vmatprep.mubr.f32.mxu0 0.0
      %2284 = vmatmul.mubr.f32.gmra.mrb[0].mxu0 %v2190
      %v2285 = vpop.f32.mrb[0].mxu0
      %v2286 = vadd.f32 0.0, %v2285
      %v2287 = vpop.f32.mrb[0].mxu0
      %2288 = vmatprep.mubr.f32.mxu0 0.0
      %2289 = vmatmul.mubr.f32.gmra.mrb[0].mxu0 %v2193
      %v2290 = vpop.f32.mrb[0].mxu0
      %v2291 = vadd.f32 0.0, %v2290
      %v2292 = vpop.f32.mrb[0].mxu0
      %2293 = vmatprep.mubr.f32.mxu0 0.0
      %2294 = vmatmul.mubr.f32.gmra.mrb[0].mxu0 %v2196
      %v2295 = vpop.f32.mrb[0].mxu0
      %v2296 = vadd.f32 0.0, %v2295
      %v2297 = vpop.f32.mrb[0].mxu0
      %2298 = vmatprep.mubr.f32.mxu0 0.0
      %2299 = vmatmul.mubr.f32.gmra.mrb[0].mxu0 %v2199
      %v2300 = vpop.f32.mrb[0].mxu0
      %v2301 = vadd.f32 0.0, %v2300
      %v2302 = vpop.f32.mrb[0].mxu0
      %2303 = vmatprep.mubr.f32.mxu0 0.0
      %2304 = vmatmul.mubr.f32.gmra.mrb[0].mxu0 %v2202
      %v2305 = vpop.f32.mrb[0].mxu0
      %v2306 = vadd.f32 0.0, %v2305
      %v2307 = vpop.f32.mrb[0].mxu0
      %2308 = vdwg.mxu0
      %v2309 = vadd.f32 %v2162, %v2271
      %v2310 = vadd.f32 %v2163, %v2276
      %v2311 = vadd.f32 %v2164, %v2281
      %v2312 = vadd.f32 %v2165, %v2286
      %v2313 = vadd.f32 %v2166, %v2291
      %v2314 = vadd.f32 %v2167, %v2296
      %v2315 = vadd.f32 %v2168, %v2301
      %v2316 = vadd.f32 %v2169, %v2306
      %v2317 = vld [vmem:[%s1714 + $0x1] sm:$0xff]
      %v2318 = vld [vmem:[%s1714 + $0x11] sm:$0xff]
      %v2319 = vld [vmem:[%s1714 + $0x21] sm:$0xff]
      %v2320 = vld [vmem:[%s1714 + $0x31] sm:$0xff]
      %v2321 = vld [vmem:[%s1714 + $0x41] sm:$0xff]
      %v2322 = vld [vmem:[%s1714 + $0x51] sm:$0xff]
      %v2323 = vld [vmem:[%s1714 + $0x61] sm:$0xff]
      %v2324 = vld [vmem:[%s1714 + $0x71] sm:$0xff]
      %s2325 = scalar_lea.vmem %s3, 32
      %v2326 = vld [vmem:[%s2325] sm:$0xff]
      %v2328 = vsel %vm1692, %v2317, 0
      %v2331 = vsel %vm1692, %v2318, 0
      %v2334 = vsel %vm1692, %v2319, 0
      %v2337 = vsel %vm1692, %v2320, 0
      %v2340 = vsel %vm1692, %v2321, 0
      %v2343 = vsel %vm1692, %v2322, 0
      %v2346 = vsel %vm1692, %v2323, 0
      %v2349 = vsel %vm1692, %v2324, 0
      %2351 = vmatprep.subr.mxu0 0.0
      %2352 = vmatpush1.msra.mxu0 %v2326
      %2353 = vmatprep.subr.mxu0 0.0
      %2354 = vmatpush1.msra.mxu0 0.0
      %2355 = vmatprep.subr.mxu0 0.0
      %2356 = vmatpush1.msra.mxu0 0.0
      %2357 = vmatprep.subr.mxu0 0.0
      %2358 = vmatpush1.msra.mxu0 0.0
      %2359 = vmatprep.subr.mxu0 0.0
      %2360 = vmatpush1.msra.mxu0 0.0
      %2361 = vmatprep.subr.mxu0 0.0
      %2362 = vmatpush1.msra.mxu0 0.0
      %2363 = vmatprep.subr.mxu0 0.0
      %2364 = vmatpush1.msra.mxu0 0.0
      %2365 = vmatprep.subr.mxu0 0.0
      %2366 = vmatpush1.msra.mxu0 0.0
      %2367 = vmatprep.subr.mxu0 0.0
      %2368 = vmatpush1.msra.mxu0 0.0
      %2369 = vmatprep.subr.mxu0 0.0
      %2370 = vmatpush1.msra.mxu0 0.0
      %2371 = vmatprep.subr.mxu0 0.0
      %2372 = vmatpush1.msra.mxu0 0.0
      %2373 = vmatprep.subr.mxu0 0.0
      %2374 = vmatpush1.msra.mxu0 0.0
      %2375 = vmatprep.subr.mxu0 0.0
      %2376 = vmatpush1.msra.mxu0 0.0
      %2377 = vmatprep.subr.mxu0 0.0
      %2378 = vmatpush1.msra.mxu0 0.0
      %2379 = vmatprep.subr.mxu0 0.0
      %2380 = vmatpush1.msra.mxu0 0.0
      %2381 = vmatprep.subr.mxu0 0.0
      %2382 = vmatpush1.msra.mxu0 0.0
      %2383 = vmatprep.subr.mxu0 0.0
      %2384 = vmatpush1.msra.mxu0 0.0
      %2385 = vmatprep.subr.mxu0 0.0
      %2386 = vmatpush1.msra.mxu0 0.0
      %2387 = vmatprep.subr.mxu0 0.0
      %2388 = vmatpush1.msra.mxu0 0.0
      %2389 = vmatprep.subr.mxu0 0.0
      %2390 = vmatpush1.msra.mxu0 0.0
      %2391 = vmatprep.subr.mxu0 0.0
      %2392 = vmatpush1.msra.mxu0 0.0
      %2393 = vmatprep.subr.mxu0 0.0
      %2394 = vmatpush1.msra.mxu0 0.0
      %2395 = vmatprep.subr.mxu0 0.0
      %2396 = vmatpush1.msra.mxu0 0.0
      %2397 = vmatprep.subr.mxu0 0.0
      %2398 = vmatpush1.msra.mxu0 0.0
      %2399 = vmatprep.subr.mxu0 0.0
      %2400 = vmatpush1.msra.mxu0 0.0
      %2401 = vmatprep.subr.mxu0 0.0
      %2402 = vmatpush1.msra.mxu0 0.0
      %2403 = vmatprep.subr.mxu0 0.0
      %2404 = vmatpush1.msra.mxu0 0.0
      %2405 = vmatprep.subr.mxu0 0.0
      %2406 = vmatpush1.msra.mxu0 0.0
      %2407 = vmatprep.subr.mxu0 0.0
      %2408 = vmatpush1.msra.mxu0 0.0
      %2409 = vmatprep.subr.mxu0 0.0
      %2410 = vmatpush1.msra.mxu0 0.0
      %2411 = vmatprep.subr.mxu0 0.0
      %2412 = vmatpush1.msra.mxu0 0.0
      %2413 = vmatprep.subr.mxu0 0.0
      %2414 = vmatpush1.msra.mxu0 0.0
      %2415 = vmatprep.mubr.f32.mxu0 0.0
      %2416 = vmatmul.mubr.f32.gmra.mrb[0].mxu0 %v2328
      %v2417 = vpop.f32.mrb[0].mxu0
      %v2418 = vadd.f32 0.0, %v2417
      %v2419 = vpop.f32.mrb[0].mxu0
      %2420 = vmatprep.mubr.f32.mxu0 0.0
      %2421 = vmatmul.mubr.f32.gmra.mrb[0].mxu0 %v2331
      %v2422 = vpop.f32.mrb[0].mxu0
      %v2423 = vadd.f32 0.0, %v2422
      %v2424 = vpop.f32.mrb[0].mxu0
      %2425 = vmatprep.mubr.f32.mxu0 0.0
      %2426 = vmatmul.mubr.f32.gmra.mrb[0].mxu0 %v2334
      %v2427 = vpop.f32.mrb[0].mxu0
      %v2428 = vadd.f32 0.0, %v2427
      %v2429 = vpop.f32.mrb[0].mxu0
      %2430 = vmatprep.mubr.f32.mxu0 0.0
      %2431 = vmatmul.mubr.f32.gmra.mrb[0].mxu0 %v2337
      %v2432 = vpop.f32.mrb[0].mxu0
      %v2433 = vadd.f32 0.0, %v2432
      %v2434 = vpop.f32.mrb[0].mxu0
      %2435 = vmatprep.mubr.f32.mxu0 0.0
      %2436 = vmatmul.mubr.f32.gmra.mrb[0].mxu0 %v2340
      %v2437 = vpop.f32.mrb[0].mxu0
      %v2438 = vadd.f32 0.0, %v2437
      %v2439 = vpop.f32.mrb[0].mxu0
      %2440 = vmatprep.mubr.f32.mxu0 0.0
      %2441 = vmatmul.mubr.f32.gmra.mrb[0].mxu0 %v2343
      %v2442 = vpop.f32.mrb[0].mxu0
      %v2443 = vadd.f32 0.0, %v2442
      %v2444 = vpop.f32.mrb[0].mxu0
      %2445 = vmatprep.mubr.f32.mxu0 0.0
      %2446 = vmatmul.mubr.f32.gmra.mrb[0].mxu0 %v2346
      %v2447 = vpop.f32.mrb[0].mxu0
      %v2448 = vadd.f32 0.0, %v2447
      %v2449 = vpop.f32.mrb[0].mxu0
      %2450 = vmatprep.mubr.f32.mxu0 0.0
      %2451 = vmatmul.mubr.f32.gmra.mrb[0].mxu0 %v2349
      %v2452 = vpop.f32.mrb[0].mxu0
      %v2453 = vadd.f32 0.0, %v2452
      %v2454 = vpop.f32.mrb[0].mxu0
      %2455 = vdwg.mxu0
      %v2456 = vadd.f32 %v2309, %v2418
      %v2457 = vadd.f32 %v2310, %v2423
      %v2458 = vadd.f32 %v2311, %v2428
      %v2459 = vadd.f32 %v2312, %v2433
      %v2460 = vadd.f32 %v2313, %v2438
      %v2461 = vadd.f32 %v2314, %v2443
      %v2462 = vadd.f32 %v2315, %v2448
      %v2463 = vadd.f32 %v2316, %v2453
      %v2464 = vld [vmem:[%s1714 + $0x2] sm:$0xff]
      %v2465 = vld [vmem:[%s1714 + $0x12] sm:$0xff]
      %v2466 = vld [vmem:[%s1714 + $0x22] sm:$0xff]
      %v2467 = vld [vmem:[%s1714 + $0x32] sm:$0xff]
      %v2468 = vld [vmem:[%s1714 + $0x42] sm:$0xff]
      %v2469 = vld [vmem:[%s1714 + $0x52] sm:$0xff]
      %v2470 = vld [vmem:[%s1714 + $0x62] sm:$0xff]
      %v2471 = vld [vmem:[%s1714 + $0x72] sm:$0xff]
      %s2472 = scalar_lea.vmem %s3, 40
      %v2473 = vld [vmem:[%s2472] sm:$0xff]
      %v2475 = vsel %vm1692, %v2464, 0
      %v2478 = vsel %vm1692, %v2465, 0
      %v2481 = vsel %vm1692, %v2466, 0
      %v2484 = vsel %vm1692, %v2467, 0
      %v2487 = vsel %vm1692, %v2468, 0
      %v2490 = vsel %vm1692, %v2469, 0
      %v2493 = vsel %vm1692, %v2470, 0
      %v2496 = vsel %vm1692, %v2471, 0
      %2498 = vmatprep.subr.mxu0 0.0
      %2499 = vmatpush1.msra.mxu0 %v2473
      %2500 = vmatprep.subr.mxu0 0.0
      %2501 = vmatpush1.msra.mxu0 0.0
      %2502 = vmatprep.subr.mxu0 0.0
      %2503 = vmatpush1.msra.mxu0 0.0
      %2504 = vmatprep.subr.mxu0 0.0
      %2505 = vmatpush1.msra.mxu0 0.0
      %2506 = vmatprep.subr.mxu0 0.0
      %2507 = vmatpush1.msra.mxu0 0.0
      %2508 = vmatprep.subr.mxu0 0.0
      %2509 = vmatpush1.msra.mxu0 0.0
      %2510 = vmatprep.subr.mxu0 0.0
      %2511 = vmatpush1.msra.mxu0 0.0
      %2512 = vmatprep.subr.mxu0 0.0
      %2513 = vmatpush1.msra.mxu0 0.0
      %2514 = vmatprep.subr.mxu0 0.0
      %2515 = vmatpush1.msra.mxu0 0.0
      %2516 = vmatprep.subr.mxu0 0.0
      %2517 = vmatpush1.msra.mxu0 0.0
      %2518 = vmatprep.subr.mxu0 0.0
      %2519 = vmatpush1.msra.mxu0 0.0
      %2520 = vmatprep.subr.mxu0 0.0
      %2521 = vmatpush1.msra.mxu0 0.0
      %2522 = vmatprep.subr.mxu0 0.0
      %2523 = vmatpush1.msra.mxu0 0.0
      %2524 = vmatprep.subr.mxu0 0.0
      %2525 = vmatpush1.msra.mxu0 0.0
      %2526 = vmatprep.subr.mxu0 0.0
      %2527 = vmatpush1.msra.mxu0 0.0
      %2528 = vmatprep.subr.mxu0 0.0
      %2529 = vmatpush1.msra.mxu0 0.0
      %2530 = vmatprep.subr.mxu0 0.0
      %2531 = vmatpush1.msra.mxu0 0.0
      %2532 = vmatprep.subr.mxu0 0.0
      %2533 = vmatpush1.msra.mxu0 0.0
      %2534 = vmatprep.subr.mxu0 0.0
      %2535 = vmatpush1.msra.mxu0 0.0
      %2536 = vmatprep.subr.mxu0 0.0
      %2537 = vmatpush1.msra.mxu0 0.0
      %2538 = vmatprep.subr.mxu0 0.0
      %2539 = vmatpush1.msra.mxu0 0.0
      %2540 = vmatprep.subr.mxu0 0.0
      %2541 = vmatpush1.msra.mxu0 0.0
      %2542 = vmatprep.subr.mxu0 0.0
      %2543 = vmatpush1.msra.mxu0 0.0
      %2544 = vmatprep.subr.mxu0 0.0
      %2545 = vmatpush1.msra.mxu0 0.0
      %2546 = vmatprep.subr.mxu0 0.0
      %2547 = vmatpush1.msra.mxu0 0.0
      %2548 = vmatprep.subr.mxu0 0.0
      %2549 = vmatpush1.msra.mxu0 0.0
      %2550 = vmatprep.subr.mxu0 0.0
      %2551 = vmatpush1.msra.mxu0 0.0
      %2552 = vmatprep.subr.mxu0 0.0
      %2553 = vmatpush1.msra.mxu0 0.0
      %2554 = vmatprep.subr.mxu0 0.0
      %2555 = vmatpush1.msra.mxu0 0.0
      %2556 = vmatprep.subr.mxu0 0.0
      %2557 = vmatpush1.msra.mxu0 0.0
      %2558 = vmatprep.subr.mxu0 0.0
      %2559 = vmatpush1.msra.mxu0 0.0
      %2560 = vmatprep.subr.mxu0 0.0
      %2561 = vmatpush1.msra.mxu0 0.0
      %2562 = vmatprep.mubr.f32.mxu0 0.0
      %2563 = vmatmul.mubr.f32.gmra.mrb[0].mxu0 %v2475
      %v2564 = vpop.f32.mrb[0].mxu0
      %v2565 = vadd.f32 0.0, %v2564
      %v2566 = vpop.f32.mrb[0].mxu0
      %2567 = vmatprep.mubr.f32.mxu0 0.0
      %2568 = vmatmul.mubr.f32.gmra.mrb[0].mxu0 %v2478
      %v2569 = vpop.f32.mrb[0].mxu0
      %v2570 = vadd.f32 0.0, %v2569
      %v2571 = vpop.f32.mrb[0].mxu0
      %2572 = vmatprep.mubr.f32.mxu0 0.0
      %2573 = vmatmul.mubr.f32.gmra.mrb[0].mxu0 %v2481
      %v2574 = vpop.f32.mrb[0].mxu0
      %v2575 = vadd.f32 0.0, %v2574
      %v2576 = vpop.f32.mrb[0].mxu0
      %2577 = vmatprep.mubr.f32.mxu0 0.0
      %2578 = vmatmul.mubr.f32.gmra.mrb[0].mxu0 %v2484
      %v2579 = vpop.f32.mrb[0].mxu0
      %v2580 = vadd.f32 0.0, %v2579
      %v2581 = vpop.f32.mrb[0].mxu0
      %2582 = vmatprep.mubr.f32.mxu0 0.0
      %2583 = vmatmul.mubr.f32.gmra.mrb[0].mxu0 %v2487
      %v2584 = vpop.f32.mrb[0].mxu0
      %v2585 = vadd.f32 0.0, %v2584
      %v2586 = vpop.f32.mrb[0].mxu0
      %2587 = vmatprep.mubr.f32.mxu0 0.0
      %2588 = vmatmul.mubr.f32.gmra.mrb[0].mxu0 %v2490
      %v2589 = vpop.f32.mrb[0].mxu0
      %v2590 = vadd.f32 0.0, %v2589
      %v2591 = vpop.f32.mrb[0].mxu0
      %2592 = vmatprep.mubr.f32.mxu0 0.0
      %2593 = vmatmul.mubr.f32.gmra.mrb[0].mxu0 %v2493
      %v2594 = vpop.f32.mrb[0].mxu0
      %v2595 = vadd.f32 0.0, %v2594
      %v2596 = vpop.f32.mrb[0].mxu0
      %2597 = vmatprep.mubr.f32.mxu0 0.0
      %2598 = vmatmul.mubr.f32.gmra.mrb[0].mxu0 %v2496
      %v2599 = vpop.f32.mrb[0].mxu0
      %v2600 = vadd.f32 0.0, %v2599
      %v2601 = vpop.f32.mrb[0].mxu0
      %2602 = vdwg.mxu0
      %v2603 = vadd.f32 %v2456, %v2565
      %v2604 = vadd.f32 %v2457, %v2570
      %v2605 = vadd.f32 %v2458, %v2575
      %v2606 = vadd.f32 %v2459, %v2580
      %v2607 = vadd.f32 %v2460, %v2585
      %v2608 = vadd.f32 %v2461, %v2590
      %v2609 = vadd.f32 %v2462, %v2595
      %v2610 = vadd.f32 %v2463, %v2600
      %s2611 = scalar_lea.vmem [#allocation3], 32
      %v2612 = vld [vmem:[%s2611] sm:$0xff]
      %v2613 = vld [vmem:[%s2611 + $0x10] sm:$0xff]
      %v2614 = vld [vmem:[%s2611 + $0x20] sm:$0xff]
      %v2615 = vld [vmem:[%s2611 + $0x30] sm:$0xff]
      %v2616 = vld [vmem:[%s2611 + $0x40] sm:$0xff]
      %v2617 = vld [vmem:[%s2611 + $0x50] sm:$0xff]
      %v2618 = vld [vmem:[%s2611 + $0x60] sm:$0xff]
      %v2619 = vld [vmem:[%s2611 + $0x70] sm:$0xff]
      %s2620 = scalar_lea.vmem %s3, 48
      %v2621 = vld [vmem:[%s2620] sm:$0xff]
      %v2623 = vsel %vm1692, %v2612, 0
      %v2626 = vsel %vm1692, %v2613, 0
      %v2629 = vsel %vm1692, %v2614, 0
      %v2632 = vsel %vm1692, %v2615, 0
      %v2635 = vsel %vm1692, %v2616, 0
      %v2638 = vsel %vm1692, %v2617, 0
      %v2641 = vsel %vm1692, %v2618, 0
      %v2644 = vsel %vm1692, %v2619, 0
      %2646 = vmatprep.subr.mxu0 0.0
      %2647 = vmatpush1.msra.mxu0 %v2621
      %2648 = vmatprep.subr.mxu0 0.0
      %2649 = vmatpush1.msra.mxu0 0.0
      %2650 = vmatprep.subr.mxu0 0.0
      %2651 = vmatpush1.msra.mxu0 0.0
      %2652 = vmatprep.subr.mxu0 0.0
      %2653 = vmatpush1.msra.mxu0 0.0
      %2654 = vmatprep.subr.mxu0 0.0
      %2655 = vmatpush1.msra.mxu0 0.0
      %2656 = vmatprep.subr.mxu0 0.0
      %2657 = vmatpush1.msra.mxu0 0.0
      %2658 = vmatprep.subr.mxu0 0.0
      %2659 = vmatpush1.msra.mxu0 0.0
      %2660 = vmatprep.subr.mxu0 0.0
      %2661 = vmatpush1.msra.mxu0 0.0
      %2662 = vmatprep.subr.mxu0 0.0
      %2663 = vmatpush1.msra.mxu0 0.0
      %2664 = vmatprep.subr.mxu0 0.0
      %2665 = vmatpush1.msra.mxu0 0.0
      %2666 = vmatprep.subr.mxu0 0.0
      %2667 = vmatpush1.msra.mxu0 0.0
      %2668 = vmatprep.subr.mxu0 0.0
      %2669 = vmatpush1.msra.mxu0 0.0
      %2670 = vmatprep.subr.mxu0 0.0
      %2671 = vmatpush1.msra.mxu0 0.0
      %2672 = vmatprep.subr.mxu0 0.0
      %2673 = vmatpush1.msra.mxu0 0.0
      %2674 = vmatprep.subr.mxu0 0.0
      %2675 = vmatpush1.msra.mxu0 0.0
      %2676 = vmatprep.subr.mxu0 0.0
      %2677 = vmatpush1.msra.mxu0 0.0
      %2678 = vmatprep.subr.mxu0 0.0
      %2679 = vmatpush1.msra.mxu0 0.0
      %2680 = vmatprep.subr.mxu0 0.0
      %2681 = vmatpush1.msra.mxu0 0.0
      %2682 = vmatprep.subr.mxu0 0.0
      %2683 = vmatpush1.msra.mxu0 0.0
      %2684 = vmatprep.subr.mxu0 0.0
      %2685 = vmatpush1.msra.mxu0 0.0
      %2686 = vmatprep.subr.mxu0 0.0
      %2687 = vmatpush1.msra.mxu0 0.0
      %2688 = vmatprep.subr.mxu0 0.0
      %2689 = vmatpush1.msra.mxu0 0.0
      %2690 = vmatprep.subr.mxu0 0.0
      %2691 = vmatpush1.msra.mxu0 0.0
      %2692 = vmatprep.subr.mxu0 0.0
      %2693 = vmatpush1.msra.mxu0 0.0
      %2694 = vmatprep.subr.mxu0 0.0
      %2695 = vmatpush1.msra.mxu0 0.0
      %2696 = vmatprep.subr.mxu0 0.0
      %2697 = vmatpush1.msra.mxu0 0.0
      %2698 = vmatprep.subr.mxu0 0.0
      %2699 = vmatpush1.msra.mxu0 0.0
      %2700 = vmatprep.subr.mxu0 0.0
      %2701 = vmatpush1.msra.mxu0 0.0
      %2702 = vmatprep.subr.mxu0 0.0
      %2703 = vmatpush1.msra.mxu0 0.0
      %2704 = vmatprep.subr.mxu0 0.0
      %2705 = vmatpush1.msra.mxu0 0.0
      %2706 = vmatprep.subr.mxu0 0.0
      %2707 = vmatpush1.msra.mxu0 0.0
      %2708 = vmatprep.subr.mxu0 0.0
      %2709 = vmatpush1.msra.mxu0 0.0
      %2710 = vmatprep.mubr.f32.mxu0 0.0
      %2711 = vmatmul.mubr.f32.gmra.mrb[0].mxu0 %v2623
      %v2712 = vpop.f32.mrb[0].mxu0
      %v2713 = vadd.f32 0.0, %v2712
      %v2714 = vpop.f32.mrb[0].mxu0
      %2715 = vmatprep.mubr.f32.mxu0 0.0
      %2716 = vmatmul.mubr.f32.gmra.mrb[0].mxu0 %v2626
      %v2717 = vpop.f32.mrb[0].mxu0
      %v2718 = vadd.f32 0.0, %v2717
      %v2719 = vpop.f32.mrb[0].mxu0
      %2720 = vmatprep.mubr.f32.mxu0 0.0
      %2721 = vmatmul.mubr.f32.gmra.mrb[0].mxu0 %v2629
      %v2722 = vpop.f32.mrb[0].mxu0
      %v2723 = vadd.f32 0.0, %v2722
      %v2724 = vpop.f32.mrb[0].mxu0
      %2725 = vmatprep.mubr.f32.mxu0 0.0
      %2726 = vmatmul.mubr.f32.gmra.mrb[0].mxu0 %v2632
      %v2727 = vpop.f32.mrb[0].mxu0
      %v2728 = vadd.f32 0.0, %v2727
      %v2729 = vpop.f32.mrb[0].mxu0
      %2730 = vmatprep.mubr.f32.mxu0 0.0
      %2731 = vmatmul.mubr.f32.gmra.mrb[0].mxu0 %v2635
      %v2732 = vpop.f32.mrb[0].mxu0
      %v2733 = vadd.f32 0.0, %v2732
      %v2734 = vpop.f32.mrb[0].mxu0
      %2735 = vmatprep.mubr.f32.mxu0 0.0
      %2736 = vmatmul.mubr.f32.gmra.mrb[0].mxu0 %v2638
      %v2737 = vpop.f32.mrb[0].mxu0
      %v2738 = vadd.f32 0.0, %v2737
      %v2739 = vpop.f32.mrb[0].mxu0
      %2740 = vmatprep.mubr.f32.mxu0 0.0
      %2741 = vmatmul.mubr.f32.gmra.mrb[0].mxu0 %v2641
      %v2742 = vpop.f32.mrb[0].mxu0
      %v2743 = vadd.f32 0.0, %v2742
      %v2744 = vpop.f32.mrb[0].mxu0
      %2745 = vmatprep.mubr.f32.mxu0 0.0
      %2746 = vmatmul.mubr.f32.gmra.mrb[0].mxu0 %v2644
      %v2747 = vpop.f32.mrb[0].mxu0
      %v2748 = vadd.f32 0.0, %v2747
      %v2749 = vpop.f32.mrb[0].mxu0
      %2750 = vdwg.mxu0
      %v2751 = vadd.f32 %v2603, %v2713
      %v2752 = vadd.f32 %v2604, %v2718
      %v2753 = vadd.f32 %v2605, %v2723
      %v2754 = vadd.f32 %v2606, %v2728
      %v2755 = vadd.f32 %v2607, %v2733
      %v2756 = vadd.f32 %v2608, %v2738
      %v2757 = vadd.f32 %v2609, %v2743
      %v2758 = vadd.f32 %v2610, %v2748
      %v2759 = vld [vmem:[%s2611 + $0x1] sm:$0xff]
      %v2760 = vld [vmem:[%s2611 + $0x11] sm:$0xff]
      %v2761 = vld [vmem:[%s2611 + $0x21] sm:$0xff]
      %v2762 = vld [vmem:[%s2611 + $0x31] sm:$0xff]
      %v2763 = vld [vmem:[%s2611 + $0x41] sm:$0xff]
      %v2764 = vld [vmem:[%s2611 + $0x51] sm:$0xff]
      %v2765 = vld [vmem:[%s2611 + $0x61] sm:$0xff]
      %v2766 = vld [vmem:[%s2611 + $0x71] sm:$0xff]
      %s2767 = scalar_lea.vmem %s3, 56
      %v2768 = vld [vmem:[%s2767] sm:$0xff]
      %v2770 = vsel %vm1692, %v2759, 0
      %v2773 = vsel %vm1692, %v2760, 0
      %v2776 = vsel %vm1692, %v2761, 0
      %v2779 = vsel %vm1692, %v2762, 0
      %v2782 = vsel %vm1692, %v2763, 0
      %v2785 = vsel %vm1692, %v2764, 0
      %v2788 = vsel %vm1692, %v2765, 0
      %v2791 = vsel %vm1692, %v2766, 0
      %2793 = vmatprep.subr.mxu0 0.0
      %2794 = vmatpush1.msra.mxu0 %v2768
      %2795 = vmatprep.subr.mxu0 0.0
      %2796 = vmatpush1.msra.mxu0 0.0
      %2797 = vmatprep.subr.mxu0 0.0
      %2798 = vmatpush1.msra.mxu0 0.0
      %2799 = vmatprep.subr.mxu0 0.0
      %2800 = vmatpush1.msra.mxu0 0.0
      %2801 = vmatprep.subr.mxu0 0.0
      %2802 = vmatpush1.msra.mxu0 0.0
      %2803 = vmatprep.subr.mxu0 0.0
      %2804 = vmatpush1.msra.mxu0 0.0
      %2805 = vmatprep.subr.mxu0 0.0
      %2806 = vmatpush1.msra.mxu0 0.0
      %2807 = vmatprep.subr.mxu0 0.0
      %2808 = vmatpush1.msra.mxu0 0.0
      %2809 = vmatprep.subr.mxu0 0.0
      %2810 = vmatpush1.msra.mxu0 0.0
      %2811 = vmatprep.subr.mxu0 0.0
      %2812 = vmatpush1.msra.mxu0 0.0
      %2813 = vmatprep.subr.mxu0 0.0
      %2814 = vmatpush1.msra.mxu0 0.0
      %2815 = vmatprep.subr.mxu0 0.0
      %2816 = vmatpush1.msra.mxu0 0.0
      %2817 = vmatprep.subr.mxu0 0.0
      %2818 = vmatpush1.msra.mxu0 0.0
      %2819 = vmatprep.subr.mxu0 0.0
      %2820 = vmatpush1.msra.mxu0 0.0
      %2821 = vmatprep.subr.mxu0 0.0
      %2822 = vmatpush1.msra.mxu0 0.0
      %2823 = vmatprep.subr.mxu0 0.0
      %2824 = vmatpush1.msra.mxu0 0.0
      %2825 = vmatprep.subr.mxu0 0.0
      %2826 = vmatpush1.msra.mxu0 0.0
      %2827 = vmatprep.subr.mxu0 0.0
      %2828 = vmatpush1.msra.mxu0 0.0
      %2829 = vmatprep.subr.mxu0 0.0
      %2830 = vmatpush1.msra.mxu0 0.0
      %2831 = vmatprep.subr.mxu0 0.0
      %2832 = vmatpush1.msra.mxu0 0.0
      %2833 = vmatprep.subr.mxu0 0.0
      %2834 = vmatpush1.msra.mxu0 0.0
      %2835 = vmatprep.subr.mxu0 0.0
      %2836 = vmatpush1.msra.mxu0 0.0
      %2837 = vmatprep.subr.mxu0 0.0
      %2838 = vmatpush1.msra.mxu0 0.0
      %2839 = vmatprep.subr.mxu0 0.0
      %2840 = vmatpush1.msra.mxu0 0.0
      %2841 = vmatprep.subr.mxu0 0.0
      %2842 = vmatpush1.msra.mxu0 0.0
      %2843 = vmatprep.subr.mxu0 0.0
      %2844 = vmatpush1.msra.mxu0 0.0
      %2845 = vmatprep.subr.mxu0 0.0
      %2846 = vmatpush1.msra.mxu0 0.0
      %2847 = vmatprep.subr.mxu0 0.0
      %2848 = vmatpush1.msra.mxu0 0.0
      %2849 = vmatprep.subr.mxu0 0.0
      %2850 = vmatpush1.msra.mxu0 0.0
      %2851 = vmatprep.subr.mxu0 0.0
      %2852 = vmatpush1.msra.mxu0 0.0
      %2853 = vmatprep.subr.mxu0 0.0
      %2854 = vmatpush1.msra.mxu0 0.0
      %2855 = vmatprep.subr.mxu0 0.0
      %2856 = vmatpush1.msra.mxu0 0.0
      %2857 = vmatprep.mubr.f32.mxu0 0.0
      %2858 = vmatmul.mubr.f32.gmra.mrb[0].mxu0 %v2770
      %v2859 = vpop.f32.mrb[0].mxu0
      %v2860 = vadd.f32 0.0, %v2859
      %v2861 = vpop.f32.mrb[0].mxu0
      %2862 = vmatprep.mubr.f32.mxu0 0.0
      %2863 = vmatmul.mubr.f32.gmra.mrb[0].mxu0 %v2773
      %v2864 = vpop.f32.mrb[0].mxu0
      %v2865 = vadd.f32 0.0, %v2864
      %v2866 = vpop.f32.mrb[0].mxu0
      %2867 = vmatprep.mubr.f32.mxu0 0.0
      %2868 = vmatmul.mubr.f32.gmra.mrb[0].mxu0 %v2776
      %v2869 = vpop.f32.mrb[0].mxu0
      %v2870 = vadd.f32 0.0, %v2869
      %v2871 = vpop.f32.mrb[0].mxu0
      %2872 = vmatprep.mubr.f32.mxu0 0.0
      %2873 = vmatmul.mubr.f32.gmra.mrb[0].mxu0 %v2779
      %v2874 = vpop.f32.mrb[0].mxu0
      %v2875 = vadd.f32 0.0, %v2874
      %v2876 = vpop.f32.mrb[0].mxu0
      %2877 = vmatprep.mubr.f32.mxu0 0.0
      %2878 = vmatmul.mubr.f32.gmra.mrb[0].mxu0 %v2782
      %v2879 = vpop.f32.mrb[0].mxu0
      %v2880 = vadd.f32 0.0, %v2879
      %v2881 = vpop.f32.mrb[0].mxu0
      %2882 = vmatprep.mubr.f32.mxu0 0.0
      %2883 = vmatmul.mubr.f32.gmra.mrb[0].mxu0 %v2785
      %v2884 = vpop.f32.mrb[0].mxu0
      %v2885 = vadd.f32 0.0, %v2884
      %v2886 = vpop.f32.mrb[0].mxu0
      %2887 = vmatprep.mubr.f32.mxu0 0.0
      %2888 = vmatmul.mubr.f32.gmra.mrb[0].mxu0 %v2788
      %v2889 = vpop.f32.mrb[0].mxu0
      %v2890 = vadd.f32 0.0, %v2889
      %v2891 = vpop.f32.mrb[0].mxu0
      %2892 = vmatprep.mubr.f32.mxu0 0.0
      %2893 = vmatmul.mubr.f32.gmra.mrb[0].mxu0 %v2791
      %v2894 = vpop.f32.mrb[0].mxu0
      %v2895 = vadd.f32 0.0, %v2894
      %v2896 = vpop.f32.mrb[0].mxu0
      %2897 = vdwg.mxu0
      %v2898 = vadd.f32 %v2751, %v2860
      %v2899 = vadd.f32 %v2752, %v2865
      %v2900 = vadd.f32 %v2753, %v2870
      %v2901 = vadd.f32 %v2754, %v2875
      %v2902 = vadd.f32 %v2755, %v2880
      %v2903 = vadd.f32 %v2756, %v2885
      %v2904 = vadd.f32 %v2757, %v2890
      %v2905 = vadd.f32 %v2758, %v2895
      %v2906 = vld [vmem:[%s2611 + $0x2] sm:$0xff]
      %v2907 = vld [vmem:[%s2611 + $0x12] sm:$0xff]
      %v2908 = vld [vmem:[%s2611 + $0x22] sm:$0xff]
      %v2909 = vld [vmem:[%s2611 + $0x32] sm:$0xff]
      %v2910 = vld [vmem:[%s2611 + $0x42] sm:$0xff]
      %v2911 = vld [vmem:[%s2611 + $0x52] sm:$0xff]
      %v2912 = vld [vmem:[%s2611 + $0x62] sm:$0xff]
      %v2913 = vld [vmem:[%s2611 + $0x72] sm:$0xff]
      %s2914 = scalar_lea.vmem %s3, 64
      %v2915 = vld [vmem:[%s2914] sm:$0xff]
      %v2917 = vsel %vm1692, %v2906, 0
      %v2920 = vsel %vm1692, %v2907, 0
      %v2923 = vsel %vm1692, %v2908, 0
      %v2926 = vsel %vm1692, %v2909, 0
      %v2929 = vsel %vm1692, %v2910, 0
      %v2932 = vsel %vm1692, %v2911, 0
      %v2935 = vsel %vm1692, %v2912, 0
      %v2938 = vsel %vm1692, %v2913, 0
      %2940 = vmatprep.subr.mxu0 0.0
      %2941 = vmatpush1.msra.mxu0 %v2915
      %2942 = vmatprep.subr.mxu0 0.0
      %2943 = vmatpush1.msra.mxu0 0.0
      %2944 = vmatprep.subr.mxu0 0.0
      %2945 = vmatpush1.msra.mxu0 0.0
      %2946 = vmatprep.subr.mxu0 0.0
      %2947 = vmatpush1.msra.mxu0 0.0
      %2948 = vmatprep.subr.mxu0 0.0
      %2949 = vmatpush1.msra.mxu0 0.0
      %2950 = vmatprep.subr.mxu0 0.0
      %2951 = vmatpush1.msra.mxu0 0.0
      %2952 = vmatprep.subr.mxu0 0.0
      %2953 = vmatpush1.msra.mxu0 0.0
      %2954 = vmatprep.subr.mxu0 0.0
      %2955 = vmatpush1.msra.mxu0 0.0
      %2956 = vmatprep.subr.mxu0 0.0
      %2957 = vmatpush1.msra.mxu0 0.0
      %2958 = vmatprep.subr.mxu0 0.0
      %2959 = vmatpush1.msra.mxu0 0.0
      %2960 = vmatprep.subr.mxu0 0.0
      %2961 = vmatpush1.msra.mxu0 0.0
      %2962 = vmatprep.subr.mxu0 0.0
      %2963 = vmatpush1.msra.mxu0 0.0
      %2964 = vmatprep.subr.mxu0 0.0
      %2965 = vmatpush1.msra.mxu0 0.0
      %2966 = vmatprep.subr.mxu0 0.0
      %2967 = vmatpush1.msra.mxu0 0.0
      %2968 = vmatprep.subr.mxu0 0.0
      %2969 = vmatpush1.msra.mxu0 0.0
      %2970 = vmatprep.subr.mxu0 0.0
      %2971 = vmatpush1.msra.mxu0 0.0
      %2972 = vmatprep.subr.mxu0 0.0
      %2973 = vmatpush1.msra.mxu0 0.0
      %2974 = vmatprep.subr.mxu0 0.0
      %2975 = vmatpush1.msra.mxu0 0.0
      %2976 = vmatprep.subr.mxu0 0.0
      %2977 = vmatpush1.msra.mxu0 0.0
      %2978 = vmatprep.subr.mxu0 0.0
      %2979 = vmatpush1.msra.mxu0 0.0
      %2980 = vmatprep.subr.mxu0 0.0
      %2981 = vmatpush1.msra.mxu0 0.0
      %2982 = vmatprep.subr.mxu0 0.0
      %2983 = vmatpush1.msra.mxu0 0.0
      %2984 = vmatprep.subr.mxu0 0.0
      %2985 = vmatpush1.msra.mxu0 0.0
      %2986 = vmatprep.subr.mxu0 0.0
      %2987 = vmatpush1.msra.mxu0 0.0
      %2988 = vmatprep.subr.mxu0 0.0
      %2989 = vmatpush1.msra.mxu0 0.0
      %2990 = vmatprep.subr.mxu0 0.0
      %2991 = vmatpush1.msra.mxu0 0.0
      %2992 = vmatprep.subr.mxu0 0.0
      %2993 = vmatpush1.msra.mxu0 0.0
      %2994 = vmatprep.subr.mxu0 0.0
      %2995 = vmatpush1.msra.mxu0 0.0
      %2996 = vmatprep.subr.mxu0 0.0
      %2997 = vmatpush1.msra.mxu0 0.0
      %2998 = vmatprep.subr.mxu0 0.0
      %2999 = vmatpush1.msra.mxu0 0.0
      %3000 = vmatprep.subr.mxu0 0.0
      %3001 = vmatpush1.msra.mxu0 0.0
      %3002 = vmatprep.subr.mxu0 0.0
      %3003 = vmatpush1.msra.mxu0 0.0
      %3004 = vmatprep.mubr.f32.mxu0 0.0
      %3005 = vmatmul.mubr.f32.gmra.mrb[0].mxu0 %v2917
      %v3006 = vpop.f32.mrb[0].mxu0
      %v3007 = vadd.f32 0.0, %v3006
      %v3008 = vpop.f32.mrb[0].mxu0
      %3009 = vmatprep.mubr.f32.mxu0 0.0
      %3010 = vmatmul.mubr.f32.gmra.mrb[0].mxu0 %v2920
      %v3011 = vpop.f32.mrb[0].mxu0
      %v3012 = vadd.f32 0.0, %v3011
      %v3013 = vpop.f32.mrb[0].mxu0
      %3014 = vmatprep.mubr.f32.mxu0 0.0
      %3015 = vmatmul.mubr.f32.gmra.mrb[0].mxu0 %v2923
      %v3016 = vpop.f32.mrb[0].mxu0
      %v3017 = vadd.f32 0.0, %v3016
      %v3018 = vpop.f32.mrb[0].mxu0
      %3019 = vmatprep.mubr.f32.mxu0 0.0
      %3020 = vmatmul.mubr.f32.gmra.mrb[0].mxu0 %v2926
      %v3021 = vpop.f32.mrb[0].mxu0
      %v3022 = vadd.f32 0.0, %v3021
      %v3023 = vpop.f32.mrb[0].mxu0
      %3024 = vmatprep.mubr.f32.mxu0 0.0
      %3025 = vmatmul.mubr.f32.gmra.mrb[0].mxu0 %v2929
      %v3026 = vpop.f32.mrb[0].mxu0
      %v3027 = vadd.f32 0.0, %v3026
      %v3028 = vpop.f32.mrb[0].mxu0
      %3029 = vmatprep.mubr.f32.mxu0 0.0
      %3030 = vmatmul.mubr.f32.gmra.mrb[0].mxu0 %v2932
      %v3031 = vpop.f32.mrb[0].mxu0
      %v3032 = vadd.f32 0.0, %v3031
      %v3033 = vpop.f32.mrb[0].mxu0
      %3034 = vmatprep.mubr.f32.mxu0 0.0
      %3035 = vmatmul.mubr.f32.gmra.mrb[0].mxu0 %v2935
      %v3036 = vpop.f32.mrb[0].mxu0
      %v3037 = vadd.f32 0.0, %v3036
      %v3038 = vpop.f32.mrb[0].mxu0
      %3039 = vmatprep.mubr.f32.mxu0 0.0
      %3040 = vmatmul.mubr.f32.gmra.mrb[0].mxu0 %v2938
      %v3041 = vpop.f32.mrb[0].mxu0
      %v3042 = vadd.f32 0.0, %v3041
      %v3043 = vpop.f32.mrb[0].mxu0
      %3044 = vdwg.mxu0
      %v3045 = vadd.f32 %v2898, %v3007
      %v3046 = vadd.f32 %v2899, %v3012
      %v3047 = vadd.f32 %v2900, %v3017
      %v3048 = vadd.f32 %v2901, %v3022
      %v3049 = vadd.f32 %v2902, %v3027
      %v3050 = vadd.f32 %v2903, %v3032
      %v3051 = vadd.f32 %v2904, %v3037
      %v3052 = vadd.f32 %v2905, %v3042
      %v3053 = vmax.f32 %v3045, 0.0
      %v3054 = vmax.f32 %v3046, 0.0
      %v3055 = vmax.f32 %v3047, 0.0
      %v3056 = vmax.f32 %v3048, 0.0
      %v3057 = vmax.f32 %v3049, 0.0
      %v3058 = vmax.f32 %v3050, 0.0
      %v3059 = vmax.f32 %v3051, 0.0
      %v3060 = vmax.f32 %v3052, 0.0
      %3061 = vst.msk [vmem:[%s229] sm:$0xff] %vm1692, %v3053
      %3062 = vst.msk [vmem:[%s229 + $0x8] sm:$0xff] %vm1692, %v3054
      %3063 = vst.msk [vmem:[%s229 + $0x10] sm:$0xff] %vm1692, %v3055
      %3064 = vst.msk [vmem:[%s229 + $0x18] sm:$0xff] %vm1692, %v3056
      %3065 = vst.msk [vmem:[%s229 + $0x20] sm:$0xff] %vm1692, %v3057
      %3066 = vst.msk [vmem:[%s229 + $0x28] sm:$0xff] %vm1692, %v3058
      %3067 = vst.msk [vmem:[%s229 + $0x30] sm:$0xff] %vm1692, %v3059
      %3068 = vst.msk [vmem:[%s229 + $0x38] sm:$0xff] %vm1692, %v3060
      %s3069 = smul.u32 8, %s16
      %p3070 = scmp.lt.s32.totalorder %s3069, 15
      %s3071 = scalar_select %p3070, %s3069, 15
      %s3072 = smul.addr %s3071, 8
      %s3073 = scalar_lea.vmem %s5, %s3072
      // Predicated region
      $region41: #{down_forward.1} parent=39 // pred_check
        %p3074 = pneg %p144
      $region42: #{down_forward.1} parent=39 // pred_check_branch
        %3076 = sbr.rel (%p3074) target = $region44
      $region43: #{down_forward.1} parent=39 // pred_region
        %s3077 = smul.u32 8, %s16
      $region44: #{down_forward.1} parent=39 // pred_fallthru
        _
    $region40: #{down_forward.1} parent=5 // pred_fallthru
      _
    %p3078 = scmp.le.s32.totalorder 2, %s11
    // Predicated region
    $region45: #{down_forward.1} parent=5 // pred_check
      %p3079 = pneg %p3078
    $region46: #{down_forward.1} parent=5 // pred_check_branch
      %3081 = sbr.rel (%p3079) target = $region48
    $region47: #{down_forward.1} parent=5 // pred_region
      %s3082 = ssub.s32 %s11, 2
      // Predicated region
      $region49: #{down_forward.1} parent=47 // pred_check
        %p3083 = pneg %p150
      $region50: #{down_forward.1} parent=47 // pred_check_branch
        %3085 = sbr.rel (%p3083) target = $region52
      $region51: #{down_forward.1} parent=47 // pred_region
        %s3086 = smul.u32 8, %s17
        %p3087 = scmp.lt.s32.totalorder %s3086, 15
        %s3088 = scalar_select %p3087, %s3086, 15
        %s3089 = smul.addr %s3088, 8
        %s3090 = scalar_lea.vmem %s5, %s3089
      $region52: #{down_forward.1} parent=47 // pred_fallthru
        _
    $region48: #{down_forward.1} parent=5 // pred_fallthru
      _
  $region6: #{down_forward.1} parent=0 // loop_footer
    %s15 = sadd.s32 1, %s11
  $region7: #{down_forward.1} parent=0 // loop_footer_branch
    %10 = sbr.rel target = $region3
  $region8: #{down_forward.1} parent=0 // loop_exit
    _

</llo_original>
